<compile_context>
chip_gen: v6e
topology: v6e:2x2x1
jax: 0.10.0
libtpu: 0.0.40
codegen_flags: <defaults>
</compile_context>

<pallas_src>
import math
import jax
import jax.numpy as jnp
from jax.experimental import pallas as pl
from jax.experimental.pallas import tpu as pltpu


# --------------------------- packed-slab layout ------------------------------

def _slab_layout(cfg):
    """8-aligned row offsets for the single packed f32 weight/bias slab."""
    NC = cfg['n_series'] * cfg['in_dim']
    K, Ch = cfg['kernel_size'], cfg['cnn_h_dim']
    Hr, Hs, ns = cfg['rnn_h_dim'], cfg['skip_h_dim'], cfg['n_skip']
    N = cfg['n_series']
    Htot = Hr + ns * Hs
    lanes = max(3 * Hr, 3 * Hs, NC, Ch, N, Htot)

    off, cur = {}, 0

    def alloc(name, rows):
        nonlocal cur
        off[name] = cur
        cur += ((rows + 7) // 8) * 8

    for k in range(K):
        alloc(f'cw{k}', NC)
    alloc('wih', Ch)
    alloc('whh', Hr)
    alloc('wihs', Ch)
    alloc('whhs', Hs)
    alloc('wl', Htot)
    alloc('bias', 8)          # 6 bias rows share one 8-row tile
    return off, cur, lanes


def pack_for_kernel(params, cfg):
    """One-time repack of all weights/biases into one VMEM slab + SMEM AR scalars."""
    Hr, Hs = cfg['rnn_h_dim'], cfg['skip_h_dim']
    off, rows, lanes = _slab_layout(cfg)
    slab = jnp.zeros((rows, lanes), jnp.float32)

    def put(s, r, a):
        a = jnp.asarray(a, jnp.float32)
        return s.at[r:r + a.shape[0], :a.shape[1]].set(a)

    for k in range(cfg['kernel_size']):
        slab = put(slab, off[f'cw{k}'], params['conv_w_k'][k])
    slab = put(slab, off['wih'], params['gru_wih_t'])
    slab = put(slab, off['whh'], params['gru_whh_t'])
    slab = put(slab, off['wihs'], params['grus_wih_t'])
    slab = put(slab, off['whhs'], params['grus_whh_t'])
    slab = put(slab, off['wl'], params['lin_w_t'])

    # Fold b_hh of the r/z gates into the hoisted gi bias; the n-gate b_hh
    # stays separate (it must remain inside r * (h @ Whh_n + b_hh_n)).
    bih, bhh = params['gru_bih'], params['gru_bhh']
    bih_fold = bih.at[:, :2 * Hr].add(bhh[:, :2 * Hr])
    bihs, bhhs = params['grus_bih'], params['grus_bhh']
    bihs_fold = bihs.at[:, :2 * Hs].add(bhhs[:, :2 * Hs])
    bl_fold = params['lin_b'] + params['ar_b'][0, 0]      # fold AR bias into linear bias

    b0 = off['bias']
    slab = put(slab, b0 + 0, params['conv_b_row'])
    slab = put(slab, b0 + 1, bih_fold)
    slab = put(slab, b0 + 2, bhh[:, 2 * Hr:])
    slab = put(slab, b0 + 3, bihs_fold)
    slab = put(slab, b0 + 4, bhhs[:, 2 * Hs:])
    slab = put(slab, b0 + 5, bl_fold)

    ar_vec = params['ar_w'][0].astype(jnp.float32)         # (AR,) SMEM scalars
    return dict(slab=slab, ar_vec=ar_vec)


# ------------------------------ fused kernel --------------------------------

def _make_fused_kernel(cfg, B):
    P, N, C = cfg['in_len'], cfg['n_series'], cfg['in_dim']
    NC = N * C
    K, T = cfg['kernel_size'], cfg['T']
    Ch, Hr, Hs = cfg['cnn_h_dim'], cfg['rnn_h_dim'], cfg['skip_h_dim']
    ns, pt, AR = cfg['n_skip'], cfg['pt'], cfg['ar_window']
    Htot = Hr + ns * Hs
    off_t = T - pt * ns
    so, _, _ = _slab_layout(cfg)

    def kernel(x_ref, w_ref, ar_ref, o_ref):
        f32 = jnp.float32

        # ---- carve the packed slab (static, 8-aligned row blocks) ----------
        cw = [w_ref[so[f'cw{k}']:so[f'cw{k}'] + NC, :Ch] for k in range(K)]
        wih = w_ref[so['wih']:so['wih'] + Ch, :3 * Hr]
        whh = w_ref[so['whh']:so['whh'] + Hr, :3 * Hr]
        wihs = w_ref[so['wihs']:so['wihs'] + Ch, :3 * Hs]
        whhs = w_ref[so['whhs']:so['whhs'] + Hs, :3 * Hs]
        wl = w_ref[so['wl']:so['wl'] + Htot, :N]
        b0 = so['bias']
        cb = w_ref[b0 + 0:b0 + 1, :Ch]
        bih = w_ref[b0 + 1:b0 + 2, :3 * Hr]     # b_ih with r/z b_hh folded in
        bhh_n = w_ref[b0 + 2:b0 + 3, :Hr]
        bihs = w_ref[b0 + 3:b0 + 4, :3 * Hs]
        bhhs_n = w_ref[b0 + 4:b0 + 5, :Hs]
        bl = w_ref[b0 + 5:b0 + 6, :N]           # linear bias + AR bias folded

        x = x_ref[...]                           # (P*B, NC), row = p*B + b

        # ---- Conv2d(kernel (K, N)) + bias + ReLU: K batched matmuls --------
        acc = jnp.zeros((T * B, Ch), f32)
        for k in range(K):
            acc = acc + jnp.dot(x[k * B:k * B + T * B, :], cw[k],
                                preferred_element_type=f32)
        hc = jnp.maximum(acc + cb, 0.0)          # (T*B, Ch), row = t*B + b

        # ---- hoisted input-to-hidden projections (off the critical path) ---
        gi_r = jnp.dot(hc, wih, preferred_element_type=f32) + bih        # (T*B, 3Hr)
        gi_s = jnp.dot(hc[off_t * B:, :], wihs,
                       preferred_element_type=f32) + bihs                # (pt*ns*B, 3Hs)

        def gru_step(h, gi, whh_m, bhh_n_v, H):
            # Batched GRU step, PyTorch gate order [r, z, n]; only h @ Whh is
            # on the serial critical path, r/z sigmoids fused into one call.
            gh = jnp.dot(h, whh_m, preferred_element_type=f32)
            rz = jax.nn.sigmoid(gi[:, :2 * H] + gh[:, :2 * H])
            r, z = rz[:, :H], rz[:, H:]
            n = jnp.tanh(gi[:, 2 * H:] + r * (gh[:, 2 * H:] + bhh_n_v))
            return (1.0 - z) * n + z * h

        # ---- main GRU: ONE batched (B, Hr) chain, T fully-unrolled steps ---
        h_r = jnp.zeros((B, Hr), f32)
        for t in range(T):
            h_r = gru_step(h_r, gi_r[t * B:(t + 1) * B, :], whh, bhh_n, Hr)

        # ---- skip GRU: ONE batched (ns*B, Hs) chain (row = s*B + b) --------
        h_s = jnp.zeros((ns * B, Hs), f32)
        for p in range(pt):
            h_s = gru_step(h_s, gi_s[p * ns * B:(p + 1) * ns * B, :],
                           whhs, bhhs_n, Hs)

        # ---- head: linear split across [h_r | h_s chains] (no concat) ------
        out = jnp.dot(h_r, wl[:Hr, :], preferred_element_type=f32) + bl
        for s in range(ns):
            lo = Hr + s * Hs
            out = out + jnp.dot(h_s[s * B:(s + 1) * B, :], wl[lo:lo + Hs, :],
                                preferred_element_type=f32)

        # ---- autoregressive term: AR scalar (SMEM) multiply-adds -----------
        for w in range(AR):
            rw = P - AR + w
            out = out + x[rw * B:(rw + 1) * B, :] * ar_ref[w]

        o_ref[...] = out                          # (B, N)

    return kernel


# ------------------------------ LST_Skip model ------------------------------

def make_config():
    cfg = dict(
        in_dim=1, in_len=16, out_len=1, n_series=8,
        rnn_h_dim=16, cnn_h_dim=8, skip_h_dim=4,
        kernel_size=3, n_skip=2, ar_window=4,
        dropout=0.1, act=None,
    )
    cfg['pt'] = math.floor((cfg['in_len'] - cfg['kernel_size']) / cfg['n_skip'])
    cfg['T'] = cfg['in_len'] - cfg['kernel_size'] + 1
    return cfg


def init_params(key, cfg):
    C, K, N = cfg['in_dim'], cfg['kernel_size'], cfg['n_series']
    O = cfg['cnn_h_dim']
    Hr, Hs = cfg['rnn_h_dim'], cfg['skip_h_dim']
    AR = cfg['ar_window']
    Htot = Hr + cfg['n_skip'] * Hs

    ks = jax.random.split(key, 14)
    rnd = lambda k, s: 0.1 * jax.random.normal(k, s, jnp.float32)

    # Conv2d(in_dim -> cnn_h_dim, kernel (K, N)); PyTorch weight (O, C, K, N)
    conv_w = rnd(ks[0], (O, C, K, N))
    conv_b = rnd(ks[1], (O,))
    # per-k flattened weight: (K, N*C, O) with (n, c) flat order to match
    # x reshaped as (..., N*C)
    conv_w_k = jnp.transpose(conv_w, (2, 3, 1, 0)).reshape(K, N * C, O)

    # GRU(cnn_h_dim -> rnn_h_dim); PyTorch weight_ih (3H, Cin), weight_hh (3H, H)
    gru_wih = rnd(ks[2], (3 * Hr, O))
    gru_whh = rnd(ks[3], (3 * Hr, Hr))
    gru_bih = rnd(ks[4], (3 * Hr,))
    gru_bhh = rnd(ks[5], (3 * Hr,))

    # GRUskip(cnn_h_dim -> skip_h_dim)
    grus_wih = rnd(ks[6], (3 * Hs, O))
    grus_whh = rnd(ks[7], (3 * Hs, Hs))
    grus_bih = rnd(ks[8], (3 * Hs,))
    grus_bhh = rnd(ks[9], (3 * Hs,))

    # Linear(Htot -> n_series); PyTorch weight (N, Htot)
    lin_w = rnd(ks[10], (N, Htot))
    lin_b = rnd(ks[11], (N,))

    # ar_linear(ar_window -> out_len=1); PyTorch weight (1, AR)
    ar_w = rnd(ks[12], (1, AR))
    ar_b = rnd(ks[13], (1,))

    return dict(
        conv_w=conv_w, conv_b=conv_b, conv_w_k=conv_w_k,
        conv_b_row=conv_b.reshape(1, O),
        gru_wih_t=gru_wih.T, gru_whh_t=gru_whh.T,
        gru_bih=gru_bih.reshape(1, -1), gru_bhh=gru_bhh.reshape(1, -1),
        grus_wih_t=grus_wih.T, grus_whh_t=grus_whh.T,
        grus_bih=grus_bih.reshape(1, -1), grus_bhh=grus_bhh.reshape(1, -1),
        lin_w_t=lin_w.T, lin_b=lin_b.reshape(1, N),
        ar_w=ar_w, ar_b=ar_b.reshape(1, 1),
    )


def lst_skip_forward(packed, x, cfg):
    """Fused Pallas forward.  x: (B, P, N, C) -> output (B, n_series)."""
    B, P, N, C = x.shape
    # TODO(synk): in_dim must be 1 (original AR branch does x.squeeze(-1));
    # dropout is identity (inference mode) and act=None.
    assert C == 1, "in_dim must be 1"
    # Time-major, batch-minor flat layout (row = p*B + b) so every per-step
    # GRU input is a contiguous static sublane slice inside the kernel.
    x_flat = jnp.transpose(x.astype(jnp.float32).reshape(B, P, N * C),
                           (1, 0, 2)).reshape(P * B, N * C)
    kernel = _make_fused_kernel(cfg, B)
    return pl.pallas_call(
        kernel,
        out_shape=jax.ShapeDtypeStruct((B, cfg['n_series']), jnp.float32),
        in_specs=[pl.BlockSpec(memory_space=pltpu.MemorySpace.VMEM),
                  pl.BlockSpec(memory_space=pltpu.MemorySpace.VMEM),
                  pl.BlockSpec(memory_space=pltpu.MemorySpace.SMEM)],
        out_specs=pl.BlockSpec(memory_space=pltpu.MemorySpace.VMEM),
    )(x_flat, packed['slab'], packed['ar_vec'])


# --------------------------- pure-JAX reference -----------------------------

def _gru_ref(seq, wih_t, whh_t, bih, bhh):
    Bp = seq.shape[1]
    H = whh_t.shape[0]

    def step(h, x_t):
        gi = x_t @ wih_t + bih
        gh = h @ whh_t + bhh
        r = jax.nn.sigmoid(gi[:, :H] + gh[:, :H])
        z = jax.nn.sigmoid(gi[:, H:2 * H] + gh[:, H:2 * H])
        n = jnp.tanh(gi[:, 2 * H:] + r * gh[:, 2 * H:])
        return (1.0 - z) * n + z * h, None

    h0 = jnp.zeros((Bp, H), jnp.float32)
    h, _ = jax.lax.scan(step, h0, seq)
    return h


def lst_skip_reference(params, x, cfg):
    B, P, N, C = x.shape
    K, T = cfg['kernel_size'], cfg['T']
    Ch, Hs = cfg['cnn_h_dim'], cfg['skip_h_dim']
    n_skip, pt, AR = cfg['n_skip'], cfg['pt'], cfg['ar_window']

    patches5 = jnp.stack([x[:, k:k + T] for k in range(K)], axis=2)   # (B,T,K,N,C)
    hc = jax.nn.relu(jnp.einsum('btknc,ockn->bto', patches5,
                                params['conv_w']) + params['conv_b'])
    seq = jnp.transpose(hc, (1, 0, 2))
    h_r = _gru_ref(seq, params['gru_wih_t'], params['gru_whh_t'],
                   params['gru_bih'], params['gru_bhh'])
    tail = hc[:, T - pt * n_skip:, :].reshape(B, pt, n_skip, Ch)
    seq_s = jnp.transpose(tail, (1, 0, 2, 3)).reshape(pt, B * n_skip, Ch)
    h_s = _gru_ref(seq_s, params['grus_wih_t'], params['grus_whh_t'],
                   params['grus_bih'], params['grus_bhh']).reshape(B, n_skip * Hs)
    h = jnp.concatenate([h_r, h_s], axis=1)
    out = h @ params['lin_w_t'] + params['lin_b']
    x_ar = x[:, P - AR:, :, 0]
    out = out + jnp.einsum('bwn,w->bn', x_ar, params['ar_w'][0]) + params['ar_b'][0, 0]
    return out


# ----------------------------------- main -----------------------------------

if __name__ == "__main__":
    cfg = make_config()
    key = jax.random.PRNGKey(0)
    k_param, k_x = jax.random.split(key)
    params = init_params(k_param, cfg)
    packed = pack_for_kernel(params, cfg)      # one-time weight repack (2 VMEM + 1 SMEM input)

    B = 2
    x = jax.random.normal(
        k_x, (B, cfg['in_len'], cfg['n_series'], cfg['in_dim']), jnp.float32)

    fwd = jax.jit(lambda pk, xx: lst_skip_forward(pk, xx, cfg))
    out = jax.block_until_ready(fwd(packed, x))
    ref = jax.block_until_ready(lst_skip_reference(params, x, cfg))

    assert out.shape == (B, cfg['n_series']), out.shape
    assert jnp.allclose(out, ref, atol=1e-4, rtol=1e-4), \
        f"max abs err {jnp.max(jnp.abs(out - ref))}"
    print("KERNEL_OK")
</pallas_src>

<mosaic_0001>
module attributes {stable_mosaic.version = 11 : i64} {
  func.func @kernel(%arg0: memref<32x8xf32, #tpu.memory_space<vmem>>, %arg1: memref<96x48xf32, #tpu.memory_space<vmem>>, %arg2: memref<4xf32, #tpu.memory_space<smem>>, %arg3: memref<2x8xf32, #tpu.memory_space<vmem>>) attributes {dimension_semantics = [], scalar_prefetch = 0 : i64, scratch_operands = 0 : i64, tpu.core_type = #tpu.core_type<tc>} {
    %c0 = arith.constant 0 : index
    %c0_0 = arith.constant 0 : index
    %0 = vector.load %arg1[%c0, %c0_0] : memref<96x48xf32, #tpu.memory_space<vmem>>, vector<8x8xf32>
    %c8 = arith.constant 8 : index
    %c0_1 = arith.constant 0 : index
    %1 = vector.load %arg1[%c8, %c0_1] : memref<96x48xf32, #tpu.memory_space<vmem>>, vector<8x8xf32>
    %c16 = arith.constant 16 : index
    %c0_2 = arith.constant 0 : index
    %2 = vector.load %arg1[%c16, %c0_2] : memref<96x48xf32, #tpu.memory_space<vmem>>, vector<8x8xf32>
    %c24 = arith.constant 24 : index
    %c0_3 = arith.constant 0 : index
    %3 = vector.load %arg1[%c24, %c0_3] : memref<96x48xf32, #tpu.memory_space<vmem>>, vector<8x48xf32>
    %c32 = arith.constant 32 : index
    %c0_4 = arith.constant 0 : index
    %4 = vector.load %arg1[%c32, %c0_4] : memref<96x48xf32, #tpu.memory_space<vmem>>, vector<16x48xf32>
    %c48 = arith.constant 48 : index
    %c0_5 = arith.constant 0 : index
    %5 = vector.load %arg1[%c48, %c0_5] : memref<96x48xf32, #tpu.memory_space<vmem>>, vector<8x12xf32>
    %c56 = arith.constant 56 : index
    %c0_6 = arith.constant 0 : index
    %6 = vector.load %arg1[%c56, %c0_6] : memref<96x48xf32, #tpu.memory_space<vmem>>, vector<4x12xf32>
    %c64 = arith.constant 64 : index
    %c0_7 = arith.constant 0 : index
    %7 = vector.load %arg1[%c64, %c0_7] : memref<96x48xf32, #tpu.memory_space<vmem>>, vector<24x8xf32>
    %c88 = arith.constant 88 : index
    %c0_8 = arith.constant 0 : index
    %8 = vector.load %arg1[%c88, %c0_8] : memref<96x48xf32, #tpu.memory_space<vmem>>, vector<1x8xf32>
    %c89 = arith.constant 89 : index
    %c0_9 = arith.constant 0 : index
    %9 = vector.load %arg1[%c89, %c0_9] : memref<96x48xf32, #tpu.memory_space<vmem>>, vector<1x48xf32>
    %c90 = arith.constant 90 : index
    %c0_10 = arith.constant 0 : index
    %10 = vector.load %arg1[%c90, %c0_10] : memref<96x48xf32, #tpu.memory_space<vmem>>, vector<1x16xf32>
    %c91 = arith.constant 91 : index
    %c0_11 = arith.constant 0 : index
    %11 = vector.load %arg1[%c91, %c0_11] : memref<96x48xf32, #tpu.memory_space<vmem>>, vector<1x12xf32>
    %c92 = arith.constant 92 : index
    %c0_12 = arith.constant 0 : index
    %12 = vector.load %arg1[%c92, %c0_12] : memref<96x48xf32, #tpu.memory_space<vmem>>, vector<1x4xf32>
    %c93 = arith.constant 93 : index
    %c0_13 = arith.constant 0 : index
    %13 = vector.load %arg1[%c93, %c0_13] : memref<96x48xf32, #tpu.memory_space<vmem>>, vector<1x8xf32>
    %c0_14 = arith.constant 0 : index
    %c0_15 = arith.constant 0 : index
    %14 = vector.load %arg0[%c0_14, %c0_15] : memref<32x8xf32, #tpu.memory_space<vmem>>, vector<32x8xf32>
    %cst = arith.constant 0.000000e+00 : f32
    %15 = vector.broadcast %cst : f32 to vector<28x8xf32>
    %16 = vector.extract_strided_slice %14 {offsets = [0, 0], sizes = [28, 8], strides = [1, 1]} : vector<32x8xf32> to vector<28x8xf32>
    %cst_16 = arith.constant dense<0.000000e+00> : vector<28x8xf32>
    %17 = tpu.matmul %16, %0, %cst_16 {dimension_numbers = #tpu.dot_dimension_numbers<[1], [0], [0], [1], [0, 0, 1, 1], [], []>} : vector<28x8xf32>, vector<8x8xf32>, vector<28x8xf32> -> vector<28x8xf32>
    %18 = arith.addf %15, %17 : vector<28x8xf32>
    %19 = vector.extract_strided_slice %14 {offsets = [2, 0], sizes = [28, 8], strides = [1, 1]} : vector<32x8xf32> to vector<28x8xf32>
    %cst_17 = arith.constant dense<0.000000e+00> : vector<28x8xf32>
    %20 = tpu.matmul %19, %1, %cst_17 {dimension_numbers = #tpu.dot_dimension_numbers<[1], [0], [0], [1], [0, 0, 1, 1], [], []>} : vector<28x8xf32>, vector<8x8xf32>, vector<28x8xf32> -> vector<28x8xf32>
    %21 = arith.addf %18, %20 : vector<28x8xf32>
    %22 = vector.extract_strided_slice %14 {offsets = [4, 0], sizes = [28, 8], strides = [1, 1]} : vector<32x8xf32> to vector<28x8xf32>
    %cst_18 = arith.constant dense<0.000000e+00> : vector<28x8xf32>
    %23 = tpu.matmul %22, %2, %cst_18 {dimension_numbers = #tpu.dot_dimension_numbers<[1], [0], [0], [1], [0, 0, 1, 1], [], []>} : vector<28x8xf32>, vector<8x8xf32>, vector<28x8xf32> -> vector<28x8xf32>
    %24 = arith.addf %21, %23 : vector<28x8xf32>
    %25 = vector.broadcast %8 : vector<1x8xf32> to vector<28x8xf32>
    %26 = arith.addf %24, %25 : vector<28x8xf32>
    %cst_19 = arith.constant 0.000000e+00 : f32
    %27 = vector.broadcast %cst_19 : f32 to vector<28x8xf32>
    %28 = arith.maximumf %26, %27 : vector<28x8xf32>
    %cst_20 = arith.constant dense<0.000000e+00> : vector<28x48xf32>
    %29 = tpu.matmul %28, %3, %cst_20 {dimension_numbers = #tpu.dot_dimension_numbers<[1], [0], [0], [1], [0, 0, 1, 1], [], []>} : vector<28x8xf32>, vector<8x48xf32>, vector<28x48xf32> -> vector<28x48xf32>
    %30 = vector.broadcast %9 : vector<1x48xf32> to vector<28x48xf32>
    %31 = arith.addf %29, %30 : vector<28x48xf32>
    %32 = vector.extract_strided_slice %28 {offsets = [4, 0], sizes = [24, 8], strides = [1, 1]} : vector<28x8xf32> to vector<24x8xf32>
    %cst_21 = arith.constant dense<0.000000e+00> : vector<24x12xf32>
    %33 = tpu.matmul %32, %5, %cst_21 {dimension_numbers = #tpu.dot_dimension_numbers<[1], [0], [0], [1], [0, 0, 1, 1], [], []>} : vector<24x8xf32>, vector<8x12xf32>, vector<24x12xf32> -> vector<24x12xf32>
    %34 = vector.broadcast %11 : vector<1x12xf32> to vector<24x12xf32>
    %35 = arith.addf %33, %34 : vector<24x12xf32>
    %cst_22 = arith.constant 0.000000e+00 : f32
    %36 = vector.broadcast %cst_22 : f32 to vector<2x16xf32>
    %37 = vector.extract_strided_slice %31 {offsets = [0, 0], sizes = [2, 48], strides = [1, 1]} : vector<28x48xf32> to vector<2x48xf32>
    %cst_23 = arith.constant dense<0.000000e+00> : vector<2x48xf32>
    %38 = tpu.matmul %36, %4, %cst_23 {dimension_numbers = #tpu.dot_dimension_numbers<[1], [0], [0], [1], [0, 0, 1, 1], [], []>} : vector<2x16xf32>, vector<16x48xf32>, vector<2x48xf32> -> vector<2x48xf32>
    %39 = vector.extract_strided_slice %37 {offsets = [0, 0], sizes = [2, 32], strides = [1, 1]} : vector<2x48xf32> to vector<2x32xf32>
    %40 = vector.extract_strided_slice %38 {offsets = [0, 0], sizes = [2, 32], strides = [1, 1]} : vector<2x48xf32> to vector<2x32xf32>
    %41 = arith.addf %39, %40 : vector<2x32xf32>
    %42 = arith.negf %41 : vector<2x32xf32>
    %43 = math.exp %42 : vector<2x32xf32>
    %cst_24 = arith.constant 1.000000e+00 : f32
    %44 = vector.broadcast %cst_24 : f32 to vector<2x32xf32>
    %45 = arith.addf %44, %43 : vector<2x32xf32>
    %46 = arith.divf %44, %45 : vector<2x32xf32>
    %47 = vector.extract_strided_slice %46 {offsets = [0, 0], sizes = [2, 16], strides = [1, 1]} : vector<2x32xf32> to vector<2x16xf32>
    %48 = vector.extract_strided_slice %46 {offsets = [0, 16], sizes = [2, 16], strides = [1, 1]} : vector<2x32xf32> to vector<2x16xf32>
    %49 = vector.extract_strided_slice %37 {offsets = [0, 32], sizes = [2, 16], strides = [1, 1]} : vector<2x48xf32> to vector<2x16xf32>
    %50 = vector.extract_strided_slice %38 {offsets = [0, 32], sizes = [2, 16], strides = [1, 1]} : vector<2x48xf32> to vector<2x16xf32>
    %51 = vector.broadcast %10 : vector<1x16xf32> to vector<2x16xf32>
    %52 = arith.addf %50, %51 : vector<2x16xf32>
    %53 = arith.mulf %47, %52 : vector<2x16xf32>
    %54 = arith.addf %49, %53 : vector<2x16xf32>
    %55 = math.tanh %54 : vector<2x16xf32>
    %cst_25 = arith.constant 1.000000e+00 : f32
    %56 = vector.broadcast %cst_25 : f32 to vector<2x16xf32>
    %57 = arith.subf %56, %48 : vector<2x16xf32>
    %58 = arith.mulf %57, %55 : vector<2x16xf32>
    %59 = arith.mulf %48, %36 : vector<2x16xf32>
    %60 = arith.addf %58, %59 : vector<2x16xf32>
    %61 = vector.extract_strided_slice %31 {offsets = [2, 0], sizes = [2, 48], strides = [1, 1]} : vector<28x48xf32> to vector<2x48xf32>
    %cst_26 = arith.constant dense<0.000000e+00> : vector<2x48xf32>
    %62 = tpu.matmul %60, %4, %cst_26 {dimension_numbers = #tpu.dot_dimension_numbers<[1], [0], [0], [1], [0, 0, 1, 1], [], []>} : vector<2x16xf32>, vector<16x48xf32>, vector<2x48xf32> -> vector<2x48xf32>
    %63 = vector.extract_strided_slice %61 {offsets = [0, 0], sizes = [2, 32], strides = [1, 1]} : vector<2x48xf32> to vector<2x32xf32>
    %64 = vector.extract_strided_slice %62 {offsets = [0, 0], sizes = [2, 32], strides = [1, 1]} : vector<2x48xf32> to vector<2x32xf32>
    %65 = arith.addf %63, %64 : vector<2x32xf32>
    %66 = arith.negf %65 : vector<2x32xf32>
    %67 = math.exp %66 : vector<2x32xf32>
    %cst_27 = arith.constant 1.000000e+00 : f32
    %68 = vector.broadcast %cst_27 : f32 to vector<2x32xf32>
    %69 = arith.addf %68, %67 : vector<2x32xf32>
    %70 = arith.divf %68, %69 : vector<2x32xf32>
    %71 = vector.extract_strided_slice %70 {offsets = [0, 0], sizes = [2, 16], strides = [1, 1]} : vector<2x32xf32> to vector<2x16xf32>
    %72 = vector.extract_strided_slice %70 {offsets = [0, 16], sizes = [2, 16], strides = [1, 1]} : vector<2x32xf32> to vector<2x16xf32>
    %73 = vector.extract_strided_slice %61 {offsets = [0, 32], sizes = [2, 16], strides = [1, 1]} : vector<2x48xf32> to vector<2x16xf32>
    %74 = vector.extract_strided_slice %62 {offsets = [0, 32], sizes = [2, 16], strides = [1, 1]} : vector<2x48xf32> to vector<2x16xf32>
    %75 = vector.broadcast %10 : vector<1x16xf32> to vector<2x16xf32>
    %76 = arith.addf %74, %75 : vector<2x16xf32>
    %77 = arith.mulf %71, %76 : vector<2x16xf32>
    %78 = arith.addf %73, %77 : vector<2x16xf32>
    %79 = math.tanh %78 : vector<2x16xf32>
    %cst_28 = arith.constant 1.000000e+00 : f32
    %80 = vector.broadcast %cst_28 : f32 to vector<2x16xf32>
    %81 = arith.subf %80, %72 : vector<2x16xf32>
    %82 = arith.mulf %81, %79 : vector<2x16xf32>
    %83 = arith.mulf %72, %60 : vector<2x16xf32>
    %84 = arith.addf %82, %83 : vector<2x16xf32>
    %85 = vector.extract_strided_slice %31 {offsets = [4, 0], sizes = [2, 48], strides = [1, 1]} : vector<28x48xf32> to vector<2x48xf32>
    %cst_29 = arith.constant dense<0.000000e+00> : vector<2x48xf32>
    %86 = tpu.matmul %84, %4, %cst_29 {dimension_numbers = #tpu.dot_dimension_numbers<[1], [0], [0], [1], [0, 0, 1, 1], [], []>} : vector<2x16xf32>, vector<16x48xf32>, vector<2x48xf32> -> vector<2x48xf32>
    %87 = vector.extract_strided_slice %85 {offsets = [0, 0], sizes = [2, 32], strides = [1, 1]} : vector<2x48xf32> to vector<2x32xf32>
    %88 = vector.extract_strided_slice %86 {offsets = [0, 0], sizes = [2, 32], strides = [1, 1]} : vector<2x48xf32> to vector<2x32xf32>
    %89 = arith.addf %87, %88 : vector<2x32xf32>
    %90 = arith.negf %89 : vector<2x32xf32>
    %91 = math.exp %90 : vector<2x32xf32>
    %cst_30 = arith.constant 1.000000e+00 : f32
    %92 = vector.broadcast %cst_30 : f32 to vector<2x32xf32>
    %93 = arith.addf %92, %91 : vector<2x32xf32>
    %94 = arith.divf %92, %93 : vector<2x32xf32>
    %95 = vector.extract_strided_slice %94 {offsets = [0, 0], sizes = [2, 16], strides = [1, 1]} : vector<2x32xf32> to vector<2x16xf32>
    %96 = vector.extract_strided_slice %94 {offsets = [0, 16], sizes = [2, 16], strides = [1, 1]} : vector<2x32xf32> to vector<2x16xf32>
    %97 = vector.extract_strided_slice %85 {offsets = [0, 32], sizes = [2, 16], strides = [1, 1]} : vector<2x48xf32> to vector<2x16xf32>
    %98 = vector.extract_strided_slice %86 {offsets = [0, 32], sizes = [2, 16], strides = [1, 1]} : vector<2x48xf32> to vector<2x16xf32>
    %99 = vector.broadcast %10 : vector<1x16xf32> to vector<2x16xf32>
    %100 = arith.addf %98, %99 : vector<2x16xf32>
    %101 = arith.mulf %95, %100 : vector<2x16xf32>
    %102 = arith.addf %97, %101 : vector<2x16xf32>
    %103 = math.tanh %102 : vector<2x16xf32>
    %cst_31 = arith.constant 1.000000e+00 : f32
    %104 = vector.broadcast %cst_31 : f32 to vector<2x16xf32>
    %105 = arith.subf %104, %96 : vector<2x16xf32>
    %106 = arith.mulf %105, %103 : vector<2x16xf32>
    %107 = arith.mulf %96, %84 : vector<2x16xf32>
    %108 = arith.addf %106, %107 : vector<2x16xf32>
    %109 = vector.extract_strided_slice %31 {offsets = [6, 0], sizes = [2, 48], strides = [1, 1]} : vector<28x48xf32> to vector<2x48xf32>
    %cst_32 = arith.constant dense<0.000000e+00> : vector<2x48xf32>
    %110 = tpu.matmul %108, %4, %cst_32 {dimension_numbers = #tpu.dot_dimension_numbers<[1], [0], [0], [1], [0, 0, 1, 1], [], []>} : vector<2x16xf32>, vector<16x48xf32>, vector<2x48xf32> -> vector<2x48xf32>
    %111 = vector.extract_strided_slice %109 {offsets = [0, 0], sizes = [2, 32], strides = [1, 1]} : vector<2x48xf32> to vector<2x32xf32>
    %112 = vector.extract_strided_slice %110 {offsets = [0, 0], sizes = [2, 32], strides = [1, 1]} : vector<2x48xf32> to vector<2x32xf32>
    %113 = arith.addf %111, %112 : vector<2x32xf32>
    %114 = arith.negf %113 : vector<2x32xf32>
    %115 = math.exp %114 : vector<2x32xf32>
    %cst_33 = arith.constant 1.000000e+00 : f32
    %116 = vector.broadcast %cst_33 : f32 to vector<2x32xf32>
    %117 = arith.addf %116, %115 : vector<2x32xf32>
    %118 = arith.divf %116, %117 : vector<2x32xf32>
    %119 = vector.extract_strided_slice %118 {offsets = [0, 0], sizes = [2, 16], strides = [1, 1]} : vector<2x32xf32> to vector<2x16xf32>
    %120 = vector.extract_strided_slice %118 {offsets = [0, 16], sizes = [2, 16], strides = [1, 1]} : vector<2x32xf32> to vector<2x16xf32>
    %121 = vector.extract_strided_slice %109 {offsets = [0, 32], sizes = [2, 16], strides = [1, 1]} : vector<2x48xf32> to vector<2x16xf32>
    %122 = vector.extract_strided_slice %110 {offsets = [0, 32], sizes = [2, 16], strides = [1, 1]} : vector<2x48xf32> to vector<2x16xf32>
    %123 = vector.broadcast %10 : vector<1x16xf32> to vector<2x16xf32>
    %124 = arith.addf %122, %123 : vector<2x16xf32>
    %125 = arith.mulf %119, %124 : vector<2x16xf32>
    %126 = arith.addf %121, %125 : vector<2x16xf32>
    %127 = math.tanh %126 : vector<2x16xf32>
    %cst_34 = arith.constant 1.000000e+00 : f32
    %128 = vector.broadcast %cst_34 : f32 to vector<2x16xf32>
    %129 = arith.subf %128, %120 : vector<2x16xf32>
    %130 = arith.mulf %129, %127 : vector<2x16xf32>
    %131 = arith.mulf %120, %108 : vector<2x16xf32>
    %132 = arith.addf %130, %131 : vector<2x16xf32>
    %133 = vector.extract_strided_slice %31 {offsets = [8, 0], sizes = [2, 48], strides = [1, 1]} : vector<28x48xf32> to vector<2x48xf32>
    %cst_35 = arith.constant dense<0.000000e+00> : vector<2x48xf32>
    %134 = tpu.matmul %132, %4, %cst_35 {dimension_numbers = #tpu.dot_dimension_numbers<[1], [0], [0], [1], [0, 0, 1, 1], [], []>} : vector<2x16xf32>, vector<16x48xf32>, vector<2x48xf32> -> vector<2x48xf32>
    %135 = vector.extract_strided_slice %133 {offsets = [0, 0], sizes = [2, 32], strides = [1, 1]} : vector<2x48xf32> to vector<2x32xf32>
    %136 = vector.extract_strided_slice %134 {offsets = [0, 0], sizes = [2, 32], strides = [1, 1]} : vector<2x48xf32> to vector<2x32xf32>
    %137 = arith.addf %135, %136 : vector<2x32xf32>
    %138 = arith.negf %137 : vector<2x32xf32>
    %139 = math.exp %138 : vector<2x32xf32>
    %cst_36 = arith.constant 1.000000e+00 : f32
    %140 = vector.broadcast %cst_36 : f32 to vector<2x32xf32>
    %141 = arith.addf %140, %139 : vector<2x32xf32>
    %142 = arith.divf %140, %141 : vector<2x32xf32>
    %143 = vector.extract_strided_slice %142 {offsets = [0, 0], sizes = [2, 16], strides = [1, 1]} : vector<2x32xf32> to vector<2x16xf32>
    %144 = vector.extract_strided_slice %142 {offsets = [0, 16], sizes = [2, 16], strides = [1, 1]} : vector<2x32xf32> to vector<2x16xf32>
    %145 = vector.extract_strided_slice %133 {offsets = [0, 32], sizes = [2, 16], strides = [1, 1]} : vector<2x48xf32> to vector<2x16xf32>
    %146 = vector.extract_strided_slice %134 {offsets = [0, 32], sizes = [2, 16], strides = [1, 1]} : vector<2x48xf32> to vector<2x16xf32>
    %147 = vector.broadcast %10 : vector<1x16xf32> to vector<2x16xf32>
    %148 = arith.addf %146, %147 : vector<2x16xf32>
    %149 = arith.mulf %143, %148 : vector<2x16xf32>
    %150 = arith.addf %145, %149 : vector<2x16xf32>
    %151 = math.tanh %150 : vector<2x16xf32>
    %cst_37 = arith.constant 1.000000e+00 : f32
    %152 = vector.broadcast %cst_37 : f32 to vector<2x16xf32>
    %153 = arith.subf %152, %144 : vector<2x16xf32>
    %154 = arith.mulf %153, %151 : vector<2x16xf32>
    %155 = arith.mulf %144, %132 : vector<2x16xf32>
    %156 = arith.addf %154, %155 : vector<2x16xf32>
    %157 = vector.extract_strided_slice %31 {offsets = [10, 0], sizes = [2, 48], strides = [1, 1]} : vector<28x48xf32> to vector<2x48xf32>
    %cst_38 = arith.constant dense<0.000000e+00> : vector<2x48xf32>
    %158 = tpu.matmul %156, %4, %cst_38 {dimension_numbers = #tpu.dot_dimension_numbers<[1], [0], [0], [1], [0, 0, 1, 1], [], []>} : vector<2x16xf32>, vector<16x48xf32>, vector<2x48xf32> -> vector<2x48xf32>
    %159 = vector.extract_strided_slice %157 {offsets = [0, 0], sizes = [2, 32], strides = [1, 1]} : vector<2x48xf32> to vector<2x32xf32>
    %160 = vector.extract_strided_slice %158 {offsets = [0, 0], sizes = [2, 32], strides = [1, 1]} : vector<2x48xf32> to vector<2x32xf32>
    %161 = arith.addf %159, %160 : vector<2x32xf32>
    %162 = arith.negf %161 : vector<2x32xf32>
    %163 = math.exp %162 : vector<2x32xf32>
    %cst_39 = arith.constant 1.000000e+00 : f32
    %164 = vector.broadcast %cst_39 : f32 to vector<2x32xf32>
    %165 = arith.addf %164, %163 : vector<2x32xf32>
    %166 = arith.divf %164, %165 : vector<2x32xf32>
    %167 = vector.extract_strided_slice %166 {offsets = [0, 0], sizes = [2, 16], strides = [1, 1]} : vector<2x32xf32> to vector<2x16xf32>
    %168 = vector.extract_strided_slice %166 {offsets = [0, 16], sizes = [2, 16], strides = [1, 1]} : vector<2x32xf32> to vector<2x16xf32>
    %169 = vector.extract_strided_slice %157 {offsets = [0, 32], sizes = [2, 16], strides = [1, 1]} : vector<2x48xf32> to vector<2x16xf32>
    %170 = vector.extract_strided_slice %158 {offsets = [0, 32], sizes = [2, 16], strides = [1, 1]} : vector<2x48xf32> to vector<2x16xf32>
    %171 = vector.broadcast %10 : vector<1x16xf32> to vector<2x16xf32>
    %172 = arith.addf %170, %171 : vector<2x16xf32>
    %173 = arith.mulf %167, %172 : vector<2x16xf32>
    %174 = arith.addf %169, %173 : vector<2x16xf32>
    %175 = math.tanh %174 : vector<2x16xf32>
    %cst_40 = arith.constant 1.000000e+00 : f32
    %176 = vector.broadcast %cst_40 : f32 to vector<2x16xf32>
    %177 = arith.subf %176, %168 : vector<2x16xf32>
    %178 = arith.mulf %177, %175 : vector<2x16xf32>
    %179 = arith.mulf %168, %156 : vector<2x16xf32>
    %180 = arith.addf %178, %179 : vector<2x16xf32>
    %181 = vector.extract_strided_slice %31 {offsets = [12, 0], sizes = [2, 48], strides = [1, 1]} : vector<28x48xf32> to vector<2x48xf32>
    %cst_41 = arith.constant dense<0.000000e+00> : vector<2x48xf32>
    %182 = tpu.matmul %180, %4, %cst_41 {dimension_numbers = #tpu.dot_dimension_numbers<[1], [0], [0], [1], [0, 0, 1, 1], [], []>} : vector<2x16xf32>, vector<16x48xf32>, vector<2x48xf32> -> vector<2x48xf32>
    %183 = vector.extract_strided_slice %181 {offsets = [0, 0], sizes = [2, 32], strides = [1, 1]} : vector<2x48xf32> to vector<2x32xf32>
    %184 = vector.extract_strided_slice %182 {offsets = [0, 0], sizes = [2, 32], strides = [1, 1]} : vector<2x48xf32> to vector<2x32xf32>
    %185 = arith.addf %183, %184 : vector<2x32xf32>
    %186 = arith.negf %185 : vector<2x32xf32>
    %187 = math.exp %186 : vector<2x32xf32>
    %cst_42 = arith.constant 1.000000e+00 : f32
    %188 = vector.broadcast %cst_42 : f32 to vector<2x32xf32>
    %189 = arith.addf %188, %187 : vector<2x32xf32>
    %190 = arith.divf %188, %189 : vector<2x32xf32>
    %191 = vector.extract_strided_slice %190 {offsets = [0, 0], sizes = [2, 16], strides = [1, 1]} : vector<2x32xf32> to vector<2x16xf32>
    %192 = vector.extract_strided_slice %190 {offsets = [0, 16], sizes = [2, 16], strides = [1, 1]} : vector<2x32xf32> to vector<2x16xf32>
    %193 = vector.extract_strided_slice %181 {offsets = [0, 32], sizes = [2, 16], strides = [1, 1]} : vector<2x48xf32> to vector<2x16xf32>
    %194 = vector.extract_strided_slice %182 {offsets = [0, 32], sizes = [2, 16], strides = [1, 1]} : vector<2x48xf32> to vector<2x16xf32>
    %195 = vector.broadcast %10 : vector<1x16xf32> to vector<2x16xf32>
    %196 = arith.addf %194, %195 : vector<2x16xf32>
    %197 = arith.mulf %191, %196 : vector<2x16xf32>
    %198 = arith.addf %193, %197 : vector<2x16xf32>
    %199 = math.tanh %198 : vector<2x16xf32>
    %cst_43 = arith.constant 1.000000e+00 : f32
    %200 = vector.broadcast %cst_43 : f32 to vector<2x16xf32>
    %201 = arith.subf %200, %192 : vector<2x16xf32>
    %202 = arith.mulf %201, %199 : vector<2x16xf32>
    %203 = arith.mulf %192, %180 : vector<2x16xf32>
    %204 = arith.addf %202, %203 : vector<2x16xf32>
    %205 = vector.extract_strided_slice %31 {offsets = [14, 0], sizes = [2, 48], strides = [1, 1]} : vector<28x48xf32> to vector<2x48xf32>
    %cst_44 = arith.constant dense<0.000000e+00> : vector<2x48xf32>
    %206 = tpu.matmul %204, %4, %cst_44 {dimension_numbers = #tpu.dot_dimension_numbers<[1], [0], [0], [1], [0, 0, 1, 1], [], []>} : vector<2x16xf32>, vector<16x48xf32>, vector<2x48xf32> -> vector<2x48xf32>
    %207 = vector.extract_strided_slice %205 {offsets = [0, 0], sizes = [2, 32], strides = [1, 1]} : vector<2x48xf32> to vector<2x32xf32>
    %208 = vector.extract_strided_slice %206 {offsets = [0, 0], sizes = [2, 32], strides = [1, 1]} : vector<2x48xf32> to vector<2x32xf32>
    %209 = arith.addf %207, %208 : vector<2x32xf32>
    %210 = arith.negf %209 : vector<2x32xf32>
    %211 = math.exp %210 : vector<2x32xf32>
    %cst_45 = arith.constant 1.000000e+00 : f32
    %212 = vector.broadcast %cst_45 : f32 to vector<2x32xf32>
    %213 = arith.addf %212, %211 : vector<2x32xf32>
    %214 = arith.divf %212, %213 : vector<2x32xf32>
    %215 = vector.extract_strided_slice %214 {offsets = [0, 0], sizes = [2, 16], strides = [1, 1]} : vector<2x32xf32> to vector<2x16xf32>
    %216 = vector.extract_strided_slice %214 {offsets = [0, 16], sizes = [2, 16], strides = [1, 1]} : vector<2x32xf32> to vector<2x16xf32>
    %217 = vector.extract_strided_slice %205 {offsets = [0, 32], sizes = [2, 16], strides = [1, 1]} : vector<2x48xf32> to vector<2x16xf32>
    %218 = vector.extract_strided_slice %206 {offsets = [0, 32], sizes = [2, 16], strides = [1, 1]} : vector<2x48xf32> to vector<2x16xf32>
    %219 = vector.broadcast %10 : vector<1x16xf32> to vector<2x16xf32>
    %220 = arith.addf %218, %219 : vector<2x16xf32>
    %221 = arith.mulf %215, %220 : vector<2x16xf32>
    %222 = arith.addf %217, %221 : vector<2x16xf32>
    %223 = math.tanh %222 : vector<2x16xf32>
    %cst_46 = arith.constant 1.000000e+00 : f32
    %224 = vector.broadcast %cst_46 : f32 to vector<2x16xf32>
    %225 = arith.subf %224, %216 : vector<2x16xf32>
    %226 = arith.mulf %225, %223 : vector<2x16xf32>
    %227 = arith.mulf %216, %204 : vector<2x16xf32>
    %228 = arith.addf %226, %227 : vector<2x16xf32>
    %229 = vector.extract_strided_slice %31 {offsets = [16, 0], sizes = [2, 48], strides = [1, 1]} : vector<28x48xf32> to vector<2x48xf32>
    %cst_47 = arith.constant dense<0.000000e+00> : vector<2x48xf32>
    %230 = tpu.matmul %228, %4, %cst_47 {dimension_numbers = #tpu.dot_dimension_numbers<[1], [0], [0], [1], [0, 0, 1, 1], [], []>} : vector<2x16xf32>, vector<16x48xf32>, vector<2x48xf32> -> vector<2x48xf32>
    %231 = vector.extract_strided_slice %229 {offsets = [0, 0], sizes = [2, 32], strides = [1, 1]} : vector<2x48xf32> to vector<2x32xf32>
    %232 = vector.extract_strided_slice %230 {offsets = [0, 0], sizes = [2, 32], strides = [1, 1]} : vector<2x48xf32> to vector<2x32xf32>
    %233 = arith.addf %231, %232 : vector<2x32xf32>
    %234 = arith.negf %233 : vector<2x32xf32>
    %235 = math.exp %234 : vector<2x32xf32>
    %cst_48 = arith.constant 1.000000e+00 : f32
    %236 = vector.broadcast %cst_48 : f32 to vector<2x32xf32>
    %237 = arith.addf %236, %235 : vector<2x32xf32>
    %238 = arith.divf %236, %237 : vector<2x32xf32>
    %239 = vector.extract_strided_slice %238 {offsets = [0, 0], sizes = [2, 16], strides = [1, 1]} : vector<2x32xf32> to vector<2x16xf32>
    %240 = vector.extract_strided_slice %238 {offsets = [0, 16], sizes = [2, 16], strides = [1, 1]} : vector<2x32xf32> to vector<2x16xf32>
    %241 = vector.extract_strided_slice %229 {offsets = [0, 32], sizes = [2, 16], strides = [1, 1]} : vector<2x48xf32> to vector<2x16xf32>
    %242 = vector.extract_strided_slice %230 {offsets = [0, 32], sizes = [2, 16], strides = [1, 1]} : vector<2x48xf32> to vector<2x16xf32>
    %243 = vector.broadcast %10 : vector<1x16xf32> to vector<2x16xf32>
    %244 = arith.addf %242, %243 : vector<2x16xf32>
    %245 = arith.mulf %239, %244 : vector<2x16xf32>
    %246 = arith.addf %241, %245 : vector<2x16xf32>
    %247 = math.tanh %246 : vector<2x16xf32>
    %cst_49 = arith.constant 1.000000e+00 : f32
    %248 = vector.broadcast %cst_49 : f32 to vector<2x16xf32>
    %249 = arith.subf %248, %240 : vector<2x16xf32>
    %250 = arith.mulf %249, %247 : vector<2x16xf32>
    %251 = arith.mulf %240, %228 : vector<2x16xf32>
    %252 = arith.addf %250, %251 : vector<2x16xf32>
    %253 = vector.extract_strided_slice %31 {offsets = [18, 0], sizes = [2, 48], strides = [1, 1]} : vector<28x48xf32> to vector<2x48xf32>
    %cst_50 = arith.constant dense<0.000000e+00> : vector<2x48xf32>
    %254 = tpu.matmul %252, %4, %cst_50 {dimension_numbers = #tpu.dot_dimension_numbers<[1], [0], [0], [1], [0, 0, 1, 1], [], []>} : vector<2x16xf32>, vector<16x48xf32>, vector<2x48xf32> -> vector<2x48xf32>
    %255 = vector.extract_strided_slice %253 {offsets = [0, 0], sizes = [2, 32], strides = [1, 1]} : vector<2x48xf32> to vector<2x32xf32>
    %256 = vector.extract_strided_slice %254 {offsets = [0, 0], sizes = [2, 32], strides = [1, 1]} : vector<2x48xf32> to vector<2x32xf32>
    %257 = arith.addf %255, %256 : vector<2x32xf32>
    %258 = arith.negf %257 : vector<2x32xf32>
    %259 = math.exp %258 : vector<2x32xf32>
    %cst_51 = arith.constant 1.000000e+00 : f32
    %260 = vector.broadcast %cst_51 : f32 to vector<2x32xf32>
    %261 = arith.addf %260, %259 : vector<2x32xf32>
    %262 = arith.divf %260, %261 : vector<2x32xf32>
    %263 = vector.extract_strided_slice %262 {offsets = [0, 0], sizes = [2, 16], strides = [1, 1]} : vector<2x32xf32> to vector<2x16xf32>
    %264 = vector.extract_strided_slice %262 {offsets = [0, 16], sizes = [2, 16], strides = [1, 1]} : vector<2x32xf32> to vector<2x16xf32>
    %265 = vector.extract_strided_slice %253 {offsets = [0, 32], sizes = [2, 16], strides = [1, 1]} : vector<2x48xf32> to vector<2x16xf32>
    %266 = vector.extract_strided_slice %254 {offsets = [0, 32], sizes = [2, 16], strides = [1, 1]} : vector<2x48xf32> to vector<2x16xf32>
    %267 = vector.broadcast %10 : vector<1x16xf32> to vector<2x16xf32>
    %268 = arith.addf %266, %267 : vector<2x16xf32>
    %269 = arith.mulf %263, %268 : vector<2x16xf32>
    %270 = arith.addf %265, %269 : vector<2x16xf32>
    %271 = math.tanh %270 : vector<2x16xf32>
    %cst_52 = arith.constant 1.000000e+00 : f32
    %272 = vector.broadcast %cst_52 : f32 to vector<2x16xf32>
    %273 = arith.subf %272, %264 : vector<2x16xf32>
    %274 = arith.mulf %273, %271 : vector<2x16xf32>
    %275 = arith.mulf %264, %252 : vector<2x16xf32>
    %276 = arith.addf %274, %275 : vector<2x16xf32>
    %277 = vector.extract_strided_slice %31 {offsets = [20, 0], sizes = [2, 48], strides = [1, 1]} : vector<28x48xf32> to vector<2x48xf32>
    %cst_53 = arith.constant dense<0.000000e+00> : vector<2x48xf32>
    %278 = tpu.matmul %276, %4, %cst_53 {dimension_numbers = #tpu.dot_dimension_numbers<[1], [0], [0], [1], [0, 0, 1, 1], [], []>} : vector<2x16xf32>, vector<16x48xf32>, vector<2x48xf32> -> vector<2x48xf32>
    %279 = vector.extract_strided_slice %277 {offsets = [0, 0], sizes = [2, 32], strides = [1, 1]} : vector<2x48xf32> to vector<2x32xf32>
    %280 = vector.extract_strided_slice %278 {offsets = [0, 0], sizes = [2, 32], strides = [1, 1]} : vector<2x48xf32> to vector<2x32xf32>
    %281 = arith.addf %279, %280 : vector<2x32xf32>
    %282 = arith.negf %281 : vector<2x32xf32>
    %283 = math.exp %282 : vector<2x32xf32>
    %cst_54 = arith.constant 1.000000e+00 : f32
    %284 = vector.broadcast %cst_54 : f32 to vector<2x32xf32>
    %285 = arith.addf %284, %283 : vector<2x32xf32>
    %286 = arith.divf %284, %285 : vector<2x32xf32>
    %287 = vector.extract_strided_slice %286 {offsets = [0, 0], sizes = [2, 16], strides = [1, 1]} : vector<2x32xf32> to vector<2x16xf32>
    %288 = vector.extract_strided_slice %286 {offsets = [0, 16], sizes = [2, 16], strides = [1, 1]} : vector<2x32xf32> to vector<2x16xf32>
    %289 = vector.extract_strided_slice %277 {offsets = [0, 32], sizes = [2, 16], strides = [1, 1]} : vector<2x48xf32> to vector<2x16xf32>
    %290 = vector.extract_strided_slice %278 {offsets = [0, 32], sizes = [2, 16], strides = [1, 1]} : vector<2x48xf32> to vector<2x16xf32>
    %291 = vector.broadcast %10 : vector<1x16xf32> to vector<2x16xf32>
    %292 = arith.addf %290, %291 : vector<2x16xf32>
    %293 = arith.mulf %287, %292 : vector<2x16xf32>
    %294 = arith.addf %289, %293 : vector<2x16xf32>
    %295 = math.tanh %294 : vector<2x16xf32>
    %cst_55 = arith.constant 1.000000e+00 : f32
    %296 = vector.broadcast %cst_55 : f32 to vector<2x16xf32>
    %297 = arith.subf %296, %288 : vector<2x16xf32>
    %298 = arith.mulf %297, %295 : vector<2x16xf32>
    %299 = arith.mulf %288, %276 : vector<2x16xf32>
    %300 = arith.addf %298, %299 : vector<2x16xf32>
    %301 = vector.extract_strided_slice %31 {offsets = [22, 0], sizes = [2, 48], strides = [1, 1]} : vector<28x48xf32> to vector<2x48xf32>
    %cst_56 = arith.constant dense<0.000000e+00> : vector<2x48xf32>
    %302 = tpu.matmul %300, %4, %cst_56 {dimension_numbers = #tpu.dot_dimension_numbers<[1], [0], [0], [1], [0, 0, 1, 1], [], []>} : vector<2x16xf32>, vector<16x48xf32>, vector<2x48xf32> -> vector<2x48xf32>
    %303 = vector.extract_strided_slice %301 {offsets = [0, 0], sizes = [2, 32], strides = [1, 1]} : vector<2x48xf32> to vector<2x32xf32>
    %304 = vector.extract_strided_slice %302 {offsets = [0, 0], sizes = [2, 32], strides = [1, 1]} : vector<2x48xf32> to vector<2x32xf32>
    %305 = arith.addf %303, %304 : vector<2x32xf32>
    %306 = arith.negf %305 : vector<2x32xf32>
    %307 = math.exp %306 : vector<2x32xf32>
    %cst_57 = arith.constant 1.000000e+00 : f32
    %308 = vector.broadcast %cst_57 : f32 to vector<2x32xf32>
    %309 = arith.addf %308, %307 : vector<2x32xf32>
    %310 = arith.divf %308, %309 : vector<2x32xf32>
    %311 = vector.extract_strided_slice %310 {offsets = [0, 0], sizes = [2, 16], strides = [1, 1]} : vector<2x32xf32> to vector<2x16xf32>
    %312 = vector.extract_strided_slice %310 {offsets = [0, 16], sizes = [2, 16], strides = [1, 1]} : vector<2x32xf32> to vector<2x16xf32>
    %313 = vector.extract_strided_slice %301 {offsets = [0, 32], sizes = [2, 16], strides = [1, 1]} : vector<2x48xf32> to vector<2x16xf32>
    %314 = vector.extract_strided_slice %302 {offsets = [0, 32], sizes = [2, 16], strides = [1, 1]} : vector<2x48xf32> to vector<2x16xf32>
    %315 = vector.broadcast %10 : vector<1x16xf32> to vector<2x16xf32>
    %316 = arith.addf %314, %315 : vector<2x16xf32>
    %317 = arith.mulf %311, %316 : vector<2x16xf32>
    %318 = arith.addf %313, %317 : vector<2x16xf32>
    %319 = math.tanh %318 : vector<2x16xf32>
    %cst_58 = arith.constant 1.000000e+00 : f32
    %320 = vector.broadcast %cst_58 : f32 to vector<2x16xf32>
    %321 = arith.subf %320, %312 : vector<2x16xf32>
    %322 = arith.mulf %321, %319 : vector<2x16xf32>
    %323 = arith.mulf %312, %300 : vector<2x16xf32>
    %324 = arith.addf %322, %323 : vector<2x16xf32>
    %325 = vector.extract_strided_slice %31 {offsets = [24, 0], sizes = [2, 48], strides = [1, 1]} : vector<28x48xf32> to vector<2x48xf32>
    %cst_59 = arith.constant dense<0.000000e+00> : vector<2x48xf32>
    %326 = tpu.matmul %324, %4, %cst_59 {dimension_numbers = #tpu.dot_dimension_numbers<[1], [0], [0], [1], [0, 0, 1, 1], [], []>} : vector<2x16xf32>, vector<16x48xf32>, vector<2x48xf32> -> vector<2x48xf32>
    %327 = vector.extract_strided_slice %325 {offsets = [0, 0], sizes = [2, 32], strides = [1, 1]} : vector<2x48xf32> to vector<2x32xf32>
    %328 = vector.extract_strided_slice %326 {offsets = [0, 0], sizes = [2, 32], strides = [1, 1]} : vector<2x48xf32> to vector<2x32xf32>
    %329 = arith.addf %327, %328 : vector<2x32xf32>
    %330 = arith.negf %329 : vector<2x32xf32>
    %331 = math.exp %330 : vector<2x32xf32>
    %cst_60 = arith.constant 1.000000e+00 : f32
    %332 = vector.broadcast %cst_60 : f32 to vector<2x32xf32>
    %333 = arith.addf %332, %331 : vector<2x32xf32>
    %334 = arith.divf %332, %333 : vector<2x32xf32>
    %335 = vector.extract_strided_slice %334 {offsets = [0, 0], sizes = [2, 16], strides = [1, 1]} : vector<2x32xf32> to vector<2x16xf32>
    %336 = vector.extract_strided_slice %334 {offsets = [0, 16], sizes = [2, 16], strides = [1, 1]} : vector<2x32xf32> to vector<2x16xf32>
    %337 = vector.extract_strided_slice %325 {offsets = [0, 32], sizes = [2, 16], strides = [1, 1]} : vector<2x48xf32> to vector<2x16xf32>
    %338 = vector.extract_strided_slice %326 {offsets = [0, 32], sizes = [2, 16], strides = [1, 1]} : vector<2x48xf32> to vector<2x16xf32>
    %339 = vector.broadcast %10 : vector<1x16xf32> to vector<2x16xf32>
    %340 = arith.addf %338, %339 : vector<2x16xf32>
    %341 = arith.mulf %335, %340 : vector<2x16xf32>
    %342 = arith.addf %337, %341 : vector<2x16xf32>
    %343 = math.tanh %342 : vector<2x16xf32>
    %cst_61 = arith.constant 1.000000e+00 : f32
    %344 = vector.broadcast %cst_61 : f32 to vector<2x16xf32>
    %345 = arith.subf %344, %336 : vector<2x16xf32>
    %346 = arith.mulf %345, %343 : vector<2x16xf32>
    %347 = arith.mulf %336, %324 : vector<2x16xf32>
    %348 = arith.addf %346, %347 : vector<2x16xf32>
    %349 = vector.extract_strided_slice %31 {offsets = [26, 0], sizes = [2, 48], strides = [1, 1]} : vector<28x48xf32> to vector<2x48xf32>
    %cst_62 = arith.constant dense<0.000000e+00> : vector<2x48xf32>
    %350 = tpu.matmul %348, %4, %cst_62 {dimension_numbers = #tpu.dot_dimension_numbers<[1], [0], [0], [1], [0, 0, 1, 1], [], []>} : vector<2x16xf32>, vector<16x48xf32>, vector<2x48xf32> -> vector<2x48xf32>
    %351 = vector.extract_strided_slice %349 {offsets = [0, 0], sizes = [2, 32], strides = [1, 1]} : vector<2x48xf32> to vector<2x32xf32>
    %352 = vector.extract_strided_slice %350 {offsets = [0, 0], sizes = [2, 32], strides = [1, 1]} : vector<2x48xf32> to vector<2x32xf32>
    %353 = arith.addf %351, %352 : vector<2x32xf32>
    %354 = arith.negf %353 : vector<2x32xf32>
    %355 = math.exp %354 : vector<2x32xf32>
    %cst_63 = arith.constant 1.000000e+00 : f32
    %356 = vector.broadcast %cst_63 : f32 to vector<2x32xf32>
    %357 = arith.addf %356, %355 : vector<2x32xf32>
    %358 = arith.divf %356, %357 : vector<2x32xf32>
    %359 = vector.extract_strided_slice %358 {offsets = [0, 0], sizes = [2, 16], strides = [1, 1]} : vector<2x32xf32> to vector<2x16xf32>
    %360 = vector.extract_strided_slice %358 {offsets = [0, 16], sizes = [2, 16], strides = [1, 1]} : vector<2x32xf32> to vector<2x16xf32>
    %361 = vector.extract_strided_slice %349 {offsets = [0, 32], sizes = [2, 16], strides = [1, 1]} : vector<2x48xf32> to vector<2x16xf32>
    %362 = vector.extract_strided_slice %350 {offsets = [0, 32], sizes = [2, 16], strides = [1, 1]} : vector<2x48xf32> to vector<2x16xf32>
    %363 = vector.broadcast %10 : vector<1x16xf32> to vector<2x16xf32>
    %364 = arith.addf %362, %363 : vector<2x16xf32>
    %365 = arith.mulf %359, %364 : vector<2x16xf32>
    %366 = arith.addf %361, %365 : vector<2x16xf32>
    %367 = math.tanh %366 : vector<2x16xf32>
    %cst_64 = arith.constant 1.000000e+00 : f32
    %368 = vector.broadcast %cst_64 : f32 to vector<2x16xf32>
    %369 = arith.subf %368, %360 : vector<2x16xf32>
    %370 = arith.mulf %369, %367 : vector<2x16xf32>
    %371 = arith.mulf %360, %348 : vector<2x16xf32>
    %372 = arith.addf %370, %371 : vector<2x16xf32>
    %cst_65 = arith.constant 0.000000e+00 : f32
    %373 = vector.broadcast %cst_65 : f32 to vector<4x4xf32>
    %374 = vector.extract_strided_slice %35 {offsets = [0, 0], sizes = [4, 12], strides = [1, 1]} : vector<24x12xf32> to vector<4x12xf32>
    %cst_66 = arith.constant dense<0.000000e+00> : vector<4x12xf32>
    %375 = tpu.matmul %373, %6, %cst_66 {dimension_numbers = #tpu.dot_dimension_numbers<[1], [0], [0], [1], [0, 0, 1, 1], [], []>} : vector<4x4xf32>, vector<4x12xf32>, vector<4x12xf32> -> vector<4x12xf32>
    %376 = vector.extract_strided_slice %374 {offsets = [0, 0], sizes = [4, 8], strides = [1, 1]} : vector<4x12xf32> to vector<4x8xf32>
    %377 = vector.extract_strided_slice %375 {offsets = [0, 0], sizes = [4, 8], strides = [1, 1]} : vector<4x12xf32> to vector<4x8xf32>
    %378 = arith.addf %376, %377 : vector<4x8xf32>
    %379 = arith.negf %378 : vector<4x8xf32>
    %380 = math.exp %379 : vector<4x8xf32>
    %cst_67 = arith.constant 1.000000e+00 : f32
    %381 = vector.broadcast %cst_67 : f32 to vector<4x8xf32>
    %382 = arith.addf %381, %380 : vector<4x8xf32>
    %383 = arith.divf %381, %382 : vector<4x8xf32>
    %384 = vector.extract_strided_slice %383 {offsets = [0, 0], sizes = [4, 4], strides = [1, 1]} : vector<4x8xf32> to vector<4x4xf32>
    %385 = vector.extract_strided_slice %383 {offsets = [0, 4], sizes = [4, 4], strides = [1, 1]} : vector<4x8xf32> to vector<4x4xf32>
    %386 = vector.extract_strided_slice %374 {offsets = [0, 8], sizes = [4, 4], strides = [1, 1]} : vector<4x12xf32> to vector<4x4xf32>
    %387 = vector.extract_strided_slice %375 {offsets = [0, 8], sizes = [4, 4], strides = [1, 1]} : vector<4x12xf32> to vector<4x4xf32>
    %388 = vector.broadcast %12 : vector<1x4xf32> to vector<4x4xf32>
    %389 = arith.addf %387, %388 : vector<4x4xf32>
    %390 = arith.mulf %384, %389 : vector<4x4xf32>
    %391 = arith.addf %386, %390 : vector<4x4xf32>
    %392 = math.tanh %391 : vector<4x4xf32>
    %cst_68 = arith.constant 1.000000e+00 : f32
    %393 = vector.broadcast %cst_68 : f32 to vector<4x4xf32>
    %394 = arith.subf %393, %385 : vector<4x4xf32>
    %395 = arith.mulf %394, %392 : vector<4x4xf32>
    %396 = arith.mulf %385, %373 : vector<4x4xf32>
    %397 = arith.addf %395, %396 : vector<4x4xf32>
    %398 = vector.extract_strided_slice %35 {offsets = [4, 0], sizes = [4, 12], strides = [1, 1]} : vector<24x12xf32> to vector<4x12xf32>
    %cst_69 = arith.constant dense<0.000000e+00> : vector<4x12xf32>
    %399 = tpu.matmul %397, %6, %cst_69 {dimension_numbers = #tpu.dot_dimension_numbers<[1], [0], [0], [1], [0, 0, 1, 1], [], []>} : vector<4x4xf32>, vector<4x12xf32>, vector<4x12xf32> -> vector<4x12xf32>
    %400 = vector.extract_strided_slice %398 {offsets = [0, 0], sizes = [4, 8], strides = [1, 1]} : vector<4x12xf32> to vector<4x8xf32>
    %401 = vector.extract_strided_slice %399 {offsets = [0, 0], sizes = [4, 8], strides = [1, 1]} : vector<4x12xf32> to vector<4x8xf32>
    %402 = arith.addf %400, %401 : vector<4x8xf32>
    %403 = arith.negf %402 : vector<4x8xf32>
    %404 = math.exp %403 : vector<4x8xf32>
    %cst_70 = arith.constant 1.000000e+00 : f32
    %405 = vector.broadcast %cst_70 : f32 to vector<4x8xf32>
    %406 = arith.addf %405, %404 : vector<4x8xf32>
    %407 = arith.divf %405, %406 : vector<4x8xf32>
    %408 = vector.extract_strided_slice %407 {offsets = [0, 0], sizes = [4, 4], strides = [1, 1]} : vector<4x8xf32> to vector<4x4xf32>
    %409 = vector.extract_strided_slice %407 {offsets = [0, 4], sizes = [4, 4], strides = [1, 1]} : vector<4x8xf32> to vector<4x4xf32>
    %410 = vector.extract_strided_slice %398 {offsets = [0, 8], sizes = [4, 4], strides = [1, 1]} : vector<4x12xf32> to vector<4x4xf32>
    %411 = vector.extract_strided_slice %399 {offsets = [0, 8], sizes = [4, 4], strides = [1, 1]} : vector<4x12xf32> to vector<4x4xf32>
    %412 = vector.broadcast %12 : vector<1x4xf32> to vector<4x4xf32>
    %413 = arith.addf %411, %412 : vector<4x4xf32>
    %414 = arith.mulf %408, %413 : vector<4x4xf32>
    %415 = arith.addf %410, %414 : vector<4x4xf32>
    %416 = math.tanh %415 : vector<4x4xf32>
    %cst_71 = arith.constant 1.000000e+00 : f32
    %417 = vector.broadcast %cst_71 : f32 to vector<4x4xf32>
    %418 = arith.subf %417, %409 : vector<4x4xf32>
    %419 = arith.mulf %418, %416 : vector<4x4xf32>
    %420 = arith.mulf %409, %397 : vector<4x4xf32>
    %421 = arith.addf %419, %420 : vector<4x4xf32>
    %422 = vector.extract_strided_slice %35 {offsets = [8, 0], sizes = [4, 12], strides = [1, 1]} : vector<24x12xf32> to vector<4x12xf32>
    %cst_72 = arith.constant dense<0.000000e+00> : vector<4x12xf32>
    %423 = tpu.matmul %421, %6, %cst_72 {dimension_numbers = #tpu.dot_dimension_numbers<[1], [0], [0], [1], [0, 0, 1, 1], [], []>} : vector<4x4xf32>, vector<4x12xf32>, vector<4x12xf32> -> vector<4x12xf32>
    %424 = vector.extract_strided_slice %422 {offsets = [0, 0], sizes = [4, 8], strides = [1, 1]} : vector<4x12xf32> to vector<4x8xf32>
    %425 = vector.extract_strided_slice %423 {offsets = [0, 0], sizes = [4, 8], strides = [1, 1]} : vector<4x12xf32> to vector<4x8xf32>
    %426 = arith.addf %424, %425 : vector<4x8xf32>
    %427 = arith.negf %426 : vector<4x8xf32>
    %428 = math.exp %427 : vector<4x8xf32>
    %cst_73 = arith.constant 1.000000e+00 : f32
    %429 = vector.broadcast %cst_73 : f32 to vector<4x8xf32>
    %430 = arith.addf %429, %428 : vector<4x8xf32>
    %431 = arith.divf %429, %430 : vector<4x8xf32>
    %432 = vector.extract_strided_slice %431 {offsets = [0, 0], sizes = [4, 4], strides = [1, 1]} : vector<4x8xf32> to vector<4x4xf32>
    %433 = vector.extract_strided_slice %431 {offsets = [0, 4], sizes = [4, 4], strides = [1, 1]} : vector<4x8xf32> to vector<4x4xf32>
    %434 = vector.extract_strided_slice %422 {offsets = [0, 8], sizes = [4, 4], strides = [1, 1]} : vector<4x12xf32> to vector<4x4xf32>
    %435 = vector.extract_strided_slice %423 {offsets = [0, 8], sizes = [4, 4], strides = [1, 1]} : vector<4x12xf32> to vector<4x4xf32>
    %436 = vector.broadcast %12 : vector<1x4xf32> to vector<4x4xf32>
    %437 = arith.addf %435, %436 : vector<4x4xf32>
    %438 = arith.mulf %432, %437 : vector<4x4xf32>
    %439 = arith.addf %434, %438 : vector<4x4xf32>
    %440 = math.tanh %439 : vector<4x4xf32>
    %cst_74 = arith.constant 1.000000e+00 : f32
    %441 = vector.broadcast %cst_74 : f32 to vector<4x4xf32>
    %442 = arith.subf %441, %433 : vector<4x4xf32>
    %443 = arith.mulf %442, %440 : vector<4x4xf32>
    %444 = arith.mulf %433, %421 : vector<4x4xf32>
    %445 = arith.addf %443, %444 : vector<4x4xf32>
    %446 = vector.extract_strided_slice %35 {offsets = [12, 0], sizes = [4, 12], strides = [1, 1]} : vector<24x12xf32> to vector<4x12xf32>
    %cst_75 = arith.constant dense<0.000000e+00> : vector<4x12xf32>
    %447 = tpu.matmul %445, %6, %cst_75 {dimension_numbers = #tpu.dot_dimension_numbers<[1], [0], [0], [1], [0, 0, 1, 1], [], []>} : vector<4x4xf32>, vector<4x12xf32>, vector<4x12xf32> -> vector<4x12xf32>
    %448 = vector.extract_strided_slice %446 {offsets = [0, 0], sizes = [4, 8], strides = [1, 1]} : vector<4x12xf32> to vector<4x8xf32>
    %449 = vector.extract_strided_slice %447 {offsets = [0, 0], sizes = [4, 8], strides = [1, 1]} : vector<4x12xf32> to vector<4x8xf32>
    %450 = arith.addf %448, %449 : vector<4x8xf32>
    %451 = arith.negf %450 : vector<4x8xf32>
    %452 = math.exp %451 : vector<4x8xf32>
    %cst_76 = arith.constant 1.000000e+00 : f32
    %453 = vector.broadcast %cst_76 : f32 to vector<4x8xf32>
    %454 = arith.addf %453, %452 : vector<4x8xf32>
    %455 = arith.divf %453, %454 : vector<4x8xf32>
    %456 = vector.extract_strided_slice %455 {offsets = [0, 0], sizes = [4, 4], strides = [1, 1]} : vector<4x8xf32> to vector<4x4xf32>
    %457 = vector.extract_strided_slice %455 {offsets = [0, 4], sizes = [4, 4], strides = [1, 1]} : vector<4x8xf32> to vector<4x4xf32>
    %458 = vector.extract_strided_slice %446 {offsets = [0, 8], sizes = [4, 4], strides = [1, 1]} : vector<4x12xf32> to vector<4x4xf32>
    %459 = vector.extract_strided_slice %447 {offsets = [0, 8], sizes = [4, 4], strides = [1, 1]} : vector<4x12xf32> to vector<4x4xf32>
    %460 = vector.broadcast %12 : vector<1x4xf32> to vector<4x4xf32>
    %461 = arith.addf %459, %460 : vector<4x4xf32>
    %462 = arith.mulf %456, %461 : vector<4x4xf32>
    %463 = arith.addf %458, %462 : vector<4x4xf32>
    %464 = math.tanh %463 : vector<4x4xf32>
    %cst_77 = arith.constant 1.000000e+00 : f32
    %465 = vector.broadcast %cst_77 : f32 to vector<4x4xf32>
    %466 = arith.subf %465, %457 : vector<4x4xf32>
    %467 = arith.mulf %466, %464 : vector<4x4xf32>
    %468 = arith.mulf %457, %445 : vector<4x4xf32>
    %469 = arith.addf %467, %468 : vector<4x4xf32>
    %470 = vector.extract_strided_slice %35 {offsets = [16, 0], sizes = [4, 12], strides = [1, 1]} : vector<24x12xf32> to vector<4x12xf32>
    %cst_78 = arith.constant dense<0.000000e+00> : vector<4x12xf32>
    %471 = tpu.matmul %469, %6, %cst_78 {dimension_numbers = #tpu.dot_dimension_numbers<[1], [0], [0], [1], [0, 0, 1, 1], [], []>} : vector<4x4xf32>, vector<4x12xf32>, vector<4x12xf32> -> vector<4x12xf32>
    %472 = vector.extract_strided_slice %470 {offsets = [0, 0], sizes = [4, 8], strides = [1, 1]} : vector<4x12xf32> to vector<4x8xf32>
    %473 = vector.extract_strided_slice %471 {offsets = [0, 0], sizes = [4, 8], strides = [1, 1]} : vector<4x12xf32> to vector<4x8xf32>
    %474 = arith.addf %472, %473 : vector<4x8xf32>
    %475 = arith.negf %474 : vector<4x8xf32>
    %476 = math.exp %475 : vector<4x8xf32>
    %cst_79 = arith.constant 1.000000e+00 : f32
    %477 = vector.broadcast %cst_79 : f32 to vector<4x8xf32>
    %478 = arith.addf %477, %476 : vector<4x8xf32>
    %479 = arith.divf %477, %478 : vector<4x8xf32>
    %480 = vector.extract_strided_slice %479 {offsets = [0, 0], sizes = [4, 4], strides = [1, 1]} : vector<4x8xf32> to vector<4x4xf32>
    %481 = vector.extract_strided_slice %479 {offsets = [0, 4], sizes = [4, 4], strides = [1, 1]} : vector<4x8xf32> to vector<4x4xf32>
    %482 = vector.extract_strided_slice %470 {offsets = [0, 8], sizes = [4, 4], strides = [1, 1]} : vector<4x12xf32> to vector<4x4xf32>
    %483 = vector.extract_strided_slice %471 {offsets = [0, 8], sizes = [4, 4], strides = [1, 1]} : vector<4x12xf32> to vector<4x4xf32>
    %484 = vector.broadcast %12 : vector<1x4xf32> to vector<4x4xf32>
    %485 = arith.addf %483, %484 : vector<4x4xf32>
    %486 = arith.mulf %480, %485 : vector<4x4xf32>
    %487 = arith.addf %482, %486 : vector<4x4xf32>
    %488 = math.tanh %487 : vector<4x4xf32>
    %cst_80 = arith.constant 1.000000e+00 : f32
    %489 = vector.broadcast %cst_80 : f32 to vector<4x4xf32>
    %490 = arith.subf %489, %481 : vector<4x4xf32>
    %491 = arith.mulf %490, %488 : vector<4x4xf32>
    %492 = arith.mulf %481, %469 : vector<4x4xf32>
    %493 = arith.addf %491, %492 : vector<4x4xf32>
    %494 = vector.extract_strided_slice %35 {offsets = [20, 0], sizes = [4, 12], strides = [1, 1]} : vector<24x12xf32> to vector<4x12xf32>
    %cst_81 = arith.constant dense<0.000000e+00> : vector<4x12xf32>
    %495 = tpu.matmul %493, %6, %cst_81 {dimension_numbers = #tpu.dot_dimension_numbers<[1], [0], [0], [1], [0, 0, 1, 1], [], []>} : vector<4x4xf32>, vector<4x12xf32>, vector<4x12xf32> -> vector<4x12xf32>
    %496 = vector.extract_strided_slice %494 {offsets = [0, 0], sizes = [4, 8], strides = [1, 1]} : vector<4x12xf32> to vector<4x8xf32>
    %497 = vector.extract_strided_slice %495 {offsets = [0, 0], sizes = [4, 8], strides = [1, 1]} : vector<4x12xf32> to vector<4x8xf32>
    %498 = arith.addf %496, %497 : vector<4x8xf32>
    %499 = arith.negf %498 : vector<4x8xf32>
    %500 = math.exp %499 : vector<4x8xf32>
    %cst_82 = arith.constant 1.000000e+00 : f32
    %501 = vector.broadcast %cst_82 : f32 to vector<4x8xf32>
    %502 = arith.addf %501, %500 : vector<4x8xf32>
    %503 = arith.divf %501, %502 : vector<4x8xf32>
    %504 = vector.extract_strided_slice %503 {offsets = [0, 0], sizes = [4, 4], strides = [1, 1]} : vector<4x8xf32> to vector<4x4xf32>
    %505 = vector.extract_strided_slice %503 {offsets = [0, 4], sizes = [4, 4], strides = [1, 1]} : vector<4x8xf32> to vector<4x4xf32>
    %506 = vector.extract_strided_slice %494 {offsets = [0, 8], sizes = [4, 4], strides = [1, 1]} : vector<4x12xf32> to vector<4x4xf32>
    %507 = vector.extract_strided_slice %495 {offsets = [0, 8], sizes = [4, 4], strides = [1, 1]} : vector<4x12xf32> to vector<4x4xf32>
    %508 = vector.broadcast %12 : vector<1x4xf32> to vector<4x4xf32>
    %509 = arith.addf %507, %508 : vector<4x4xf32>
    %510 = arith.mulf %504, %509 : vector<4x4xf32>
    %511 = arith.addf %506, %510 : vector<4x4xf32>
    %512 = math.tanh %511 : vector<4x4xf32>
    %cst_83 = arith.constant 1.000000e+00 : f32
    %513 = vector.broadcast %cst_83 : f32 to vector<4x4xf32>
    %514 = arith.subf %513, %505 : vector<4x4xf32>
    %515 = arith.mulf %514, %512 : vector<4x4xf32>
    %516 = arith.mulf %505, %493 : vector<4x4xf32>
    %517 = arith.addf %515, %516 : vector<4x4xf32>
    %518 = vector.extract_strided_slice %7 {offsets = [0, 0], sizes = [16, 8], strides = [1, 1]} : vector<24x8xf32> to vector<16x8xf32>
    %cst_84 = arith.constant dense<0.000000e+00> : vector<2x8xf32>
    %519 = tpu.matmul %372, %518, %cst_84 {dimension_numbers = #tpu.dot_dimension_numbers<[1], [0], [0], [1], [0, 0, 1, 1], [], []>} : vector<2x16xf32>, vector<16x8xf32>, vector<2x8xf32> -> vector<2x8xf32>
    %520 = vector.broadcast %13 : vector<1x8xf32> to vector<2x8xf32>
    %521 = arith.addf %519, %520 : vector<2x8xf32>
    %522 = vector.extract_strided_slice %517 {offsets = [0, 0], sizes = [2, 4], strides = [1, 1]} : vector<4x4xf32> to vector<2x4xf32>
    %523 = vector.extract_strided_slice %7 {offsets = [16, 0], sizes = [4, 8], strides = [1, 1]} : vector<24x8xf32> to vector<4x8xf32>
    %cst_85 = arith.constant dense<0.000000e+00> : vector<2x8xf32>
    %524 = tpu.matmul %522, %523, %cst_85 {dimension_numbers = #tpu.dot_dimension_numbers<[1], [0], [0], [1], [0, 0, 1, 1], [], []>} : vector<2x4xf32>, vector<4x8xf32>, vector<2x8xf32> -> vector<2x8xf32>
    %525 = arith.addf %521, %524 : vector<2x8xf32>
    %526 = vector.extract_strided_slice %517 {offsets = [2, 0], sizes = [2, 4], strides = [1, 1]} : vector<4x4xf32> to vector<2x4xf32>
    %527 = vector.extract_strided_slice %7 {offsets = [20, 0], sizes = [4, 8], strides = [1, 1]} : vector<24x8xf32> to vector<4x8xf32>
    %cst_86 = arith.constant dense<0.000000e+00> : vector<2x8xf32>
    %528 = tpu.matmul %526, %527, %cst_86 {dimension_numbers = #tpu.dot_dimension_numbers<[1], [0], [0], [1], [0, 0, 1, 1], [], []>} : vector<2x4xf32>, vector<4x8xf32>, vector<2x8xf32> -> vector<2x8xf32>
    %529 = arith.addf %525, %528 : vector<2x8xf32>
    %530 = vector.extract_strided_slice %14 {offsets = [24, 0], sizes = [2, 8], strides = [1, 1]} : vector<32x8xf32> to vector<2x8xf32>
    %c0_87 = arith.constant 0 : index
    %531 = memref.load %arg2[%c0_87] : memref<4xf32, #tpu.memory_space<smem>>
    %532 = vector.broadcast %531 : f32 to vector<2x8xf32>
    %533 = arith.mulf %530, %532 : vector<2x8xf32>
    %534 = arith.addf %529, %533 : vector<2x8xf32>
    %535 = vector.extract_strided_slice %14 {offsets = [26, 0], sizes = [2, 8], strides = [1, 1]} : vector<32x8xf32> to vector<2x8xf32>
    %c1 = arith.constant 1 : index
    %536 = memref.load %arg2[%c1] : memref<4xf32, #tpu.memory_space<smem>>
    %537 = vector.broadcast %536 : f32 to vector<2x8xf32>
    %538 = arith.mulf %535, %537 : vector<2x8xf32>
    %539 = arith.addf %534, %538 : vector<2x8xf32>
    %540 = vector.extract_strided_slice %14 {offsets = [28, 0], sizes = [2, 8], strides = [1, 1]} : vector<32x8xf32> to vector<2x8xf32>
    %c2 = arith.constant 2 : index
    %541 = memref.load %arg2[%c2] : memref<4xf32, #tpu.memory_space<smem>>
    %542 = vector.broadcast %541 : f32 to vector<2x8xf32>
    %543 = arith.mulf %540, %542 : vector<2x8xf32>
    %544 = arith.addf %539, %543 : vector<2x8xf32>
    %545 = vector.extract_strided_slice %14 {offsets = [30, 0], sizes = [2, 8], strides = [1, 1]} : vector<32x8xf32> to vector<2x8xf32>
    %c3 = arith.constant 3 : index
    %546 = memref.load %arg2[%c3] : memref<4xf32, #tpu.memory_space<smem>>
    %547 = vector.broadcast %546 : f32 to vector<2x8xf32>
    %548 = arith.mulf %545, %547 : vector<2x8xf32>
    %549 = arith.addf %544, %548 : vector<2x8xf32>
    %c0_88 = arith.constant 0 : index
    %c0_89 = arith.constant 0 : index
    %550 = vector.load %arg3[%c0_88, %c0_89] : memref<2x8xf32, #tpu.memory_space<vmem>>, vector<2x8xf32>
    tpu.vector_store %arg3[%c0_88, %c0_89], %549 {strides = array<i32>} : memref<2x8xf32, #tpu.memory_space<vmem>>, vector<2x8xf32>,
    return
  }
}

</mosaic_0001>

<llo_original>
// kernel: _lambda_.1
$region0: #{_lambda_.1}
  #allocation0 [shape = 'u32[]', space=smem, size = 0x4, offset = 0x4, fixed_abs, tag = 'smem constant byte address 0x4 - core index']
  #allocation1 [shape = 'u32[144,128]{1,0:T(1,128)}', space=vmem, size = 0x12000, scoped, tag = 'internal scratch']
  %s0 = inlined_call_operand.vmem [shape: f32[32,8], index: 0, kind: input, shape index: {}]
  %s1 = inlined_call_operand.vmem [shape: f32[96,48], index: 1, kind: input, shape index: {}]
  %s2 = inlined_call_operand.vmem [shape: f32[4], index: 2, kind: input, shape index: {}]
  %s3 = inlined_call_operand.hbm [shape: f32[2,8], index: 3, kind: output, shape index: {}]
  %s4 = sld [smem:[#allocation0]]
  $region26: #{_lambda_.1} parent=0
    _
  %s6 = ssub.s32 1, %s4
  %s7 = scalar_select 0, %s6, %s4
  $region1: #{_lambda_.1} parent=0
    #allocation2 [shape = 'u8[512]{0}', space=smem, size = 0x200, scoped, tag = 'input window, operand 2, single buffered']
    #allocation3 [shape = 's32[1]{0}', space=sflag, size = 0x4, scoped, tag = 'scoped memory for _lambda_.1']
    #allocation4 [shape = 's32[1]{0}', space=sflag, size = 0x4, scoped, tag = 'scoped memory for _lambda_.1']
    #allocation5 [shape = 'u8[1024]{0}', space=vmem, size = 0x400, scoped, tag = 'output window, operand 0, single buffered']
    %8 = vsyncpa [#allocation4], 0
    %9 = vsyncpa [#allocation3], 0
    // Predicated region
    $region2: #{_lambda_.1} parent=1 // pred_check
      _
    $region3: #{_lambda_.1} parent=1 // pred_check_branch
      %11 = sbr.rel (0) target = $region5
    $region4: #{_lambda_.1} parent=1 // pred_region
      _
    $region5: #{_lambda_.1} parent=1 // pred_fallthru
      _
    // Predicated region
    $region6: #{_lambda_.1} parent=1 // pred_check
      _
    $region7: #{_lambda_.1} parent=1 // pred_check_branch
      %13 = sbr.rel (0) target = $region9
    $region8: #{_lambda_.1} parent=1 // pred_region
      _
    $region9: #{_lambda_.1} parent=1 // pred_fallthru
      _
    // Predicated region
    $region10: #{_lambda_.1} parent=1 // pred_check
      _
    $region11: #{_lambda_.1} parent=1 // pred_check_branch
      %15 = sbr.rel (0) target = $region13
    $region12: #{_lambda_.1} parent=1 // pred_region
      %s17 = ssub.s32 16, 16
      %18 = vsyncadd [#allocation4], %s17
      %s20 = sshll.u32 %s2, 4
      %s21 = int_to_ptr.vmem [resolvable:$true] %s20
      %23 = dma.vmem_to_smem %s21, 16, [#allocation2], [#allocation4]
    $region13: #{_lambda_.1} parent=1 // pred_fallthru
      _
    // Predicated region
    $region14: #{_lambda_.1} parent=1 // pred_check
      _
    $region15: #{_lambda_.1} parent=1 // pred_check_branch
      %25 = sbr.rel (0) target = $region17
    $region16: #{_lambda_.1} parent=1 // pred_region
      %26 = dma.done [#allocation4], 16
    $region17: #{_lambda_.1} parent=1 // pred_fallthru
      _
    %27 = sfence
    %v28 = vld [vmem:[%s1] sm:$0xff]
    %v29 = vld [vmem:[%s1 + $0x8] sm:$0xff]
    %v30 = vld [vmem:[%s1 + $0x10] sm:$0xff]
    %v31 = vld [vmem:[%s1 + $0x18] sm:$0xff]
    %v32 = vld [vmem:[%s1 + $0x20] sm:$0xff]
    %v33 = vld [vmem:[%s1 + $0x28] sm:$0xff]
    %v34 = vld [vmem:[%s1 + $0x30] sm:$0xff]
    %v35 = vld [vmem:[%s1 + $0x38] sm:$0xf]
    %v36 = vld [vmem:[%s1 + $0x40] sm:$0xff]
    %v37 = vld [vmem:[%s1 + $0x48] sm:$0xff]
    %v38 = vld [vmem:[%s1 + $0x50] sm:$0xff]
    %v39 = vld [vmem:[%s1 + $0x58] sm:$0x1]
    %v40 = vld [vmem:[%s1 + $0x59] sm:$0x1]
    %v41 = vld [vmem:[%s1 + $0x5a] sm:$0x1]
    %v42 = vld [vmem:[%s1 + $0x5b] sm:$0x1]
    %v43 = vld [vmem:[%s1 + $0x5c] sm:$0x1]
    %v44 = vld [vmem:[%s1 + $0x5d] sm:$0x1]
    %v45 = vld [vmem:[%s0] sm:$0xff]
    %v46 = vld [vmem:[%s0 + $0x8] sm:$0xff]
    %v47 = vld [vmem:[%s0 + $0x10] sm:$0xff]
    %v48 = vld [vmem:[%s0 + $0x18] sm:$0xff]
    %vm53 = vcmask 1045504
    %v54 = vrot.slane %v45, 2
    %v55 = vrot.slane %v46, 2
    %v56 = vsel %vm53, %v54, %v55
    %v57 = vrot.slane %v47, 2
    %v58 = vsel %vm53, %v55, %v57
    %v59 = vrot.slane %v48, 2
    %v60 = vsel %vm53, %v57, %v59
    %vm61 = vcmask 64512
    %v62 = vsel %vm61, %v56, 0
    %v64 = vsel %vm61, %v58, 0
    %v66 = vsel %vm61, %v60, 0
    %v68 = vsel %vm61, %v59, 0
    %70 = vmatprep.subr.mxu0 0.0
    %71 = vmatpush1.msra.mxu0 0.0
    %72 = vmatprep.subr.mxu0 0.0
    %73 = vmatpush1.msra.mxu0 0.0
    %74 = vmatprep.subr.mxu0 0.0
    %75 = vmatpush1.msra.mxu0 0.0
    %76 = vmatprep.subr.mxu0 0.0
    %77 = vmatpush1.msra.mxu0 0.0
    %78 = vmatprep.subr.mxu0 0.0
    %79 = vmatpush1.msra.mxu0 0.0
    %80 = vmatprep.subr.mxu0 0.0
    %81 = vmatpush1.msra.mxu0 0.0
    %82 = vmatprep.subr.mxu0 0.0
    %83 = vmatpush1.msra.mxu0 0.0
    %84 = vmatprep.subr.mxu0 0.0
    %85 = vmatpush1.msra.mxu0 0.0
    %86 = vmatprep.subr.mxu0 0.0
    %87 = vmatpush1.msra.mxu0 0.0
    %88 = vmatprep.subr.mxu0 0.0
    %89 = vmatpush1.msra.mxu0 0.0
    %90 = vmatprep.subr.mxu0 0.0
    %91 = vmatpush1.msra.mxu0 0.0
    %92 = vmatprep.subr.mxu0 0.0
    %93 = vmatpush1.msra.mxu0 0.0
    %94 = vmatprep.subr.mxu0 0.0
    %95 = vmatpush1.msra.mxu0 0.0
    %96 = vmatprep.subr.mxu0 0.0
    %97 = vmatpush1.msra.mxu0 0.0
    %98 = vmatprep.subr.mxu0 0.0
    %99 = vmatpush1.msra.mxu0 0.0
    %100 = vmatprep.subr.mxu0 0.0
    %101 = vmatpush1.msra.mxu0 %v29
    %102 = vmatprep.subr.mxu0 0.0
    %103 = vmatpush2.msra.mxu0 0.0
    %104 = vmatprep.subr.mxu0 0.0
    %105 = vmatpush2.msra.mxu0 0.0
    %106 = vmatprep.subr.mxu0 0.0
    %107 = vmatpush2.msra.mxu0 0.0
    %108 = vmatprep.subr.mxu0 0.0
    %109 = vmatpush2.msra.mxu0 0.0
    %110 = vmatprep.subr.mxu0 0.0
    %111 = vmatpush2.msra.mxu0 0.0
    %112 = vmatprep.subr.mxu0 0.0
    %113 = vmatpush2.msra.mxu0 0.0
    %114 = vmatprep.subr.mxu0 0.0
    %115 = vmatpush2.msra.mxu0 0.0
    %116 = vmatprep.subr.mxu0 0.0
    %117 = vmatpush2.msra.mxu0 0.0
    %118 = vmatprep.subr.mxu0 0.0
    %119 = vmatpush2.msra.mxu0 0.0
    %120 = vmatprep.subr.mxu0 0.0
    %121 = vmatpush2.msra.mxu0 0.0
    %122 = vmatprep.subr.mxu0 0.0
    %123 = vmatpush2.msra.mxu0 0.0
    %124 = vmatprep.subr.mxu0 0.0
    %125 = vmatpush2.msra.mxu0 0.0
    %126 = vmatprep.subr.mxu0 0.0
    %127 = vmatpush2.msra.mxu0 0.0
    %128 = vmatprep.subr.mxu0 0.0
    %129 = vmatpush2.msra.mxu0 0.0
    %130 = vmatprep.subr.mxu0 0.0
    %131 = vmatpush2.msra.mxu0 0.0
    %132 = vmatprep.subr.mxu0 0.0
    %133 = vmatpush2.msra.mxu0 0.0
    %134 = vmatprep.mubr.f32.mxu0 0.0
    %135 = vmatmul.mubr.f32.gmra.mxu0 %v62
    %v136 = vpop.f32.mrf.mxu0
    %v137 = vadd.f32 0.0, %v136
    %v138 = vpop.f32.mrf.mxu0
    %139 = vmatprep.mubr.f32.mxu0 0.0
    %140 = vmatmul.mubr.f32.gmra.mxu0 %v64
    %v141 = vpop.f32.mrf.mxu0
    %v142 = vadd.f32 0.0, %v141
    %v143 = vpop.f32.mrf.mxu0
    %144 = vmatprep.mubr.f32.mxu0 0.0
    %145 = vmatmul.mubr.f32.gmra.mxu0 %v66
    %v146 = vpop.f32.mrf.mxu0
    %v147 = vadd.f32 0.0, %v146
    %v148 = vpop.f32.mrf.mxu0
    %149 = vmatprep.mubr.f32.mxu0 0.0
    %150 = vmatmul.mubr.f32.gmra.mxu0 %v68
    %v151 = vpop.f32.mrf.mxu0
    %v152 = vadd.f32 0.0, %v151
    %v153 = vpop.f32.mrf.mxu0
    %154 = vdwg.mxu0
    %v155 = vsel %vm61, %v45, 0
    %v157 = vsel %vm61, %v46, 0
    %v159 = vsel %vm61, %v47, 0
    %v161 = vsel %vm61, %v48, 0
    %163 = vmatprep.subr.mxu0 0.0
    %164 = vmatpush1.msra.mxu0 0.0
    %165 = vmatprep.subr.mxu0 0.0
    %166 = vmatpush1.msra.mxu0 0.0
    %167 = vmatprep.subr.mxu0 0.0
    %168 = vmatpush1.msra.mxu0 0.0
    %169 = vmatprep.subr.mxu0 0.0
    %170 = vmatpush1.msra.mxu0 0.0
    %171 = vmatprep.subr.mxu0 0.0
    %172 = vmatpush1.msra.mxu0 0.0
    %173 = vmatprep.subr.mxu0 0.0
    %174 = vmatpush1.msra.mxu0 0.0
    %175 = vmatprep.subr.mxu0 0.0
    %176 = vmatpush1.msra.mxu0 0.0
    %177 = vmatprep.subr.mxu0 0.0
    %178 = vmatpush1.msra.mxu0 0.0
    %179 = vmatprep.subr.mxu0 0.0
    %180 = vmatpush1.msra.mxu0 0.0
    %181 = vmatprep.subr.mxu0 0.0
    %182 = vmatpush1.msra.mxu0 0.0
    %183 = vmatprep.subr.mxu0 0.0
    %184 = vmatpush1.msra.mxu0 0.0
    %185 = vmatprep.subr.mxu0 0.0
    %186 = vmatpush1.msra.mxu0 0.0
    %187 = vmatprep.subr.mxu0 0.0
    %188 = vmatpush1.msra.mxu0 0.0
    %189 = vmatprep.subr.mxu0 0.0
    %190 = vmatpush1.msra.mxu0 0.0
    %191 = vmatprep.subr.mxu0 0.0
    %192 = vmatpush1.msra.mxu0 0.0
    %193 = vmatprep.subr.mxu0 0.0
    %194 = vmatpush1.msra.mxu0 %v28
    %195 = vmatprep.subr.mxu0 0.0
    %196 = vmatpush2.msra.mxu0 0.0
    %197 = vmatprep.subr.mxu0 0.0
    %198 = vmatpush2.msra.mxu0 0.0
    %199 = vmatprep.subr.mxu0 0.0
    %200 = vmatpush2.msra.mxu0 0.0
    %201 = vmatprep.subr.mxu0 0.0
    %202 = vmatpush2.msra.mxu0 0.0
    %203 = vmatprep.subr.mxu0 0.0
    %204 = vmatpush2.msra.mxu0 0.0
    %205 = vmatprep.subr.mxu0 0.0
    %206 = vmatpush2.msra.mxu0 0.0
    %207 = vmatprep.subr.mxu0 0.0
    %208 = vmatpush2.msra.mxu0 0.0
    %209 = vmatprep.subr.mxu0 0.0
    %210 = vmatpush2.msra.mxu0 0.0
    %211 = vmatprep.subr.mxu0 0.0
    %212 = vmatpush2.msra.mxu0 0.0
    %213 = vmatprep.subr.mxu0 0.0
    %214 = vmatpush2.msra.mxu0 0.0
    %215 = vmatprep.subr.mxu0 0.0
    %216 = vmatpush2.msra.mxu0 0.0
    %217 = vmatprep.subr.mxu0 0.0
    %218 = vmatpush2.msra.mxu0 0.0
    %219 = vmatprep.subr.mxu0 0.0
    %220 = vmatpush2.msra.mxu0 0.0
    %221 = vmatprep.subr.mxu0 0.0
    %222 = vmatpush2.msra.mxu0 0.0
    %223 = vmatprep.subr.mxu0 0.0
    %224 = vmatpush2.msra.mxu0 0.0
    %225 = vmatprep.subr.mxu0 0.0
    %226 = vmatpush2.msra.mxu0 0.0
    %227 = vmatprep.mubr.f32.mxu0 0.0
    %228 = vmatmul.mubr.f32.gmra.mxu0 %v155
    %v229 = vpop.f32.mrf.mxu0
    %v230 = vadd.f32 %v137, %v229
    %v231 = vpop.f32.mrf.mxu0
    %232 = vmatprep.mubr.f32.mxu0 0.0
    %233 = vmatmul.mubr.f32.gmra.mxu0 %v157
    %v234 = vpop.f32.mrf.mxu0
    %v235 = vadd.f32 %v142, %v234
    %v236 = vpop.f32.mrf.mxu0
    %237 = vmatprep.mubr.f32.mxu0 0.0
    %238 = vmatmul.mubr.f32.gmra.mxu0 %v159
    %v239 = vpop.f32.mrf.mxu0
    %v240 = vadd.f32 %v147, %v239
    %v241 = vpop.f32.mrf.mxu0
    %242 = vmatprep.mubr.f32.mxu0 0.0
    %243 = vmatmul.mubr.f32.gmra.mxu0 %v161
    %v244 = vpop.f32.mrf.mxu0
    %v245 = vadd.f32 %v152, %v244
    %v246 = vpop.f32.mrf.mxu0
    %247 = vdwg.mxu0
    %vm248 = vcmask 1043456
    %v249 = vrot.slane %v45, 4
    %v250 = vrot.slane %v46, 4
    %v251 = vsel %vm248, %v249, %v250
    %v252 = vrot.slane %v47, 4
    %v253 = vsel %vm248, %v250, %v252
    %v254 = vrot.slane %v48, 4
    %v255 = vsel %vm248, %v252, %v254
    %v256 = vsel %vm61, %v251, 0
    %v258 = vsel %vm61, %v253, 0
    %v260 = vsel %vm61, %v255, 0
    %v262 = vsel %vm61, %v254, 0
    %264 = vmatprep.subr.mxu0 0.0
    %265 = vmatpush1.msra.mxu0 0.0
    %266 = vmatprep.subr.mxu0 0.0
    %267 = vmatpush1.msra.mxu0 0.0
    %268 = vmatprep.subr.mxu0 0.0
    %269 = vmatpush1.msra.mxu0 0.0
    %270 = vmatprep.subr.mxu0 0.0
    %271 = vmatpush1.msra.mxu0 0.0
    %272 = vmatprep.subr.mxu0 0.0
    %273 = vmatpush1.msra.mxu0 0.0
    %274 = vmatprep.subr.mxu0 0.0
    %275 = vmatpush1.msra.mxu0 0.0
    %276 = vmatprep.subr.mxu0 0.0
    %277 = vmatpush1.msra.mxu0 0.0
    %278 = vmatprep.subr.mxu0 0.0
    %279 = vmatpush1.msra.mxu0 0.0
    %280 = vmatprep.subr.mxu0 0.0
    %281 = vmatpush1.msra.mxu0 0.0
    %282 = vmatprep.subr.mxu0 0.0
    %283 = vmatpush1.msra.mxu0 0.0
    %284 = vmatprep.subr.mxu0 0.0
    %285 = vmatpush1.msra.mxu0 0.0
    %286 = vmatprep.subr.mxu0 0.0
    %287 = vmatpush1.msra.mxu0 0.0
    %288 = vmatprep.subr.mxu0 0.0
    %289 = vmatpush1.msra.mxu0 0.0
    %290 = vmatprep.subr.mxu0 0.0
    %291 = vmatpush1.msra.mxu0 0.0
    %292 = vmatprep.subr.mxu0 0.0
    %293 = vmatpush1.msra.mxu0 0.0
    %294 = vmatprep.subr.mxu0 0.0
    %295 = vmatpush1.msra.mxu0 %v30
    %296 = vmatprep.subr.mxu0 0.0
    %297 = vmatpush2.msra.mxu0 0.0
    %298 = vmatprep.subr.mxu0 0.0
    %299 = vmatpush2.msra.mxu0 0.0
    %300 = vmatprep.subr.mxu0 0.0
    %301 = vmatpush2.msra.mxu0 0.0
    %302 = vmatprep.subr.mxu0 0.0
    %303 = vmatpush2.msra.mxu0 0.0
    %304 = vmatprep.subr.mxu0 0.0
    %305 = vmatpush2.msra.mxu0 0.0
    %306 = vmatprep.subr.mxu0 0.0
    %307 = vmatpush2.msra.mxu0 0.0
    %308 = vmatprep.subr.mxu0 0.0
    %309 = vmatpush2.msra.mxu0 0.0
    %310 = vmatprep.subr.mxu0 0.0
    %311 = vmatpush2.msra.mxu0 0.0
    %312 = vmatprep.subr.mxu0 0.0
    %313 = vmatpush2.msra.mxu0 0.0
    %314 = vmatprep.subr.mxu0 0.0
    %315 = vmatpush2.msra.mxu0 0.0
    %316 = vmatprep.subr.mxu0 0.0
    %317 = vmatpush2.msra.mxu0 0.0
    %318 = vmatprep.subr.mxu0 0.0
    %319 = vmatpush2.msra.mxu0 0.0
    %320 = vmatprep.subr.mxu0 0.0
    %321 = vmatpush2.msra.mxu0 0.0
    %322 = vmatprep.subr.mxu0 0.0
    %323 = vmatpush2.msra.mxu0 0.0
    %324 = vmatprep.subr.mxu0 0.0
    %325 = vmatpush2.msra.mxu0 0.0
    %326 = vmatprep.subr.mxu0 0.0
    %327 = vmatpush2.msra.mxu0 0.0
    %328 = vmatprep.mubr.f32.mxu0 0.0
    %329 = vmatmul.mubr.f32.gmra.mxu0 %v256
    %v330 = vpop.f32.mrf.mxu0
    %v331 = vadd.f32 0.0, %v330
    %v332 = vpop.f32.mrf.mxu0
    %333 = vmatprep.mubr.f32.mxu0 0.0
    %334 = vmatmul.mubr.f32.gmra.mxu0 %v258
    %v335 = vpop.f32.mrf.mxu0
    %v336 = vadd.f32 0.0, %v335
    %v337 = vpop.f32.mrf.mxu0
    %338 = vmatprep.mubr.f32.mxu0 0.0
    %339 = vmatmul.mubr.f32.gmra.mxu0 %v260
    %v340 = vpop.f32.mrf.mxu0
    %v341 = vadd.f32 0.0, %v340
    %v342 = vpop.f32.mrf.mxu0
    %343 = vmatprep.mubr.f32.mxu0 0.0
    %344 = vmatmul.mubr.f32.gmra.mxu0 %v262
    %v345 = vpop.f32.mrf.mxu0
    %v346 = vadd.f32 0.0, %v345
    %v347 = vpop.f32.mrf.mxu0
    %348 = vdwg.mxu0
    %v349 = vadd.f32 %v230, %v331
    %v350 = vadd.f32 %v235, %v336
    %v351 = vadd.f32 %v240, %v341
    %v352 = vadd.f32 %v245, %v346
    %v353 = vlaneseq
    %v354 = vshrl.u32 %v353, 7
    %v355 = vsub.s32 0, %v354
    %v356 = vrot.slane %v39, %v355
    %v357 = vadd.f32 %v349, %v356
    %v358 = vadd.f32 %v350, %v356
    %v359 = vadd.f32 %v351, %v356
    %v360 = vadd.f32 %v352, %v356
    %v361 = vmax.f32 %v357, 0.0
    %v362 = vmax.f32 %v358, 0.0
    %v363 = vmax.f32 %v359, 0.0
    %v364 = vmax.f32 %v360, 0.0
    %v365 = vlaneseq
    %v366 = vshrl.u32 %v365, 7
    %v367 = vsub.s32 0, %v366
    %v368 = vrot.slane %v40, %v367
    %v370 = vsel %vm61, %v361, 0
    %v373 = vsel %vm61, %v362, 0
    %v376 = vsel %vm61, %v363, 0
    %v379 = vsel %vm61, %v364, 0
    %381 = vmatprep.subr.mxu0 0.0
    %382 = vmatpush1.msra.mxu0 0.0
    %383 = vmatprep.subr.mxu0 0.0
    %384 = vmatpush1.msra.mxu0 0.0
    %385 = vmatprep.subr.mxu0 0.0
    %386 = vmatpush1.msra.mxu0 0.0
    %387 = vmatprep.subr.mxu0 0.0
    %388 = vmatpush1.msra.mxu0 0.0
    %389 = vmatprep.subr.mxu0 0.0
    %390 = vmatpush1.msra.mxu0 0.0
    %391 = vmatprep.subr.mxu0 0.0
    %392 = vmatpush1.msra.mxu0 0.0
    %393 = vmatprep.subr.mxu0 0.0
    %394 = vmatpush1.msra.mxu0 0.0
    %395 = vmatprep.subr.mxu0 0.0
    %396 = vmatpush1.msra.mxu0 0.0
    %397 = vmatprep.subr.mxu0 0.0
    %398 = vmatpush1.msra.mxu0 0.0
    %399 = vmatprep.subr.mxu0 0.0
    %400 = vmatpush1.msra.mxu0 0.0
    %401 = vmatprep.subr.mxu0 0.0
    %402 = vmatpush1.msra.mxu0 0.0
    %403 = vmatprep.subr.mxu0 0.0
    %404 = vmatpush1.msra.mxu0 0.0
    %405 = vmatprep.subr.mxu0 0.0
    %406 = vmatpush1.msra.mxu0 0.0
    %407 = vmatprep.subr.mxu0 0.0
    %408 = vmatpush1.msra.mxu0 0.0
    %409 = vmatprep.subr.mxu0 0.0
    %410 = vmatpush1.msra.mxu0 0.0
    %411 = vmatprep.subr.mxu0 0.0
    %412 = vmatpush1.msra.mxu0 %v31
    %413 = vmatprep.subr.mxu0 0.0
    %414 = vmatpush2.msra.mxu0 0.0
    %415 = vmatprep.subr.mxu0 0.0
    %416 = vmatpush2.msra.mxu0 0.0
    %417 = vmatprep.subr.mxu0 0.0
    %418 = vmatpush2.msra.mxu0 0.0
    %419 = vmatprep.subr.mxu0 0.0
    %420 = vmatpush2.msra.mxu0 0.0
    %421 = vmatprep.subr.mxu0 0.0
    %422 = vmatpush2.msra.mxu0 0.0
    %423 = vmatprep.subr.mxu0 0.0
    %424 = vmatpush2.msra.mxu0 0.0
    %425 = vmatprep.subr.mxu0 0.0
    %426 = vmatpush2.msra.mxu0 0.0
    %427 = vmatprep.subr.mxu0 0.0
    %428 = vmatpush2.msra.mxu0 0.0
    %429 = vmatprep.subr.mxu0 0.0
    %430 = vmatpush2.msra.mxu0 0.0
    %431 = vmatprep.subr.mxu0 0.0
    %432 = vmatpush2.msra.mxu0 0.0
    %433 = vmatprep.subr.mxu0 0.0
    %434 = vmatpush2.msra.mxu0 0.0
    %435 = vmatprep.subr.mxu0 0.0
    %436 = vmatpush2.msra.mxu0 0.0
    %437 = vmatprep.subr.mxu0 0.0
    %438 = vmatpush2.msra.mxu0 0.0
    %439 = vmatprep.subr.mxu0 0.0
    %440 = vmatpush2.msra.mxu0 0.0
    %441 = vmatprep.subr.mxu0 0.0
    %442 = vmatpush2.msra.mxu0 0.0
    %443 = vmatprep.subr.mxu0 0.0
    %444 = vmatpush2.msra.mxu0 0.0
    %445 = vmatprep.mubr.f32.mxu0 0.0
    %446 = vmatmul.mubr.f32.gmra.mxu0 %v370
    %v447 = vpop.f32.mrf.mxu0
    %v448 = vadd.f32 %v368, %v447
    %v449 = vpop.f32.mrf.mxu0
    %450 = vmatprep.mubr.f32.mxu0 0.0
    %451 = vmatmul.mubr.f32.gmra.mxu0 %v373
    %v452 = vpop.f32.mrf.mxu0
    %v453 = vadd.f32 %v368, %v452
    %v454 = vpop.f32.mrf.mxu0
    %455 = vmatprep.mubr.f32.mxu0 0.0
    %456 = vmatmul.mubr.f32.gmra.mxu0 %v376
    %v457 = vpop.f32.mrf.mxu0
    %v458 = vadd.f32 %v368, %v457
    %v459 = vpop.f32.mrf.mxu0
    %460 = vmatprep.mubr.f32.mxu0 0.0
    %461 = vmatmul.mubr.f32.gmra.mxu0 %v379
    %v462 = vpop.f32.mrf.mxu0
    %v463 = vadd.f32 %v368, %v462
    %v464 = vpop.f32.mrf.mxu0
    %465 = vdwg.mxu0
    %v466 = vlaneseq
    %v467 = vshrl.u32 %v466, 7
    %v468 = vsub.s32 0, %v467
    %v469 = vrot.slane %v42, %v468
    %v470 = vrot.slane %v361, 4
    %v471 = vrot.slane %v362, 4
    %v472 = vsel %vm248, %v470, %v471
    %v473 = vrot.slane %v363, 4
    %v474 = vsel %vm248, %v471, %v473
    %v475 = vrot.slane %v364, 4
    %v476 = vsel %vm248, %v473, %v475
    %v477 = vsel %vm61, %v472, 0
    %v479 = vsel %vm61, %v474, 0
    %v481 = vsel %vm61, %v476, 0
    %483 = vmatprep.subr.mxu0 0.0
    %484 = vmatpush1.msra.mxu0 0.0
    %485 = vmatprep.subr.mxu0 0.0
    %486 = vmatpush1.msra.mxu0 0.0
    %487 = vmatprep.subr.mxu0 0.0
    %488 = vmatpush1.msra.mxu0 0.0
    %489 = vmatprep.subr.mxu0 0.0
    %490 = vmatpush1.msra.mxu0 0.0
    %491 = vmatprep.subr.mxu0 0.0
    %492 = vmatpush1.msra.mxu0 0.0
    %493 = vmatprep.subr.mxu0 0.0
    %494 = vmatpush1.msra.mxu0 0.0
    %495 = vmatprep.subr.mxu0 0.0
    %496 = vmatpush1.msra.mxu0 0.0
    %497 = vmatprep.subr.mxu0 0.0
    %498 = vmatpush1.msra.mxu0 0.0
    %499 = vmatprep.subr.mxu0 0.0
    %500 = vmatpush1.msra.mxu0 0.0
    %501 = vmatprep.subr.mxu0 0.0
    %502 = vmatpush1.msra.mxu0 0.0
    %503 = vmatprep.subr.mxu0 0.0
    %504 = vmatpush1.msra.mxu0 0.0
    %505 = vmatprep.subr.mxu0 0.0
    %506 = vmatpush1.msra.mxu0 0.0
    %507 = vmatprep.subr.mxu0 0.0
    %508 = vmatpush1.msra.mxu0 0.0
    %509 = vmatprep.subr.mxu0 0.0
    %510 = vmatpush1.msra.mxu0 0.0
    %511 = vmatprep.subr.mxu0 0.0
    %512 = vmatpush1.msra.mxu0 0.0
    %513 = vmatprep.subr.mxu0 0.0
    %514 = vmatpush1.msra.mxu0 %v34
    %515 = vmatprep.subr.mxu0 0.0
    %516 = vmatpush2.msra.mxu0 0.0
    %517 = vmatprep.subr.mxu0 0.0
    %518 = vmatpush2.msra.mxu0 0.0
    %519 = vmatprep.subr.mxu0 0.0
    %520 = vmatpush2.msra.mxu0 0.0
    %521 = vmatprep.subr.mxu0 0.0
    %522 = vmatpush2.msra.mxu0 0.0
    %523 = vmatprep.subr.mxu0 0.0
    %524 = vmatpush2.msra.mxu0 0.0
    %525 = vmatprep.subr.mxu0 0.0
    %526 = vmatpush2.msra.mxu0 0.0
    %527 = vmatprep.subr.mxu0 0.0
    %528 = vmatpush2.msra.mxu0 0.0
    %529 = vmatprep.subr.mxu0 0.0
    %530 = vmatpush2.msra.mxu0 0.0
    %531 = vmatprep.subr.mxu0 0.0
    %532 = vmatpush2.msra.mxu0 0.0
    %533 = vmatprep.subr.mxu0 0.0
    %534 = vmatpush2.msra.mxu0 0.0
    %535 = vmatprep.subr.mxu0 0.0
    %536 = vmatpush2.msra.mxu0 0.0
    %537 = vmatprep.subr.mxu0 0.0
    %538 = vmatpush2.msra.mxu0 0.0
    %539 = vmatprep.subr.mxu0 0.0
    %540 = vmatpush2.msra.mxu0 0.0
    %541 = vmatprep.subr.mxu0 0.0
    %542 = vmatpush2.msra.mxu0 0.0
    %543 = vmatprep.subr.mxu0 0.0
    %544 = vmatpush2.msra.mxu0 0.0
    %545 = vmatprep.subr.mxu0 0.0
    %546 = vmatpush2.msra.mxu0 0.0
    %547 = vmatprep.mubr.f32.mxu0 0.0
    %548 = vmatmul.mubr.f32.gmra.mxu0 %v477
    %v549 = vpop.f32.mrf.mxu0
    %v550 = vadd.f32 %v469, %v549
    %v551 = vpop.f32.mrf.mxu0
    %552 = vmatprep.mubr.f32.mxu0 0.0
    %553 = vmatmul.mubr.f32.gmra.mxu0 %v479
    %v554 = vpop.f32.mrf.mxu0
    %v555 = vadd.f32 %v469, %v554
    %v556 = vpop.f32.mrf.mxu0
    %557 = vmatprep.mubr.f32.mxu0 0.0
    %558 = vmatmul.mubr.f32.gmra.mxu0 %v481
    %v559 = vpop.f32.mrf.mxu0
    %v560 = vadd.f32 %v469, %v559
    %v561 = vpop.f32.mrf.mxu0
    %562 = vdwg.mxu0
    %vm563 = vcmask 130048
    %v565 = vsel %vm563, 0.0, 0
    %567 = vmatprep.subr.mxu0 0.0
    %568 = vmatpush1.msra.mxu0 0.0
    %569 = vmatprep.subr.mxu0 0.0
    %570 = vmatpush1.msra.mxu0 0.0
    %571 = vmatprep.subr.mxu0 0.0
    %572 = vmatpush1.msra.mxu0 0.0
    %573 = vmatprep.subr.mxu0 0.0
    %574 = vmatpush1.msra.mxu0 0.0
    %575 = vmatprep.subr.mxu0 0.0
    %576 = vmatpush1.msra.mxu0 0.0
    %577 = vmatprep.subr.mxu0 0.0
    %578 = vmatpush1.msra.mxu0 0.0
    %579 = vmatprep.subr.mxu0 0.0
    %580 = vmatpush1.msra.mxu0 0.0
    %581 = vmatprep.subr.mxu0 0.0
    %582 = vmatpush1.msra.mxu0 0.0
    %583 = vmatprep.subr.mxu0 0.0
    %584 = vmatpush1.msra.mxu0 0.0
    %585 = vmatprep.subr.mxu0 0.0
    %586 = vmatpush1.msra.mxu0 0.0
    %587 = vmatprep.subr.mxu0 0.0
    %588 = vmatpush1.msra.mxu0 0.0
    %589 = vmatprep.subr.mxu0 0.0
    %590 = vmatpush1.msra.mxu0 0.0
    %591 = vmatprep.subr.mxu0 0.0
    %592 = vmatpush1.msra.mxu0 0.0
    %593 = vmatprep.subr.mxu0 0.0
    %594 = vmatpush1.msra.mxu0 0.0
    %595 = vmatprep.subr.mxu0 0.0
    %596 = vmatpush1.msra.mxu0 %v33
    %597 = vmatprep.subr.mxu0 0.0
    %598 = vmatpush1.msra.mxu0 %v32
    %599 = vmatprep.subr.mxu0 0.0
    %600 = vmatpush2.msra.mxu0 0.0
    %601 = vmatprep.subr.mxu0 0.0
    %602 = vmatpush2.msra.mxu0 0.0
    %603 = vmatprep.subr.mxu0 0.0
    %604 = vmatpush2.msra.mxu0 0.0
    %605 = vmatprep.subr.mxu0 0.0
    %606 = vmatpush2.msra.mxu0 0.0
    %607 = vmatprep.subr.mxu0 0.0
    %608 = vmatpush2.msra.mxu0 0.0
    %609 = vmatprep.subr.mxu0 0.0
    %610 = vmatpush2.msra.mxu0 0.0
    %611 = vmatprep.subr.mxu0 0.0
    %612 = vmatpush2.msra.mxu0 0.0
    %613 = vmatprep.subr.mxu0 0.0
    %614 = vmatpush2.msra.mxu0 0.0
    %615 = vmatprep.subr.mxu0 0.0
    %616 = vmatpush2.msra.mxu0 0.0
    %617 = vmatprep.subr.mxu0 0.0
    %618 = vmatpush2.msra.mxu0 0.0
    %619 = vmatprep.subr.mxu0 0.0
    %620 = vmatpush2.msra.mxu0 0.0
    %621 = vmatprep.subr.mxu0 0.0
    %622 = vmatpush2.msra.mxu0 0.0
    %623 = vmatprep.subr.mxu0 0.0
    %624 = vmatpush2.msra.mxu0 0.0
    %625 = vmatprep.subr.mxu0 0.0
    %626 = vmatpush2.msra.mxu0 0.0
    %627 = vmatprep.subr.mxu0 0.0
    %628 = vmatpush2.msra.mxu0 0.0
    %629 = vmatprep.subr.mxu0 0.0
    %630 = vmatpush2.msra.mxu0 0.0
    %631 = vmatprep.mubr.f32.mxu0 0.0
    %632 = vmatmul.mubr.f32.gmra.mxu0 %v565
    %v633 = vpop.f32.mrf.mxu0
    %v634 = vadd.f32 0.0, %v633
    %v635 = vpop.f32.mrf.mxu0
    %636 = vdwg.mxu0
    %v637 = vadd.f32 %v448, %v634
    %v638 = vxor.u32 %v637, 2147483648
    %v639 = vmul.f32 %v638, 1.442695
    %v640 = vpow.pop %v639
    %v641 = vadd.f32 %v640, 1.0
    %v642 = vrcp.pop %v641
    %v643 = vmul.f32 1.0, %v642
    %v644 = vlaneseq
    %v645 = vshrl.u32 %v644, 7
    %v646 = vsub.s32 0, %v645
    %v647 = vrot.slane %v41, %v646
    %649 = vrot.lane.b32.xlu0 %v647, 32
    %v650 = vpop.permute.xlu0 %649
    %v652 = vadd.f32 %v634, %v650
    %654 = vrot.lane.b32.xlu0 %v652, 96
    %v655 = vpop.permute.xlu0 %654
    %v657 = vmul.f32 %v643, %v655
    %659 = vrot.lane.b32.xlu0 %v657, 32
    %v660 = vpop.permute.xlu0 %659
    %v662 = vadd.f32 %v448, %v660
    %v663 = vtanh.pop %v662
    %v664 = vsub.f32 1.0, %v643
    %666 = vrot.lane.b32.xlu0 %v663, 112
    %v667 = vpop.permute.xlu0 %666
    %v669 = vmul.f32 %v664, %v667
    %v670 = vmul.f32 %v643, 0.0
    %v671 = vadd.f32 %v669, %v670
    %673 = vrot.lane.b32.xlu0 %v671, 112
    %v674 = vpop.permute.xlu0 %673
    %v675 = vsel %vm563, %v674, 0
    %677 = vmatprep.subr.mxu0 0.0
    %678 = vmatpush1.msra.mxu0 0.0
    %679 = vmatprep.subr.mxu0 0.0
    %680 = vmatpush1.msra.mxu0 0.0
    %681 = vmatprep.subr.mxu0 0.0
    %682 = vmatpush1.msra.mxu0 0.0
    %683 = vmatprep.subr.mxu0 0.0
    %684 = vmatpush1.msra.mxu0 0.0
    %685 = vmatprep.subr.mxu0 0.0
    %686 = vmatpush1.msra.mxu0 0.0
    %687 = vmatprep.subr.mxu0 0.0
    %688 = vmatpush1.msra.mxu0 0.0
    %689 = vmatprep.subr.mxu0 0.0
    %690 = vmatpush1.msra.mxu0 0.0
    %691 = vmatprep.subr.mxu0 0.0
    %692 = vmatpush1.msra.mxu0 0.0
    %693 = vmatprep.subr.mxu0 0.0
    %694 = vmatpush1.msra.mxu0 0.0
    %695 = vmatprep.subr.mxu0 0.0
    %696 = vmatpush1.msra.mxu0 0.0
    %697 = vmatprep.subr.mxu0 0.0
    %698 = vmatpush1.msra.mxu0 0.0
    %699 = vmatprep.subr.mxu0 0.0
    %700 = vmatpush1.msra.mxu0 0.0
    %701 = vmatprep.subr.mxu0 0.0
    %702 = vmatpush1.msra.mxu0 0.0
    %703 = vmatprep.subr.mxu0 0.0
    %704 = vmatpush1.msra.mxu0 0.0
    %705 = vmatprep.subr.mxu0 0.0
    %706 = vmatpush1.msra.mxu0 %v33
    %707 = vmatprep.subr.mxu0 0.0
    %708 = vmatpush1.msra.mxu0 %v32
    %709 = vmatprep.subr.mxu0 0.0
    %710 = vmatpush2.msra.mxu0 0.0
    %711 = vmatprep.subr.mxu0 0.0
    %712 = vmatpush2.msra.mxu0 0.0
    %713 = vmatprep.subr.mxu0 0.0
    %714 = vmatpush2.msra.mxu0 0.0
    %715 = vmatprep.subr.mxu0 0.0
    %716 = vmatpush2.msra.mxu0 0.0
    %717 = vmatprep.subr.mxu0 0.0
    %718 = vmatpush2.msra.mxu0 0.0
    %719 = vmatprep.subr.mxu0 0.0
    %720 = vmatpush2.msra.mxu0 0.0
    %721 = vmatprep.subr.mxu0 0.0
    %722 = vmatpush2.msra.mxu0 0.0
    %723 = vmatprep.subr.mxu0 0.0
    %724 = vmatpush2.msra.mxu0 0.0
    %725 = vmatprep.subr.mxu0 0.0
    %726 = vmatpush2.msra.mxu0 0.0
    %727 = vmatprep.subr.mxu0 0.0
    %728 = vmatpush2.msra.mxu0 0.0
    %729 = vmatprep.subr.mxu0 0.0
    %730 = vmatpush2.msra.mxu0 0.0
    %731 = vmatprep.subr.mxu0 0.0
    %732 = vmatpush2.msra.mxu0 0.0
    %733 = vmatprep.subr.mxu0 0.0
    %734 = vmatpush2.msra.mxu0 0.0
    %735 = vmatprep.subr.mxu0 0.0
    %736 = vmatpush2.msra.mxu0 0.0
    %737 = vmatprep.subr.mxu0 0.0
    %738 = vmatpush2.msra.mxu0 0.0
    %739 = vmatprep.subr.mxu0 0.0
    %740 = vmatpush2.msra.mxu0 0.0
    %741 = vmatprep.mubr.f32.mxu0 0.0
    %742 = vmatmul.mubr.f32.gmra.mxu0 %v675
    %v743 = vpop.f32.mrf.mxu0
    %v744 = vadd.f32 0.0, %v743
    %v745 = vpop.f32.mrf.mxu0
    %746 = vdwg.mxu0
    %v748 = vrot.slane %v744, 6
    %v750 = vadd.f32 %v448, %v748
    %v751 = vxor.u32 %v750, 2147483648
    %v752 = vmul.f32 %v751, 1.442695
    %v753 = vpow.pop %v752
    %v754 = vadd.f32 %v753, 1.0
    %v755 = vrcp.pop %v754
    %v756 = vmul.f32 1.0, %v755
    %v757 = vadd.f32 %v744, %v650
    %v759 = vrot.slane %v757, 6
    %760 = vrot.lane.b32.xlu0 %v759, 96
    %v761 = vpop.permute.xlu0 %760
    %v763 = vmul.f32 %v756, %v761
    %765 = vrot.lane.b32.xlu0 %v763, 32
    %v766 = vpop.permute.xlu0 %765
    %v768 = vadd.f32 %v448, %v766
    %v769 = vtanh.pop %v768
    %v770 = vsub.f32 1.0, %v756
    %772 = vrot.lane.b32.xlu0 %v769, 112
    %v773 = vpop.permute.xlu0 %772
    %v775 = vmul.f32 %v770, %v773
    %v776 = vrot.slane %v671, 6
    %v778 = vmul.f32 %v756, %v776
    %v779 = vadd.f32 %v775, %v778
    %v781 = vrot.slane %v779, 2
    %782 = vrot.lane.b32.xlu0 %v781, 112
    %v783 = vpop.permute.xlu0 %782
    %v784 = vsel %vm563, %v783, 0
    %786 = vmatprep.subr.mxu0 0.0
    %787 = vmatpush1.msra.mxu0 0.0
    %788 = vmatprep.subr.mxu0 0.0
    %789 = vmatpush1.msra.mxu0 0.0
    %790 = vmatprep.subr.mxu0 0.0
    %791 = vmatpush1.msra.mxu0 0.0
    %792 = vmatprep.subr.mxu0 0.0
    %793 = vmatpush1.msra.mxu0 0.0
    %794 = vmatprep.subr.mxu0 0.0
    %795 = vmatpush1.msra.mxu0 0.0
    %796 = vmatprep.subr.mxu0 0.0
    %797 = vmatpush1.msra.mxu0 0.0
    %798 = vmatprep.subr.mxu0 0.0
    %799 = vmatpush1.msra.mxu0 0.0
    %800 = vmatprep.subr.mxu0 0.0
    %801 = vmatpush1.msra.mxu0 0.0
    %802 = vmatprep.subr.mxu0 0.0
    %803 = vmatpush1.msra.mxu0 0.0
    %804 = vmatprep.subr.mxu0 0.0
    %805 = vmatpush1.msra.mxu0 0.0
    %806 = vmatprep.subr.mxu0 0.0
    %807 = vmatpush1.msra.mxu0 0.0
    %808 = vmatprep.subr.mxu0 0.0
    %809 = vmatpush1.msra.mxu0 0.0
    %810 = vmatprep.subr.mxu0 0.0
    %811 = vmatpush1.msra.mxu0 0.0
    %812 = vmatprep.subr.mxu0 0.0
    %813 = vmatpush1.msra.mxu0 0.0
    %814 = vmatprep.subr.mxu0 0.0
    %815 = vmatpush1.msra.mxu0 %v33
    %816 = vmatprep.subr.mxu0 0.0
    %817 = vmatpush1.msra.mxu0 %v32
    %818 = vmatprep.subr.mxu0 0.0
    %819 = vmatpush2.msra.mxu0 0.0
    %820 = vmatprep.subr.mxu0 0.0
    %821 = vmatpush2.msra.mxu0 0.0
    %822 = vmatprep.subr.mxu0 0.0
    %823 = vmatpush2.msra.mxu0 0.0
    %824 = vmatprep.subr.mxu0 0.0
    %825 = vmatpush2.msra.mxu0 0.0
    %826 = vmatprep.subr.mxu0 0.0
    %827 = vmatpush2.msra.mxu0 0.0
    %828 = vmatprep.subr.mxu0 0.0
    %829 = vmatpush2.msra.mxu0 0.0
    %830 = vmatprep.subr.mxu0 0.0
    %831 = vmatpush2.msra.mxu0 0.0
    %832 = vmatprep.subr.mxu0 0.0
    %833 = vmatpush2.msra.mxu0 0.0
    %834 = vmatprep.subr.mxu0 0.0
    %835 = vmatpush2.msra.mxu0 0.0
    %836 = vmatprep.subr.mxu0 0.0
    %837 = vmatpush2.msra.mxu0 0.0
    %838 = vmatprep.subr.mxu0 0.0
    %839 = vmatpush2.msra.mxu0 0.0
    %840 = vmatprep.subr.mxu0 0.0
    %841 = vmatpush2.msra.mxu0 0.0
    %842 = vmatprep.subr.mxu0 0.0
    %843 = vmatpush2.msra.mxu0 0.0
    %844 = vmatprep.subr.mxu0 0.0
    %845 = vmatpush2.msra.mxu0 0.0
    %846 = vmatprep.subr.mxu0 0.0
    %847 = vmatpush2.msra.mxu0 0.0
    %848 = vmatprep.subr.mxu0 0.0
    %849 = vmatpush2.msra.mxu0 0.0
    %850 = vmatprep.mubr.f32.mxu0 0.0
    %851 = vmatmul.mubr.f32.gmra.mxu0 %v784
    %v852 = vpop.f32.mrf.mxu0
    %v853 = vadd.f32 0.0, %v852
    %v854 = vpop.f32.mrf.mxu0
    %855 = vdwg.mxu0
    %v857 = vrot.slane %v853, 4
    %v859 = vadd.f32 %v448, %v857
    %v860 = vxor.u32 %v859, 2147483648
    %v861 = vmul.f32 %v860, 1.442695
    %v862 = vpow.pop %v861
    %v863 = vadd.f32 %v862, 1.0
    %v864 = vrcp.pop %v863
    %v865 = vmul.f32 1.0, %v864
    %v866 = vadd.f32 %v853, %v650
    %v868 = vrot.slane %v866, 4
    %869 = vrot.lane.b32.xlu0 %v868, 96
    %v870 = vpop.permute.xlu0 %869
    %v872 = vmul.f32 %v865, %v870
    %874 = vrot.lane.b32.xlu0 %v872, 32
    %v875 = vpop.permute.xlu0 %874
    %v877 = vadd.f32 %v448, %v875
    %v878 = vtanh.pop %v877
    %v879 = vsub.f32 1.0, %v865
    %881 = vrot.lane.b32.xlu0 %v878, 112
    %v882 = vpop.permute.xlu0 %881
    %v884 = vmul.f32 %v879, %v882
    %v885 = vrot.slane %v779, 6
    %v887 = vmul.f32 %v865, %v885
    %v888 = vadd.f32 %v884, %v887
    %v890 = vrot.slane %v888, 4
    %891 = vrot.lane.b32.xlu0 %v890, 112
    %v892 = vpop.permute.xlu0 %891
    %v893 = vsel %vm563, %v892, 0
    %895 = vmatprep.subr.mxu0 0.0
    %896 = vmatpush1.msra.mxu0 0.0
    %897 = vmatprep.subr.mxu0 0.0
    %898 = vmatpush1.msra.mxu0 0.0
    %899 = vmatprep.subr.mxu0 0.0
    %900 = vmatpush1.msra.mxu0 0.0
    %901 = vmatprep.subr.mxu0 0.0
    %902 = vmatpush1.msra.mxu0 0.0
    %903 = vmatprep.subr.mxu0 0.0
    %904 = vmatpush1.msra.mxu0 0.0
    %905 = vmatprep.subr.mxu0 0.0
    %906 = vmatpush1.msra.mxu0 0.0
    %907 = vmatprep.subr.mxu0 0.0
    %908 = vmatpush1.msra.mxu0 0.0
    %909 = vmatprep.subr.mxu0 0.0
    %910 = vmatpush1.msra.mxu0 0.0
    %911 = vmatprep.subr.mxu0 0.0
    %912 = vmatpush1.msra.mxu0 0.0
    %913 = vmatprep.subr.mxu0 0.0
    %914 = vmatpush1.msra.mxu0 0.0
    %915 = vmatprep.subr.mxu0 0.0
    %916 = vmatpush1.msra.mxu0 0.0
    %917 = vmatprep.subr.mxu0 0.0
    %918 = vmatpush1.msra.mxu0 0.0
    %919 = vmatprep.subr.mxu0 0.0
    %920 = vmatpush1.msra.mxu0 0.0
    %921 = vmatprep.subr.mxu0 0.0
    %922 = vmatpush1.msra.mxu0 0.0
    %923 = vmatprep.subr.mxu0 0.0
    %924 = vmatpush1.msra.mxu0 %v33
    %925 = vmatprep.subr.mxu0 0.0
    %926 = vmatpush1.msra.mxu0 %v32
    %927 = vmatprep.subr.mxu0 0.0
    %928 = vmatpush2.msra.mxu0 0.0
    %929 = vmatprep.subr.mxu0 0.0
    %930 = vmatpush2.msra.mxu0 0.0
    %931 = vmatprep.subr.mxu0 0.0
    %932 = vmatpush2.msra.mxu0 0.0
    %933 = vmatprep.subr.mxu0 0.0
    %934 = vmatpush2.msra.mxu0 0.0
    %935 = vmatprep.subr.mxu0 0.0
    %936 = vmatpush2.msra.mxu0 0.0
    %937 = vmatprep.subr.mxu0 0.0
    %938 = vmatpush2.msra.mxu0 0.0
    %939 = vmatprep.subr.mxu0 0.0
    %940 = vmatpush2.msra.mxu0 0.0
    %941 = vmatprep.subr.mxu0 0.0
    %942 = vmatpush2.msra.mxu0 0.0
    %943 = vmatprep.subr.mxu0 0.0
    %944 = vmatpush2.msra.mxu0 0.0
    %945 = vmatprep.subr.mxu0 0.0
    %946 = vmatpush2.msra.mxu0 0.0
    %947 = vmatprep.subr.mxu0 0.0
    %948 = vmatpush2.msra.mxu0 0.0
    %949 = vmatprep.subr.mxu0 0.0
    %950 = vmatpush2.msra.mxu0 0.0
    %951 = vmatprep.subr.mxu0 0.0
    %952 = vmatpush2.msra.mxu0 0.0
    %953 = vmatprep.subr.mxu0 0.0
    %954 = vmatpush2.msra.mxu0 0.0
    %955 = vmatprep.subr.mxu0 0.0
    %956 = vmatpush2.msra.mxu0 0.0
    %957 = vmatprep.subr.mxu0 0.0
    %958 = vmatpush2.msra.mxu0 0.0
    %959 = vmatprep.mubr.f32.mxu0 0.0
    %960 = vmatmul.mubr.f32.gmra.mxu0 %v893
    %v961 = vpop.f32.mrf.mxu0
    %v962 = vadd.f32 0.0, %v961
    %v963 = vpop.f32.mrf.mxu0
    %964 = vdwg.mxu0
    %v966 = vrot.slane %v962, 2
    %v968 = vadd.f32 %v448, %v966
    %v969 = vxor.u32 %v968, 2147483648
    %v970 = vmul.f32 %v969, 1.442695
    %v971 = vpow.pop %v970
    %v972 = vadd.f32 %v971, 1.0
    %v973 = vrcp.pop %v972
    %v974 = vmul.f32 1.0, %v973
    %v975 = vadd.f32 %v962, %v650
    %v977 = vrot.slane %v975, 2
    %978 = vrot.lane.b32.xlu0 %v977, 96
    %v979 = vpop.permute.xlu0 %978
    %v981 = vmul.f32 %v974, %v979
    %983 = vrot.lane.b32.xlu0 %v981, 32
    %v984 = vpop.permute.xlu0 %983
    %v986 = vadd.f32 %v448, %v984
    %v987 = vtanh.pop %v986
    %v988 = vsub.f32 1.0, %v974
    %990 = vrot.lane.b32.xlu0 %v987, 112
    %v991 = vpop.permute.xlu0 %990
    %v993 = vmul.f32 %v988, %v991
    %v994 = vrot.slane %v888, 6
    %v996 = vmul.f32 %v974, %v994
    %v997 = vadd.f32 %v993, %v996
    %v999 = vrot.slane %v997, 6
    %1000 = vrot.lane.b32.xlu0 %v999, 112
    %v1001 = vpop.permute.xlu0 %1000
    %v1002 = vsel %vm563, %v1001, 0
    %1004 = vmatprep.subr.mxu0 0.0
    %1005 = vmatpush1.msra.mxu0 0.0
    %1006 = vmatprep.subr.mxu0 0.0
    %1007 = vmatpush1.msra.mxu0 0.0
    %1008 = vmatprep.subr.mxu0 0.0
    %1009 = vmatpush1.msra.mxu0 0.0
    %1010 = vmatprep.subr.mxu0 0.0
    %1011 = vmatpush1.msra.mxu0 0.0
    %1012 = vmatprep.subr.mxu0 0.0
    %1013 = vmatpush1.msra.mxu0 0.0
    %1014 = vmatprep.subr.mxu0 0.0
    %1015 = vmatpush1.msra.mxu0 0.0
    %1016 = vmatprep.subr.mxu0 0.0
    %1017 = vmatpush1.msra.mxu0 0.0
    %1018 = vmatprep.subr.mxu0 0.0
    %1019 = vmatpush1.msra.mxu0 0.0
    %1020 = vmatprep.subr.mxu0 0.0
    %1021 = vmatpush1.msra.mxu0 0.0
    %1022 = vmatprep.subr.mxu0 0.0
    %1023 = vmatpush1.msra.mxu0 0.0
    %1024 = vmatprep.subr.mxu0 0.0
    %1025 = vmatpush1.msra.mxu0 0.0
    %1026 = vmatprep.subr.mxu0 0.0
    %1027 = vmatpush1.msra.mxu0 0.0
    %1028 = vmatprep.subr.mxu0 0.0
    %1029 = vmatpush1.msra.mxu0 0.0
    %1030 = vmatprep.subr.mxu0 0.0
    %1031 = vmatpush1.msra.mxu0 0.0
    %1032 = vmatprep.subr.mxu0 0.0
    %1033 = vmatpush1.msra.mxu0 %v33
    %1034 = vmatprep.subr.mxu0 0.0
    %1035 = vmatpush1.msra.mxu0 %v32
    %1036 = vmatprep.subr.mxu0 0.0
    %1037 = vmatpush2.msra.mxu0 0.0
    %1038 = vmatprep.subr.mxu0 0.0
    %1039 = vmatpush2.msra.mxu0 0.0
    %1040 = vmatprep.subr.mxu0 0.0
    %1041 = vmatpush2.msra.mxu0 0.0
    %1042 = vmatprep.subr.mxu0 0.0
    %1043 = vmatpush2.msra.mxu0 0.0
    %1044 = vmatprep.subr.mxu0 0.0
    %1045 = vmatpush2.msra.mxu0 0.0
    %1046 = vmatprep.subr.mxu0 0.0
    %1047 = vmatpush2.msra.mxu0 0.0
    %1048 = vmatprep.subr.mxu0 0.0
    %1049 = vmatpush2.msra.mxu0 0.0
    %1050 = vmatprep.subr.mxu0 0.0
    %1051 = vmatpush2.msra.mxu0 0.0
    %1052 = vmatprep.subr.mxu0 0.0
    %1053 = vmatpush2.msra.mxu0 0.0
    %1054 = vmatprep.subr.mxu0 0.0
    %1055 = vmatpush2.msra.mxu0 0.0
    %1056 = vmatprep.subr.mxu0 0.0
    %1057 = vmatpush2.msra.mxu0 0.0
    %1058 = vmatprep.subr.mxu0 0.0
    %1059 = vmatpush2.msra.mxu0 0.0
    %1060 = vmatprep.subr.mxu0 0.0
    %1061 = vmatpush2.msra.mxu0 0.0
    %1062 = vmatprep.subr.mxu0 0.0
    %1063 = vmatpush2.msra.mxu0 0.0
    %1064 = vmatprep.subr.mxu0 0.0
    %1065 = vmatpush2.msra.mxu0 0.0
    %1066 = vmatprep.subr.mxu0 0.0
    %1067 = vmatpush2.msra.mxu0 0.0
    %1068 = vmatprep.mubr.f32.mxu0 0.0
    %1069 = vmatmul.mubr.f32.gmra.mxu0 %v1002
    %v1070 = vpop.f32.mrf.mxu0
    %v1071 = vadd.f32 0.0, %v1070
    %v1072 = vpop.f32.mrf.mxu0
    %1073 = vdwg.mxu0
    %v1074 = vadd.f32 %v453, %v1071
    %v1075 = vxor.u32 %v1074, 2147483648
    %v1076 = vmul.f32 %v1075, 1.442695
    %v1077 = vpow.pop %v1076
    %v1078 = vadd.f32 %v1077, 1.0
    %v1079 = vrcp.pop %v1078
    %v1080 = vmul.f32 1.0, %v1079
    %v1081 = vadd.f32 %v1071, %v650
    %1083 = vrot.lane.b32.xlu0 %v1081, 96
    %v1084 = vpop.permute.xlu0 %1083
    %v1086 = vmul.f32 %v1080, %v1084
    %1088 = vrot.lane.b32.xlu0 %v1086, 32
    %v1089 = vpop.permute.xlu0 %1088
    %v1091 = vadd.f32 %v453, %v1089
    %v1092 = vtanh.pop %v1091
    %v1093 = vsub.f32 1.0, %v1080
    %1095 = vrot.lane.b32.xlu0 %v1092, 112
    %v1096 = vpop.permute.xlu0 %1095
    %v1098 = vmul.f32 %v1093, %v1096
    %v1100 = vmul.f32 %v1080, %v999
    %v1101 = vadd.f32 %v1098, %v1100
    %1103 = vrot.lane.b32.xlu0 %v1101, 112
    %v1104 = vpop.permute.xlu0 %1103
    %v1105 = vsel %vm563, %v1104, 0
    %1107 = vmatprep.subr.mxu0 0.0
    %1108 = vmatpush1.msra.mxu0 0.0
    %1109 = vmatprep.subr.mxu0 0.0
    %1110 = vmatpush1.msra.mxu0 0.0
    %1111 = vmatprep.subr.mxu0 0.0
    %1112 = vmatpush1.msra.mxu0 0.0
    %1113 = vmatprep.subr.mxu0 0.0
    %1114 = vmatpush1.msra.mxu0 0.0
    %1115 = vmatprep.subr.mxu0 0.0
    %1116 = vmatpush1.msra.mxu0 0.0
    %1117 = vmatprep.subr.mxu0 0.0
    %1118 = vmatpush1.msra.mxu0 0.0
    %1119 = vmatprep.subr.mxu0 0.0
    %1120 = vmatpush1.msra.mxu0 0.0
    %1121 = vmatprep.subr.mxu0 0.0
    %1122 = vmatpush1.msra.mxu0 0.0
    %1123 = vmatprep.subr.mxu0 0.0
    %1124 = vmatpush1.msra.mxu0 0.0
    %1125 = vmatprep.subr.mxu0 0.0
    %1126 = vmatpush1.msra.mxu0 0.0
    %1127 = vmatprep.subr.mxu0 0.0
    %1128 = vmatpush1.msra.mxu0 0.0
    %1129 = vmatprep.subr.mxu0 0.0
    %1130 = vmatpush1.msra.mxu0 0.0
    %1131 = vmatprep.subr.mxu0 0.0
    %1132 = vmatpush1.msra.mxu0 0.0
    %1133 = vmatprep.subr.mxu0 0.0
    %1134 = vmatpush1.msra.mxu0 0.0
    %1135 = vmatprep.subr.mxu0 0.0
    %1136 = vmatpush1.msra.mxu0 %v33
    %1137 = vmatprep.subr.mxu0 0.0
    %1138 = vmatpush1.msra.mxu0 %v32
    %1139 = vmatprep.subr.mxu0 0.0
    %1140 = vmatpush2.msra.mxu0 0.0
    %1141 = vmatprep.subr.mxu0 0.0
    %1142 = vmatpush2.msra.mxu0 0.0
    %1143 = vmatprep.subr.mxu0 0.0
    %1144 = vmatpush2.msra.mxu0 0.0
    %1145 = vmatprep.subr.mxu0 0.0
    %1146 = vmatpush2.msra.mxu0 0.0
    %1147 = vmatprep.subr.mxu0 0.0
    %1148 = vmatpush2.msra.mxu0 0.0
    %1149 = vmatprep.subr.mxu0 0.0
    %1150 = vmatpush2.msra.mxu0 0.0
    %1151 = vmatprep.subr.mxu0 0.0
    %1152 = vmatpush2.msra.mxu0 0.0
    %1153 = vmatprep.subr.mxu0 0.0
    %1154 = vmatpush2.msra.mxu0 0.0
    %1155 = vmatprep.subr.mxu0 0.0
    %1156 = vmatpush2.msra.mxu0 0.0
    %1157 = vmatprep.subr.mxu0 0.0
    %1158 = vmatpush2.msra.mxu0 0.0
    %1159 = vmatprep.subr.mxu0 0.0
    %1160 = vmatpush2.msra.mxu0 0.0
    %1161 = vmatprep.subr.mxu0 0.0
    %1162 = vmatpush2.msra.mxu0 0.0
    %1163 = vmatprep.subr.mxu0 0.0
    %1164 = vmatpush2.msra.mxu0 0.0
    %1165 = vmatprep.subr.mxu0 0.0
    %1166 = vmatpush2.msra.mxu0 0.0
    %1167 = vmatprep.subr.mxu0 0.0
    %1168 = vmatpush2.msra.mxu0 0.0
    %1169 = vmatprep.subr.mxu0 0.0
    %1170 = vmatpush2.msra.mxu0 0.0
    %1171 = vmatprep.mubr.f32.mxu0 0.0
    %1172 = vmatmul.mubr.f32.gmra.mxu0 %v1105
    %v1173 = vpop.f32.mrf.mxu0
    %v1174 = vadd.f32 0.0, %v1173
    %v1175 = vpop.f32.mrf.mxu0
    %1176 = vdwg.mxu0
    %v1178 = vrot.slane %v1174, 6
    %v1180 = vadd.f32 %v453, %v1178
    %v1181 = vxor.u32 %v1180, 2147483648
    %v1182 = vmul.f32 %v1181, 1.442695
    %v1183 = vpow.pop %v1182
    %v1184 = vadd.f32 %v1183, 1.0
    %v1185 = vrcp.pop %v1184
    %v1186 = vmul.f32 1.0, %v1185
    %v1187 = vadd.f32 %v1174, %v650
    %v1189 = vrot.slane %v1187, 6
    %1190 = vrot.lane.b32.xlu0 %v1189, 96
    %v1191 = vpop.permute.xlu0 %1190
    %v1193 = vmul.f32 %v1186, %v1191
    %1195 = vrot.lane.b32.xlu0 %v1193, 32
    %v1196 = vpop.permute.xlu0 %1195
    %v1198 = vadd.f32 %v453, %v1196
    %v1199 = vtanh.pop %v1198
    %v1200 = vsub.f32 1.0, %v1186
    %1202 = vrot.lane.b32.xlu0 %v1199, 112
    %v1203 = vpop.permute.xlu0 %1202
    %v1205 = vmul.f32 %v1200, %v1203
    %v1206 = vrot.slane %v1101, 6
    %v1208 = vmul.f32 %v1186, %v1206
    %v1209 = vadd.f32 %v1205, %v1208
    %v1211 = vrot.slane %v1209, 2
    %1212 = vrot.lane.b32.xlu0 %v1211, 112
    %v1213 = vpop.permute.xlu0 %1212
    %v1214 = vsel %vm563, %v1213, 0
    %1216 = vmatprep.subr.mxu0 0.0
    %1217 = vmatpush1.msra.mxu0 0.0
    %1218 = vmatprep.subr.mxu0 0.0
    %1219 = vmatpush1.msra.mxu0 0.0
    %1220 = vmatprep.subr.mxu0 0.0
    %1221 = vmatpush1.msra.mxu0 0.0
    %1222 = vmatprep.subr.mxu0 0.0
    %1223 = vmatpush1.msra.mxu0 0.0
    %1224 = vmatprep.subr.mxu0 0.0
    %1225 = vmatpush1.msra.mxu0 0.0
    %1226 = vmatprep.subr.mxu0 0.0
    %1227 = vmatpush1.msra.mxu0 0.0
    %1228 = vmatprep.subr.mxu0 0.0
    %1229 = vmatpush1.msra.mxu0 0.0
    %1230 = vmatprep.subr.mxu0 0.0
    %1231 = vmatpush1.msra.mxu0 0.0
    %1232 = vmatprep.subr.mxu0 0.0
    %1233 = vmatpush1.msra.mxu0 0.0
    %1234 = vmatprep.subr.mxu0 0.0
    %1235 = vmatpush1.msra.mxu0 0.0
    %1236 = vmatprep.subr.mxu0 0.0
    %1237 = vmatpush1.msra.mxu0 0.0
    %1238 = vmatprep.subr.mxu0 0.0
    %1239 = vmatpush1.msra.mxu0 0.0
    %1240 = vmatprep.subr.mxu0 0.0
    %1241 = vmatpush1.msra.mxu0 0.0
    %1242 = vmatprep.subr.mxu0 0.0
    %1243 = vmatpush1.msra.mxu0 0.0
    %1244 = vmatprep.subr.mxu0 0.0
    %1245 = vmatpush1.msra.mxu0 %v33
    %1246 = vmatprep.subr.mxu0 0.0
    %1247 = vmatpush1.msra.mxu0 %v32
    %1248 = vmatprep.subr.mxu0 0.0
    %1249 = vmatpush2.msra.mxu0 0.0
    %1250 = vmatprep.subr.mxu0 0.0
    %1251 = vmatpush2.msra.mxu0 0.0
    %1252 = vmatprep.subr.mxu0 0.0
    %1253 = vmatpush2.msra.mxu0 0.0
    %1254 = vmatprep.subr.mxu0 0.0
    %1255 = vmatpush2.msra.mxu0 0.0
    %1256 = vmatprep.subr.mxu0 0.0
    %1257 = vmatpush2.msra.mxu0 0.0
    %1258 = vmatprep.subr.mxu0 0.0
    %1259 = vmatpush2.msra.mxu0 0.0
    %1260 = vmatprep.subr.mxu0 0.0
    %1261 = vmatpush2.msra.mxu0 0.0
    %1262 = vmatprep.subr.mxu0 0.0
    %1263 = vmatpush2.msra.mxu0 0.0
    %1264 = vmatprep.subr.mxu0 0.0
    %1265 = vmatpush2.msra.mxu0 0.0
    %1266 = vmatprep.subr.mxu0 0.0
    %1267 = vmatpush2.msra.mxu0 0.0
    %1268 = vmatprep.subr.mxu0 0.0
    %1269 = vmatpush2.msra.mxu0 0.0
    %1270 = vmatprep.subr.mxu0 0.0
    %1271 = vmatpush2.msra.mxu0 0.0
    %1272 = vmatprep.subr.mxu0 0.0
    %1273 = vmatpush2.msra.mxu0 0.0
    %1274 = vmatprep.subr.mxu0 0.0
    %1275 = vmatpush2.msra.mxu0 0.0
    %1276 = vmatprep.subr.mxu0 0.0
    %1277 = vmatpush2.msra.mxu0 0.0
    %1278 = vmatprep.subr.mxu0 0.0
    %1279 = vmatpush2.msra.mxu0 0.0
    %1280 = vmatprep.mubr.f32.mxu0 0.0
    %1281 = vmatmul.mubr.f32.gmra.mxu0 %v1214
    %v1282 = vpop.f32.mrf.mxu0
    %v1283 = vadd.f32 0.0, %v1282
    %v1284 = vpop.f32.mrf.mxu0
    %1285 = vdwg.mxu0
    %v1287 = vrot.slane %v1283, 4
    %v1289 = vadd.f32 %v453, %v1287
    %v1290 = vxor.u32 %v1289, 2147483648
    %v1291 = vmul.f32 %v1290, 1.442695
    %v1292 = vpow.pop %v1291
    %v1293 = vadd.f32 %v1292, 1.0
    %v1294 = vrcp.pop %v1293
    %v1295 = vmul.f32 1.0, %v1294
    %v1296 = vadd.f32 %v1283, %v650
    %v1298 = vrot.slane %v1296, 4
    %1299 = vrot.lane.b32.xlu0 %v1298, 96
    %v1300 = vpop.permute.xlu0 %1299
    %v1302 = vmul.f32 %v1295, %v1300
    %1304 = vrot.lane.b32.xlu0 %v1302, 32
    %v1305 = vpop.permute.xlu0 %1304
    %v1307 = vadd.f32 %v453, %v1305
    %v1308 = vtanh.pop %v1307
    %v1309 = vsub.f32 1.0, %v1295
    %1311 = vrot.lane.b32.xlu0 %v1308, 112
    %v1312 = vpop.permute.xlu0 %1311
    %v1314 = vmul.f32 %v1309, %v1312
    %v1315 = vrot.slane %v1209, 6
    %v1317 = vmul.f32 %v1295, %v1315
    %v1318 = vadd.f32 %v1314, %v1317
    %v1320 = vrot.slane %v1318, 4
    %1321 = vrot.lane.b32.xlu0 %v1320, 112
    %v1322 = vpop.permute.xlu0 %1321
    %v1323 = vsel %vm563, %v1322, 0
    %1325 = vmatprep.subr.mxu0 0.0
    %1326 = vmatpush1.msra.mxu0 0.0
    %1327 = vmatprep.subr.mxu0 0.0
    %1328 = vmatpush1.msra.mxu0 0.0
    %1329 = vmatprep.subr.mxu0 0.0
    %1330 = vmatpush1.msra.mxu0 0.0
    %1331 = vmatprep.subr.mxu0 0.0
    %1332 = vmatpush1.msra.mxu0 0.0
    %1333 = vmatprep.subr.mxu0 0.0
    %1334 = vmatpush1.msra.mxu0 0.0
    %1335 = vmatprep.subr.mxu0 0.0
    %1336 = vmatpush1.msra.mxu0 0.0
    %1337 = vmatprep.subr.mxu0 0.0
    %1338 = vmatpush1.msra.mxu0 0.0
    %1339 = vmatprep.subr.mxu0 0.0
    %1340 = vmatpush1.msra.mxu0 0.0
    %1341 = vmatprep.subr.mxu0 0.0
    %1342 = vmatpush1.msra.mxu0 0.0
    %1343 = vmatprep.subr.mxu0 0.0
    %1344 = vmatpush1.msra.mxu0 0.0
    %1345 = vmatprep.subr.mxu0 0.0
    %1346 = vmatpush1.msra.mxu0 0.0
    %1347 = vmatprep.subr.mxu0 0.0
    %1348 = vmatpush1.msra.mxu0 0.0
    %1349 = vmatprep.subr.mxu0 0.0
    %1350 = vmatpush1.msra.mxu0 0.0
    %1351 = vmatprep.subr.mxu0 0.0
    %1352 = vmatpush1.msra.mxu0 0.0
    %1353 = vmatprep.subr.mxu0 0.0
    %1354 = vmatpush1.msra.mxu0 %v33
    %1355 = vmatprep.subr.mxu0 0.0
    %1356 = vmatpush1.msra.mxu0 %v32
    %1357 = vmatprep.subr.mxu0 0.0
    %1358 = vmatpush2.msra.mxu0 0.0
    %1359 = vmatprep.subr.mxu0 0.0
    %1360 = vmatpush2.msra.mxu0 0.0
    %1361 = vmatprep.subr.mxu0 0.0
    %1362 = vmatpush2.msra.mxu0 0.0
    %1363 = vmatprep.subr.mxu0 0.0
    %1364 = vmatpush2.msra.mxu0 0.0
    %1365 = vmatprep.subr.mxu0 0.0
    %1366 = vmatpush2.msra.mxu0 0.0
    %1367 = vmatprep.subr.mxu0 0.0
    %1368 = vmatpush2.msra.mxu0 0.0
    %1369 = vmatprep.subr.mxu0 0.0
    %1370 = vmatpush2.msra.mxu0 0.0
    %1371 = vmatprep.subr.mxu0 0.0
    %1372 = vmatpush2.msra.mxu0 0.0
    %1373 = vmatprep.subr.mxu0 0.0
    %1374 = vmatpush2.msra.mxu0 0.0
    %1375 = vmatprep.subr.mxu0 0.0
    %1376 = vmatpush2.msra.mxu0 0.0
    %1377 = vmatprep.subr.mxu0 0.0
    %1378 = vmatpush2.msra.mxu0 0.0
    %1379 = vmatprep.subr.mxu0 0.0
    %1380 = vmatpush2.msra.mxu0 0.0
    %1381 = vmatprep.subr.mxu0 0.0
    %1382 = vmatpush2.msra.mxu0 0.0
    %1383 = vmatprep.subr.mxu0 0.0
    %1384 = vmatpush2.msra.mxu0 0.0
    %1385 = vmatprep.subr.mxu0 0.0
    %1386 = vmatpush2.msra.mxu0 0.0
    %1387 = vmatprep.subr.mxu0 0.0
    %1388 = vmatpush2.msra.mxu0 0.0
    %1389 = vmatprep.mubr.f32.mxu0 0.0
    %1390 = vmatmul.mubr.f32.gmra.mxu0 %v1323
    %v1391 = vpop.f32.mrf.mxu0
    %v1392 = vadd.f32 0.0, %v1391
    %v1393 = vpop.f32.mrf.mxu0
    %1394 = vdwg.mxu0
    %v1396 = vrot.slane %v1392, 2
    %v1398 = vadd.f32 %v453, %v1396
    %v1399 = vxor.u32 %v1398, 2147483648
    %v1400 = vmul.f32 %v1399, 1.442695
    %v1401 = vpow.pop %v1400
    %v1402 = vadd.f32 %v1401, 1.0
    %v1403 = vrcp.pop %v1402
    %v1404 = vmul.f32 1.0, %v1403
    %v1405 = vadd.f32 %v1392, %v650
    %v1407 = vrot.slane %v1405, 2
    %1408 = vrot.lane.b32.xlu0 %v1407, 96
    %v1409 = vpop.permute.xlu0 %1408
    %v1411 = vmul.f32 %v1404, %v1409
    %1413 = vrot.lane.b32.xlu0 %v1411, 32
    %v1414 = vpop.permute.xlu0 %1413
    %v1416 = vadd.f32 %v453, %v1414
    %v1417 = vtanh.pop %v1416
    %v1418 = vsub.f32 1.0, %v1404
    %1420 = vrot.lane.b32.xlu0 %v1417, 112
    %v1421 = vpop.permute.xlu0 %1420
    %v1423 = vmul.f32 %v1418, %v1421
    %v1424 = vrot.slane %v1318, 6
    %v1426 = vmul.f32 %v1404, %v1424
    %v1427 = vadd.f32 %v1423, %v1426
    %v1429 = vrot.slane %v1427, 6
    %1430 = vrot.lane.b32.xlu0 %v1429, 112
    %v1431 = vpop.permute.xlu0 %1430
    %v1432 = vsel %vm563, %v1431, 0
    %1434 = vmatprep.subr.mxu0 0.0
    %1435 = vmatpush1.msra.mxu0 0.0
    %1436 = vmatprep.subr.mxu0 0.0
    %1437 = vmatpush1.msra.mxu0 0.0
    %1438 = vmatprep.subr.mxu0 0.0
    %1439 = vmatpush1.msra.mxu0 0.0
    %1440 = vmatprep.subr.mxu0 0.0
    %1441 = vmatpush1.msra.mxu0 0.0
    %1442 = vmatprep.subr.mxu0 0.0
    %1443 = vmatpush1.msra.mxu0 0.0
    %1444 = vmatprep.subr.mxu0 0.0
    %1445 = vmatpush1.msra.mxu0 0.0
    %1446 = vmatprep.subr.mxu0 0.0
    %1447 = vmatpush1.msra.mxu0 0.0
    %1448 = vmatprep.subr.mxu0 0.0
    %1449 = vmatpush1.msra.mxu0 0.0
    %1450 = vmatprep.subr.mxu0 0.0
    %1451 = vmatpush1.msra.mxu0 0.0
    %1452 = vmatprep.subr.mxu0 0.0
    %1453 = vmatpush1.msra.mxu0 0.0
    %1454 = vmatprep.subr.mxu0 0.0
    %1455 = vmatpush1.msra.mxu0 0.0
    %1456 = vmatprep.subr.mxu0 0.0
    %1457 = vmatpush1.msra.mxu0 0.0
    %1458 = vmatprep.subr.mxu0 0.0
    %1459 = vmatpush1.msra.mxu0 0.0
    %1460 = vmatprep.subr.mxu0 0.0
    %1461 = vmatpush1.msra.mxu0 0.0
    %1462 = vmatprep.subr.mxu0 0.0
    %1463 = vmatpush1.msra.mxu0 %v33
    %1464 = vmatprep.subr.mxu0 0.0
    %1465 = vmatpush1.msra.mxu0 %v32
    %1466 = vmatprep.subr.mxu0 0.0
    %1467 = vmatpush2.msra.mxu0 0.0
    %1468 = vmatprep.subr.mxu0 0.0
    %1469 = vmatpush2.msra.mxu0 0.0
    %1470 = vmatprep.subr.mxu0 0.0
    %1471 = vmatpush2.msra.mxu0 0.0
    %1472 = vmatprep.subr.mxu0 0.0
    %1473 = vmatpush2.msra.mxu0 0.0
    %1474 = vmatprep.subr.mxu0 0.0
    %1475 = vmatpush2.msra.mxu0 0.0
    %1476 = vmatprep.subr.mxu0 0.0
    %1477 = vmatpush2.msra.mxu0 0.0
    %1478 = vmatprep.subr.mxu0 0.0
    %1479 = vmatpush2.msra.mxu0 0.0
    %1480 = vmatprep.subr.mxu0 0.0
    %1481 = vmatpush2.msra.mxu0 0.0
    %1482 = vmatprep.subr.mxu0 0.0
    %1483 = vmatpush2.msra.mxu0 0.0
    %1484 = vmatprep.subr.mxu0 0.0
    %1485 = vmatpush2.msra.mxu0 0.0
    %1486 = vmatprep.subr.mxu0 0.0
    %1487 = vmatpush2.msra.mxu0 0.0
    %1488 = vmatprep.subr.mxu0 0.0
    %1489 = vmatpush2.msra.mxu0 0.0
    %1490 = vmatprep.subr.mxu0 0.0
    %1491 = vmatpush2.msra.mxu0 0.0
    %1492 = vmatprep.subr.mxu0 0.0
    %1493 = vmatpush2.msra.mxu0 0.0
    %1494 = vmatprep.subr.mxu0 0.0
    %1495 = vmatpush2.msra.mxu0 0.0
    %1496 = vmatprep.subr.mxu0 0.0
    %1497 = vmatpush2.msra.mxu0 0.0
    %1498 = vmatprep.mubr.f32.mxu0 0.0
    %1499 = vmatmul.mubr.f32.gmra.mxu0 %v1432
    %v1500 = vpop.f32.mrf.mxu0
    %v1501 = vadd.f32 0.0, %v1500
    %v1502 = vpop.f32.mrf.mxu0
    %1503 = vdwg.mxu0
    %v1504 = vadd.f32 %v458, %v1501
    %v1505 = vxor.u32 %v1504, 2147483648
    %v1506 = vmul.f32 %v1505, 1.442695
    %v1507 = vpow.pop %v1506
    %v1508 = vadd.f32 %v1507, 1.0
    %v1509 = vrcp.pop %v1508
    %v1510 = vmul.f32 1.0, %v1509
    %v1511 = vadd.f32 %v1501, %v650
    %1513 = vrot.lane.b32.xlu0 %v1511, 96
    %v1514 = vpop.permute.xlu0 %1513
    %v1516 = vmul.f32 %v1510, %v1514
    %1518 = vrot.lane.b32.xlu0 %v1516, 32
    %v1519 = vpop.permute.xlu0 %1518
    %v1521 = vadd.f32 %v458, %v1519
    %v1522 = vtanh.pop %v1521
    %v1523 = vsub.f32 1.0, %v1510
    %1525 = vrot.lane.b32.xlu0 %v1522, 112
    %v1526 = vpop.permute.xlu0 %1525
    %v1528 = vmul.f32 %v1523, %v1526
    %v1530 = vmul.f32 %v1510, %v1429
    %v1531 = vadd.f32 %v1528, %v1530
    %1533 = vrot.lane.b32.xlu0 %v1531, 112
    %v1534 = vpop.permute.xlu0 %1533
    %v1535 = vsel %vm563, %v1534, 0
    %1537 = vmatprep.subr.mxu0 0.0
    %1538 = vmatpush1.msra.mxu0 0.0
    %1539 = vmatprep.subr.mxu0 0.0
    %1540 = vmatpush1.msra.mxu0 0.0
    %1541 = vmatprep.subr.mxu0 0.0
    %1542 = vmatpush1.msra.mxu0 0.0
    %1543 = vmatprep.subr.mxu0 0.0
    %1544 = vmatpush1.msra.mxu0 0.0
    %1545 = vmatprep.subr.mxu0 0.0
    %1546 = vmatpush1.msra.mxu0 0.0
    %1547 = vmatprep.subr.mxu0 0.0
    %1548 = vmatpush1.msra.mxu0 0.0
    %1549 = vmatprep.subr.mxu0 0.0
    %1550 = vmatpush1.msra.mxu0 0.0
    %1551 = vmatprep.subr.mxu0 0.0
    %1552 = vmatpush1.msra.mxu0 0.0
    %1553 = vmatprep.subr.mxu0 0.0
    %1554 = vmatpush1.msra.mxu0 0.0
    %1555 = vmatprep.subr.mxu0 0.0
    %1556 = vmatpush1.msra.mxu0 0.0
    %1557 = vmatprep.subr.mxu0 0.0
    %1558 = vmatpush1.msra.mxu0 0.0
    %1559 = vmatprep.subr.mxu0 0.0
    %1560 = vmatpush1.msra.mxu0 0.0
    %1561 = vmatprep.subr.mxu0 0.0
    %1562 = vmatpush1.msra.mxu0 0.0
    %1563 = vmatprep.subr.mxu0 0.0
    %1564 = vmatpush1.msra.mxu0 0.0
    %1565 = vmatprep.subr.mxu0 0.0
    %1566 = vmatpush1.msra.mxu0 %v33
    %1567 = vmatprep.subr.mxu0 0.0
    %1568 = vmatpush1.msra.mxu0 %v32
    %1569 = vmatprep.subr.mxu0 0.0
    %1570 = vmatpush2.msra.mxu0 0.0
    %1571 = vmatprep.subr.mxu0 0.0
    %1572 = vmatpush2.msra.mxu0 0.0
    %1573 = vmatprep.subr.mxu0 0.0
    %1574 = vmatpush2.msra.mxu0 0.0
    %1575 = vmatprep.subr.mxu0 0.0
    %1576 = vmatpush2.msra.mxu0 0.0
    %1577 = vmatprep.subr.mxu0 0.0
    %1578 = vmatpush2.msra.mxu0 0.0
    %1579 = vmatprep.subr.mxu0 0.0
    %1580 = vmatpush2.msra.mxu0 0.0
    %1581 = vmatprep.subr.mxu0 0.0
    %1582 = vmatpush2.msra.mxu0 0.0
    %1583 = vmatprep.subr.mxu0 0.0
    %1584 = vmatpush2.msra.mxu0 0.0
    %1585 = vmatprep.subr.mxu0 0.0
    %1586 = vmatpush2.msra.mxu0 0.0
    %1587 = vmatprep.subr.mxu0 0.0
    %1588 = vmatpush2.msra.mxu0 0.0
    %1589 = vmatprep.subr.mxu0 0.0
    %1590 = vmatpush2.msra.mxu0 0.0
    %1591 = vmatprep.subr.mxu0 0.0
    %1592 = vmatpush2.msra.mxu0 0.0
    %1593 = vmatprep.subr.mxu0 0.0
    %1594 = vmatpush2.msra.mxu0 0.0
    %1595 = vmatprep.subr.mxu0 0.0
    %1596 = vmatpush2.msra.mxu0 0.0
    %1597 = vmatprep.subr.mxu0 0.0
    %1598 = vmatpush2.msra.mxu0 0.0
    %1599 = vmatprep.subr.mxu0 0.0
    %1600 = vmatpush2.msra.mxu0 0.0
    %1601 = vmatprep.mubr.f32.mxu0 0.0
    %1602 = vmatmul.mubr.f32.gmra.mxu0 %v1535
    %v1603 = vpop.f32.mrf.mxu0
    %v1604 = vadd.f32 0.0, %v1603
    %v1605 = vpop.f32.mrf.mxu0
    %1606 = vdwg.mxu0
    %v1608 = vrot.slane %v1604, 6
    %v1610 = vadd.f32 %v458, %v1608
    %v1611 = vxor.u32 %v1610, 2147483648
    %v1612 = vmul.f32 %v1611, 1.442695
    %v1613 = vpow.pop %v1612
    %v1614 = vadd.f32 %v1613, 1.0
    %v1615 = vrcp.pop %v1614
    %v1616 = vmul.f32 1.0, %v1615
    %v1617 = vadd.f32 %v1604, %v650
    %v1619 = vrot.slane %v1617, 6
    %1620 = vrot.lane.b32.xlu0 %v1619, 96
    %v1621 = vpop.permute.xlu0 %1620
    %v1623 = vmul.f32 %v1616, %v1621
    %1625 = vrot.lane.b32.xlu0 %v1623, 32
    %v1626 = vpop.permute.xlu0 %1625
    %v1628 = vadd.f32 %v458, %v1626
    %v1629 = vtanh.pop %v1628
    %v1630 = vsub.f32 1.0, %v1616
    %1632 = vrot.lane.b32.xlu0 %v1629, 112
    %v1633 = vpop.permute.xlu0 %1632
    %v1635 = vmul.f32 %v1630, %v1633
    %v1636 = vrot.slane %v1531, 6
    %v1638 = vmul.f32 %v1616, %v1636
    %v1639 = vadd.f32 %v1635, %v1638
    %v1641 = vrot.slane %v1639, 2
    %1642 = vrot.lane.b32.xlu0 %v1641, 112
    %v1643 = vpop.permute.xlu0 %1642
    %v1644 = vsel %vm563, %v1643, 0
    %1646 = vmatprep.subr.mxu0 0.0
    %1647 = vmatpush1.msra.mxu0 0.0
    %1648 = vmatprep.subr.mxu0 0.0
    %1649 = vmatpush1.msra.mxu0 0.0
    %1650 = vmatprep.subr.mxu0 0.0
    %1651 = vmatpush1.msra.mxu0 0.0
    %1652 = vmatprep.subr.mxu0 0.0
    %1653 = vmatpush1.msra.mxu0 0.0
    %1654 = vmatprep.subr.mxu0 0.0
    %1655 = vmatpush1.msra.mxu0 0.0
    %1656 = vmatprep.subr.mxu0 0.0
    %1657 = vmatpush1.msra.mxu0 0.0
    %1658 = vmatprep.subr.mxu0 0.0
    %1659 = vmatpush1.msra.mxu0 0.0
    %1660 = vmatprep.subr.mxu0 0.0
    %1661 = vmatpush1.msra.mxu0 0.0
    %1662 = vmatprep.subr.mxu0 0.0
    %1663 = vmatpush1.msra.mxu0 0.0
    %1664 = vmatprep.subr.mxu0 0.0
    %1665 = vmatpush1.msra.mxu0 0.0
    %1666 = vmatprep.subr.mxu0 0.0
    %1667 = vmatpush1.msra.mxu0 0.0
    %1668 = vmatprep.subr.mxu0 0.0
    %1669 = vmatpush1.msra.mxu0 0.0
    %1670 = vmatprep.subr.mxu0 0.0
    %1671 = vmatpush1.msra.mxu0 0.0
    %1672 = vmatprep.subr.mxu0 0.0
    %1673 = vmatpush1.msra.mxu0 0.0
    %1674 = vmatprep.subr.mxu0 0.0
    %1675 = vmatpush1.msra.mxu0 %v33
    %1676 = vmatprep.subr.mxu0 0.0
    %1677 = vmatpush1.msra.mxu0 %v32
    %1678 = vmatprep.subr.mxu0 0.0
    %1679 = vmatpush2.msra.mxu0 0.0
    %1680 = vmatprep.subr.mxu0 0.0
    %1681 = vmatpush2.msra.mxu0 0.0
    %1682 = vmatprep.subr.mxu0 0.0
    %1683 = vmatpush2.msra.mxu0 0.0
    %1684 = vmatprep.subr.mxu0 0.0
    %1685 = vmatpush2.msra.mxu0 0.0
    %1686 = vmatprep.subr.mxu0 0.0
    %1687 = vmatpush2.msra.mxu0 0.0
    %1688 = vmatprep.subr.mxu0 0.0
    %1689 = vmatpush2.msra.mxu0 0.0
    %1690 = vmatprep.subr.mxu0 0.0
    %1691 = vmatpush2.msra.mxu0 0.0
    %1692 = vmatprep.subr.mxu0 0.0
    %1693 = vmatpush2.msra.mxu0 0.0
    %1694 = vmatprep.subr.mxu0 0.0
    %1695 = vmatpush2.msra.mxu0 0.0
    %1696 = vmatprep.subr.mxu0 0.0
    %1697 = vmatpush2.msra.mxu0 0.0
    %1698 = vmatprep.subr.mxu0 0.0
    %1699 = vmatpush2.msra.mxu0 0.0
    %1700 = vmatprep.subr.mxu0 0.0
    %1701 = vmatpush2.msra.mxu0 0.0
    %1702 = vmatprep.subr.mxu0 0.0
    %1703 = vmatpush2.msra.mxu0 0.0
    %1704 = vmatprep.subr.mxu0 0.0
    %1705 = vmatpush2.msra.mxu0 0.0
    %1706 = vmatprep.subr.mxu0 0.0
    %1707 = vmatpush2.msra.mxu0 0.0
    %1708 = vmatprep.subr.mxu0 0.0
    %1709 = vmatpush2.msra.mxu0 0.0
    %1710 = vmatprep.mubr.f32.mxu0 0.0
    %1711 = vmatmul.mubr.f32.gmra.mxu0 %v1644
    %v1712 = vpop.f32.mrf.mxu0
    %v1713 = vadd.f32 0.0, %v1712
    %v1714 = vpop.f32.mrf.mxu0
    %1715 = vdwg.mxu0
    %v1717 = vrot.slane %v1713, 4
    %v1719 = vadd.f32 %v458, %v1717
    %v1720 = vxor.u32 %v1719, 2147483648
    %v1721 = vmul.f32 %v1720, 1.442695
    %v1722 = vpow.pop %v1721
    %v1723 = vadd.f32 %v1722, 1.0
    %v1724 = vrcp.pop %v1723
    %v1725 = vmul.f32 1.0, %v1724
    %v1726 = vadd.f32 %v1713, %v650
    %v1728 = vrot.slane %v1726, 4
    %1729 = vrot.lane.b32.xlu0 %v1728, 96
    %v1730 = vpop.permute.xlu0 %1729
    %v1732 = vmul.f32 %v1725, %v1730
    %1734 = vrot.lane.b32.xlu0 %v1732, 32
    %v1735 = vpop.permute.xlu0 %1734
    %v1737 = vadd.f32 %v458, %v1735
    %v1738 = vtanh.pop %v1737
    %v1739 = vsub.f32 1.0, %v1725
    %1741 = vrot.lane.b32.xlu0 %v1738, 112
    %v1742 = vpop.permute.xlu0 %1741
    %v1744 = vmul.f32 %v1739, %v1742
    %v1745 = vrot.slane %v1639, 6
    %v1747 = vmul.f32 %v1725, %v1745
    %v1748 = vadd.f32 %v1744, %v1747
    %v1750 = vrot.slane %v1748, 4
    %1751 = vrot.lane.b32.xlu0 %v1750, 112
    %v1752 = vpop.permute.xlu0 %1751
    %v1753 = vsel %vm563, %v1752, 0
    %1755 = vmatprep.subr.mxu0 0.0
    %1756 = vmatpush1.msra.mxu0 0.0
    %1757 = vmatprep.subr.mxu0 0.0
    %1758 = vmatpush1.msra.mxu0 0.0
    %1759 = vmatprep.subr.mxu0 0.0
    %1760 = vmatpush1.msra.mxu0 0.0
    %1761 = vmatprep.subr.mxu0 0.0
    %1762 = vmatpush1.msra.mxu0 0.0
    %1763 = vmatprep.subr.mxu0 0.0
    %1764 = vmatpush1.msra.mxu0 0.0
    %1765 = vmatprep.subr.mxu0 0.0
    %1766 = vmatpush1.msra.mxu0 0.0
    %1767 = vmatprep.subr.mxu0 0.0
    %1768 = vmatpush1.msra.mxu0 0.0
    %1769 = vmatprep.subr.mxu0 0.0
    %1770 = vmatpush1.msra.mxu0 0.0
    %1771 = vmatprep.subr.mxu0 0.0
    %1772 = vmatpush1.msra.mxu0 0.0
    %1773 = vmatprep.subr.mxu0 0.0
    %1774 = vmatpush1.msra.mxu0 0.0
    %1775 = vmatprep.subr.mxu0 0.0
    %1776 = vmatpush1.msra.mxu0 0.0
    %1777 = vmatprep.subr.mxu0 0.0
    %1778 = vmatpush1.msra.mxu0 0.0
    %1779 = vmatprep.subr.mxu0 0.0
    %1780 = vmatpush1.msra.mxu0 0.0
    %1781 = vmatprep.subr.mxu0 0.0
    %1782 = vmatpush1.msra.mxu0 0.0
    %1783 = vmatprep.subr.mxu0 0.0
    %1784 = vmatpush1.msra.mxu0 %v33
    %1785 = vmatprep.subr.mxu0 0.0
    %1786 = vmatpush1.msra.mxu0 %v32
    %1787 = vmatprep.subr.mxu0 0.0
    %1788 = vmatpush2.msra.mxu0 0.0
    %1789 = vmatprep.subr.mxu0 0.0
    %1790 = vmatpush2.msra.mxu0 0.0
    %1791 = vmatprep.subr.mxu0 0.0
    %1792 = vmatpush2.msra.mxu0 0.0
    %1793 = vmatprep.subr.mxu0 0.0
    %1794 = vmatpush2.msra.mxu0 0.0
    %1795 = vmatprep.subr.mxu0 0.0
    %1796 = vmatpush2.msra.mxu0 0.0
    %1797 = vmatprep.subr.mxu0 0.0
    %1798 = vmatpush2.msra.mxu0 0.0
    %1799 = vmatprep.subr.mxu0 0.0
    %1800 = vmatpush2.msra.mxu0 0.0
    %1801 = vmatprep.subr.mxu0 0.0
    %1802 = vmatpush2.msra.mxu0 0.0
    %1803 = vmatprep.subr.mxu0 0.0
    %1804 = vmatpush2.msra.mxu0 0.0
    %1805 = vmatprep.subr.mxu0 0.0
    %1806 = vmatpush2.msra.mxu0 0.0
    %1807 = vmatprep.subr.mxu0 0.0
    %1808 = vmatpush2.msra.mxu0 0.0
    %1809 = vmatprep.subr.mxu0 0.0
    %1810 = vmatpush2.msra.mxu0 0.0
    %1811 = vmatprep.subr.mxu0 0.0
    %1812 = vmatpush2.msra.mxu0 0.0
    %1813 = vmatprep.subr.mxu0 0.0
    %1814 = vmatpush2.msra.mxu0 0.0
    %1815 = vmatprep.subr.mxu0 0.0
    %1816 = vmatpush2.msra.mxu0 0.0
    %1817 = vmatprep.subr.mxu0 0.0
    %1818 = vmatpush2.msra.mxu0 0.0
    %1819 = vmatprep.mubr.f32.mxu0 0.0
    %1820 = vmatmul.mubr.f32.gmra.mxu0 %v1753
    %v1821 = vpop.f32.mrf.mxu0
    %v1822 = vadd.f32 0.0, %v1821
    %v1823 = vpop.f32.mrf.mxu0
    %1824 = vdwg.mxu0
    %v1826 = vrot.slane %v1822, 2
    %v1828 = vadd.f32 %v458, %v1826
    %v1829 = vxor.u32 %v1828, 2147483648
    %v1830 = vmul.f32 %v1829, 1.442695
    %v1831 = vpow.pop %v1830
    %v1832 = vadd.f32 %v1831, 1.0
    %v1833 = vrcp.pop %v1832
    %v1834 = vmul.f32 1.0, %v1833
    %v1835 = vadd.f32 %v1822, %v650
    %v1837 = vrot.slane %v1835, 2
    %1838 = vrot.lane.b32.xlu0 %v1837, 96
    %v1839 = vpop.permute.xlu0 %1838
    %v1841 = vmul.f32 %v1834, %v1839
    %1843 = vrot.lane.b32.xlu0 %v1841, 32
    %v1844 = vpop.permute.xlu0 %1843
    %v1846 = vadd.f32 %v458, %v1844
    %v1847 = vtanh.pop %v1846
    %v1848 = vsub.f32 1.0, %v1834
    %1850 = vrot.lane.b32.xlu0 %v1847, 112
    %v1851 = vpop.permute.xlu0 %1850
    %v1853 = vmul.f32 %v1848, %v1851
    %v1854 = vrot.slane %v1748, 6
    %v1856 = vmul.f32 %v1834, %v1854
    %v1857 = vadd.f32 %v1853, %v1856
    %v1859 = vrot.slane %v1857, 6
    %1860 = vrot.lane.b32.xlu0 %v1859, 112
    %v1861 = vpop.permute.xlu0 %1860
    %v1862 = vsel %vm563, %v1861, 0
    %1864 = vmatprep.subr.mxu0 0.0
    %1865 = vmatpush1.msra.mxu0 0.0
    %1866 = vmatprep.subr.mxu0 0.0
    %1867 = vmatpush1.msra.mxu0 0.0
    %1868 = vmatprep.subr.mxu0 0.0
    %1869 = vmatpush1.msra.mxu0 0.0
    %1870 = vmatprep.subr.mxu0 0.0
    %1871 = vmatpush1.msra.mxu0 0.0
    %1872 = vmatprep.subr.mxu0 0.0
    %1873 = vmatpush1.msra.mxu0 0.0
    %1874 = vmatprep.subr.mxu0 0.0
    %1875 = vmatpush1.msra.mxu0 0.0
    %1876 = vmatprep.subr.mxu0 0.0
    %1877 = vmatpush1.msra.mxu0 0.0
    %1878 = vmatprep.subr.mxu0 0.0
    %1879 = vmatpush1.msra.mxu0 0.0
    %1880 = vmatprep.subr.mxu0 0.0
    %1881 = vmatpush1.msra.mxu0 0.0
    %1882 = vmatprep.subr.mxu0 0.0
    %1883 = vmatpush1.msra.mxu0 0.0
    %1884 = vmatprep.subr.mxu0 0.0
    %1885 = vmatpush1.msra.mxu0 0.0
    %1886 = vmatprep.subr.mxu0 0.0
    %1887 = vmatpush1.msra.mxu0 0.0
    %1888 = vmatprep.subr.mxu0 0.0
    %1889 = vmatpush1.msra.mxu0 0.0
    %1890 = vmatprep.subr.mxu0 0.0
    %1891 = vmatpush1.msra.mxu0 0.0
    %1892 = vmatprep.subr.mxu0 0.0
    %1893 = vmatpush1.msra.mxu0 %v33
    %1894 = vmatprep.subr.mxu0 0.0
    %1895 = vmatpush1.msra.mxu0 %v32
    %1896 = vmatprep.subr.mxu0 0.0
    %1897 = vmatpush2.msra.mxu0 0.0
    %1898 = vmatprep.subr.mxu0 0.0
    %1899 = vmatpush2.msra.mxu0 0.0
    %1900 = vmatprep.subr.mxu0 0.0
    %1901 = vmatpush2.msra.mxu0 0.0
    %1902 = vmatprep.subr.mxu0 0.0
    %1903 = vmatpush2.msra.mxu0 0.0
    %1904 = vmatprep.subr.mxu0 0.0
    %1905 = vmatpush2.msra.mxu0 0.0
    %1906 = vmatprep.subr.mxu0 0.0
    %1907 = vmatpush2.msra.mxu0 0.0
    %1908 = vmatprep.subr.mxu0 0.0
    %1909 = vmatpush2.msra.mxu0 0.0
    %1910 = vmatprep.subr.mxu0 0.0
    %1911 = vmatpush2.msra.mxu0 0.0
    %1912 = vmatprep.subr.mxu0 0.0
    %1913 = vmatpush2.msra.mxu0 0.0
    %1914 = vmatprep.subr.mxu0 0.0
    %1915 = vmatpush2.msra.mxu0 0.0
    %1916 = vmatprep.subr.mxu0 0.0
    %1917 = vmatpush2.msra.mxu0 0.0
    %1918 = vmatprep.subr.mxu0 0.0
    %1919 = vmatpush2.msra.mxu0 0.0
    %1920 = vmatprep.subr.mxu0 0.0
    %1921 = vmatpush2.msra.mxu0 0.0
    %1922 = vmatprep.subr.mxu0 0.0
    %1923 = vmatpush2.msra.mxu0 0.0
    %1924 = vmatprep.subr.mxu0 0.0
    %1925 = vmatpush2.msra.mxu0 0.0
    %1926 = vmatprep.subr.mxu0 0.0
    %1927 = vmatpush2.msra.mxu0 0.0
    %1928 = vmatprep.mubr.f32.mxu0 0.0
    %1929 = vmatmul.mubr.f32.gmra.mxu0 %v1862
    %v1930 = vpop.f32.mrf.mxu0
    %v1931 = vadd.f32 0.0, %v1930
    %v1932 = vpop.f32.mrf.mxu0
    %1933 = vdwg.mxu0
    %v1934 = vadd.f32 %v463, %v1931
    %v1935 = vxor.u32 %v1934, 2147483648
    %v1936 = vmul.f32 %v1935, 1.442695
    %v1937 = vpow.pop %v1936
    %v1938 = vadd.f32 %v1937, 1.0
    %v1939 = vrcp.pop %v1938
    %v1940 = vmul.f32 1.0, %v1939
    %v1941 = vadd.f32 %v1931, %v650
    %1943 = vrot.lane.b32.xlu0 %v1941, 96
    %v1944 = vpop.permute.xlu0 %1943
    %v1946 = vmul.f32 %v1940, %v1944
    %1948 = vrot.lane.b32.xlu0 %v1946, 32
    %v1949 = vpop.permute.xlu0 %1948
    %v1951 = vadd.f32 %v463, %v1949
    %v1952 = vtanh.pop %v1951
    %v1953 = vsub.f32 1.0, %v1940
    %1955 = vrot.lane.b32.xlu0 %v1952, 112
    %v1956 = vpop.permute.xlu0 %1955
    %v1958 = vmul.f32 %v1953, %v1956
    %v1960 = vmul.f32 %v1940, %v1859
    %v1961 = vadd.f32 %v1958, %v1960
    %1963 = vrot.lane.b32.xlu0 %v1961, 112
    %v1964 = vpop.permute.xlu0 %1963
    %v1965 = vsel %vm563, %v1964, 0
    %1967 = vmatprep.subr.mxu0 0.0
    %1968 = vmatpush1.msra.mxu0 0.0
    %1969 = vmatprep.subr.mxu0 0.0
    %1970 = vmatpush1.msra.mxu0 0.0
    %1971 = vmatprep.subr.mxu0 0.0
    %1972 = vmatpush1.msra.mxu0 0.0
    %1973 = vmatprep.subr.mxu0 0.0
    %1974 = vmatpush1.msra.mxu0 0.0
    %1975 = vmatprep.subr.mxu0 0.0
    %1976 = vmatpush1.msra.mxu0 0.0
    %1977 = vmatprep.subr.mxu0 0.0
    %1978 = vmatpush1.msra.mxu0 0.0
    %1979 = vmatprep.subr.mxu0 0.0
    %1980 = vmatpush1.msra.mxu0 0.0
    %1981 = vmatprep.subr.mxu0 0.0
    %1982 = vmatpush1.msra.mxu0 0.0
    %1983 = vmatprep.subr.mxu0 0.0
    %1984 = vmatpush1.msra.mxu0 0.0
    %1985 = vmatprep.subr.mxu0 0.0
    %1986 = vmatpush1.msra.mxu0 0.0
    %1987 = vmatprep.subr.mxu0 0.0
    %1988 = vmatpush1.msra.mxu0 0.0
    %1989 = vmatprep.subr.mxu0 0.0
    %1990 = vmatpush1.msra.mxu0 0.0
    %1991 = vmatprep.subr.mxu0 0.0
    %1992 = vmatpush1.msra.mxu0 0.0
    %1993 = vmatprep.subr.mxu0 0.0
    %1994 = vmatpush1.msra.mxu0 0.0
    %1995 = vmatprep.subr.mxu0 0.0
    %1996 = vmatpush1.msra.mxu0 %v33
    %1997 = vmatprep.subr.mxu0 0.0
    %1998 = vmatpush1.msra.mxu0 %v32
    %1999 = vmatprep.subr.mxu0 0.0
    %2000 = vmatpush2.msra.mxu0 0.0
    %2001 = vmatprep.subr.mxu0 0.0
    %2002 = vmatpush2.msra.mxu0 0.0
    %2003 = vmatprep.subr.mxu0 0.0
    %2004 = vmatpush2.msra.mxu0 0.0
    %2005 = vmatprep.subr.mxu0 0.0
    %2006 = vmatpush2.msra.mxu0 0.0
    %2007 = vmatprep.subr.mxu0 0.0
    %2008 = vmatpush2.msra.mxu0 0.0
    %2009 = vmatprep.subr.mxu0 0.0
    %2010 = vmatpush2.msra.mxu0 0.0
    %2011 = vmatprep.subr.mxu0 0.0
    %2012 = vmatpush2.msra.mxu0 0.0
    %2013 = vmatprep.subr.mxu0 0.0
    %2014 = vmatpush2.msra.mxu0 0.0
    %2015 = vmatprep.subr.mxu0 0.0
    %2016 = vmatpush2.msra.mxu0 0.0
    %2017 = vmatprep.subr.mxu0 0.0
    %2018 = vmatpush2.msra.mxu0 0.0
    %2019 = vmatprep.subr.mxu0 0.0
    %2020 = vmatpush2.msra.mxu0 0.0
    %2021 = vmatprep.subr.mxu0 0.0
    %2022 = vmatpush2.msra.mxu0 0.0
    %2023 = vmatprep.subr.mxu0 0.0
    %2024 = vmatpush2.msra.mxu0 0.0
    %2025 = vmatprep.subr.mxu0 0.0
    %2026 = vmatpush2.msra.mxu0 0.0
    %2027 = vmatprep.subr.mxu0 0.0
    %2028 = vmatpush2.msra.mxu0 0.0
    %2029 = vmatprep.subr.mxu0 0.0
    %2030 = vmatpush2.msra.mxu0 0.0
    %2031 = vmatprep.mubr.f32.mxu0 0.0
    %2032 = vmatmul.mubr.f32.gmra.mxu0 %v1965
    %v2033 = vpop.f32.mrf.mxu0
    %v2034 = vadd.f32 0.0, %v2033
    %v2035 = vpop.f32.mrf.mxu0
    %2036 = vdwg.mxu0
    %v2038 = vrot.slane %v2034, 6
    %v2040 = vadd.f32 %v463, %v2038
    %v2041 = vxor.u32 %v2040, 2147483648
    %v2042 = vmul.f32 %v2041, 1.442695
    %v2043 = vpow.pop %v2042
    %v2044 = vadd.f32 %v2043, 1.0
    %v2045 = vrcp.pop %v2044
    %v2046 = vmul.f32 1.0, %v2045
    %v2047 = vadd.f32 %v2034, %v650
    %v2049 = vrot.slane %v2047, 6
    %2050 = vrot.lane.b32.xlu0 %v2049, 96
    %v2051 = vpop.permute.xlu0 %2050
    %v2053 = vmul.f32 %v2046, %v2051
    %2055 = vrot.lane.b32.xlu0 %v2053, 32
    %v2056 = vpop.permute.xlu0 %2055
    %v2058 = vadd.f32 %v463, %v2056
    %v2059 = vtanh.pop %v2058
    %v2060 = vsub.f32 1.0, %v2046
    %2062 = vrot.lane.b32.xlu0 %v2059, 112
    %v2063 = vpop.permute.xlu0 %2062
    %v2065 = vmul.f32 %v2060, %v2063
    %v2066 = vrot.slane %v1961, 6
    %v2068 = vmul.f32 %v2046, %v2066
    %v2069 = vadd.f32 %v2065, %v2068
    %vm2070 = vcmask 31744
    %v2071 = vsel %vm2070, 0.0, 0
    %v2074 = vsel %vm248, %v35, 0
    %2076 = vmatprep.subr.mxu0 0.0
    %2077 = vmatpush1.msra.mxu0 0.0
    %2078 = vmatprep.subr.mxu0 0.0
    %2079 = vmatpush1.msra.mxu0 0.0
    %2080 = vmatprep.subr.mxu0 0.0
    %2081 = vmatpush1.msra.mxu0 0.0
    %2082 = vmatprep.subr.mxu0 0.0
    %2083 = vmatpush1.msra.mxu0 0.0
    %2084 = vmatprep.subr.mxu0 0.0
    %2085 = vmatpush1.msra.mxu0 0.0
    %2086 = vmatprep.subr.mxu0 0.0
    %2087 = vmatpush1.msra.mxu0 0.0
    %2088 = vmatprep.subr.mxu0 0.0
    %2089 = vmatpush1.msra.mxu0 0.0
    %2090 = vmatprep.subr.mxu0 0.0
    %2091 = vmatpush1.msra.mxu0 0.0
    %2092 = vmatprep.subr.mxu0 0.0
    %2093 = vmatpush1.msra.mxu0 0.0
    %2094 = vmatprep.subr.mxu0 0.0
    %2095 = vmatpush1.msra.mxu0 0.0
    %2096 = vmatprep.subr.mxu0 0.0
    %2097 = vmatpush1.msra.mxu0 0.0
    %2098 = vmatprep.subr.mxu0 0.0
    %2099 = vmatpush1.msra.mxu0 0.0
    %2100 = vmatprep.subr.mxu0 0.0
    %2101 = vmatpush1.msra.mxu0 0.0
    %2102 = vmatprep.subr.mxu0 0.0
    %2103 = vmatpush1.msra.mxu0 0.0
    %2104 = vmatprep.subr.mxu0 0.0
    %2105 = vmatpush1.msra.mxu0 0.0
    %2106 = vmatprep.subr.mxu0 0.0
    %2107 = vmatpush1.msra.mxu0 %v2074
    %2108 = vmatprep.subr.mxu0 0.0
    %2109 = vmatpush2.msra.mxu0 0.0
    %2110 = vmatprep.subr.mxu0 0.0
    %2111 = vmatpush2.msra.mxu0 0.0
    %2112 = vmatprep.subr.mxu0 0.0
    %2113 = vmatpush2.msra.mxu0 0.0
    %2114 = vmatprep.subr.mxu0 0.0
    %2115 = vmatpush2.msra.mxu0 0.0
    %2116 = vmatprep.subr.mxu0 0.0
    %2117 = vmatpush2.msra.mxu0 0.0
    %2118 = vmatprep.subr.mxu0 0.0
    %2119 = vmatpush2.msra.mxu0 0.0
    %2120 = vmatprep.subr.mxu0 0.0
    %2121 = vmatpush2.msra.mxu0 0.0
    %2122 = vmatprep.subr.mxu0 0.0
    %2123 = vmatpush2.msra.mxu0 0.0
    %2124 = vmatprep.subr.mxu0 0.0
    %2125 = vmatpush2.msra.mxu0 0.0
    %2126 = vmatprep.subr.mxu0 0.0
    %2127 = vmatpush2.msra.mxu0 0.0
    %2128 = vmatprep.subr.mxu0 0.0
    %2129 = vmatpush2.msra.mxu0 0.0
    %2130 = vmatprep.subr.mxu0 0.0
    %2131 = vmatpush2.msra.mxu0 0.0
    %2132 = vmatprep.subr.mxu0 0.0
    %2133 = vmatpush2.msra.mxu0 0.0
    %2134 = vmatprep.subr.mxu0 0.0
    %2135 = vmatpush2.msra.mxu0 0.0
    %2136 = vmatprep.subr.mxu0 0.0
    %2137 = vmatpush2.msra.mxu0 0.0
    %2138 = vmatprep.subr.mxu0 0.0
    %2139 = vmatpush2.msra.mxu0 0.0
    %2140 = vmatprep.mubr.f32.mxu0 0.0
    %2141 = vmatmul.mubr.f32.gmra.mxu0 %v2071
    %v2142 = vpop.f32.mrf.mxu0
    %v2143 = vadd.f32 0.0, %v2142
    %v2144 = vpop.f32.mrf.mxu0
    %2145 = vdwg.mxu0
    %v2146 = vadd.f32 %v550, %v2143
    %v2147 = vxor.u32 %v2146, 2147483648
    %v2148 = vmul.f32 %v2147, 1.442695
    %v2149 = vpow.pop %v2148
    %v2150 = vadd.f32 %v2149, 1.0
    %v2151 = vrcp.pop %v2150
    %v2152 = vmul.f32 1.0, %v2151
    %v2153 = vlaneseq
    %v2154 = vshrl.u32 %v2153, 7
    %v2155 = vsub.s32 0, %v2154
    %v2156 = vrot.slane %v43, %v2155
    %2158 = vrot.lane.b32.xlu0 %v2156, 8
    %v2159 = vpop.permute.xlu0 %2158
    %v2161 = vadd.f32 %v2143, %v2159
    %2163 = vrot.lane.b32.xlu0 %v2161, 120
    %v2164 = vpop.permute.xlu0 %2163
    %v2166 = vmul.f32 %v2152, %v2164
    %2168 = vrot.lane.b32.xlu0 %v2166, 8
    %v2169 = vpop.permute.xlu0 %2168
    %v2171 = vadd.f32 %v550, %v2169
    %v2172 = vtanh.pop %v2171
    %v2173 = vsub.f32 1.0, %v2152
    %2175 = vrot.lane.b32.xlu0 %v2172, 124
    %v2176 = vpop.permute.xlu0 %2175
    %v2178 = vmul.f32 %v2173, %v2176
    %v2179 = vmul.f32 %v2152, 0.0
    %v2180 = vadd.f32 %v2178, %v2179
    %2182 = vrot.lane.b32.xlu0 %v2180, 124
    %v2183 = vpop.permute.xlu0 %2182
    %v2184 = vsel %vm2070, %v2183, 0
    %2186 = vmatprep.subr.mxu0 0.0
    %2187 = vmatpush1.msra.mxu0 0.0
    %2188 = vmatprep.subr.mxu0 0.0
    %2189 = vmatpush1.msra.mxu0 0.0
    %2190 = vmatprep.subr.mxu0 0.0
    %2191 = vmatpush1.msra.mxu0 0.0
    %2192 = vmatprep.subr.mxu0 0.0
    %2193 = vmatpush1.msra.mxu0 0.0
    %2194 = vmatprep.subr.mxu0 0.0
    %2195 = vmatpush1.msra.mxu0 0.0
    %2196 = vmatprep.subr.mxu0 0.0
    %2197 = vmatpush1.msra.mxu0 0.0
    %2198 = vmatprep.subr.mxu0 0.0
    %2199 = vmatpush1.msra.mxu0 0.0
    %2200 = vmatprep.subr.mxu0 0.0
    %2201 = vmatpush1.msra.mxu0 0.0
    %2202 = vmatprep.subr.mxu0 0.0
    %2203 = vmatpush1.msra.mxu0 0.0
    %2204 = vmatprep.subr.mxu0 0.0
    %2205 = vmatpush1.msra.mxu0 0.0
    %2206 = vmatprep.subr.mxu0 0.0
    %2207 = vmatpush1.msra.mxu0 0.0
    %2208 = vmatprep.subr.mxu0 0.0
    %2209 = vmatpush1.msra.mxu0 0.0
    %2210 = vmatprep.subr.mxu0 0.0
    %2211 = vmatpush1.msra.mxu0 0.0
    %2212 = vmatprep.subr.mxu0 0.0
    %2213 = vmatpush1.msra.mxu0 0.0
    %2214 = vmatprep.subr.mxu0 0.0
    %2215 = vmatpush1.msra.mxu0 0.0
    %2216 = vmatprep.subr.mxu0 0.0
    %2217 = vmatpush1.msra.mxu0 %v2074
    %2218 = vmatprep.subr.mxu0 0.0
    %2219 = vmatpush2.msra.mxu0 0.0
    %2220 = vmatprep.subr.mxu0 0.0
    %2221 = vmatpush2.msra.mxu0 0.0
    %2222 = vmatprep.subr.mxu0 0.0
    %2223 = vmatpush2.msra.mxu0 0.0
    %2224 = vmatprep.subr.mxu0 0.0
    %2225 = vmatpush2.msra.mxu0 0.0
    %2226 = vmatprep.subr.mxu0 0.0
    %2227 = vmatpush2.msra.mxu0 0.0
    %2228 = vmatprep.subr.mxu0 0.0
    %2229 = vmatpush2.msra.mxu0 0.0
    %2230 = vmatprep.subr.mxu0 0.0
    %2231 = vmatpush2.msra.mxu0 0.0
    %2232 = vmatprep.subr.mxu0 0.0
    %2233 = vmatpush2.msra.mxu0 0.0
    %2234 = vmatprep.subr.mxu0 0.0
    %2235 = vmatpush2.msra.mxu0 0.0
    %2236 = vmatprep.subr.mxu0 0.0
    %2237 = vmatpush2.msra.mxu0 0.0
    %2238 = vmatprep.subr.mxu0 0.0
    %2239 = vmatpush2.msra.mxu0 0.0
    %2240 = vmatprep.subr.mxu0 0.0
    %2241 = vmatpush2.msra.mxu0 0.0
    %2242 = vmatprep.subr.mxu0 0.0
    %2243 = vmatpush2.msra.mxu0 0.0
    %2244 = vmatprep.subr.mxu0 0.0
    %2245 = vmatpush2.msra.mxu0 0.0
    %2246 = vmatprep.subr.mxu0 0.0
    %2247 = vmatpush2.msra.mxu0 0.0
    %2248 = vmatprep.subr.mxu0 0.0
    %2249 = vmatpush2.msra.mxu0 0.0
    %2250 = vmatprep.mubr.f32.mxu0 0.0
    %2251 = vmatmul.mubr.f32.gmra.mxu0 %v2184
    %v2252 = vpop.f32.mrf.mxu0
    %v2253 = vadd.f32 0.0, %v2252
    %v2254 = vpop.f32.mrf.mxu0
    %2255 = vdwg.mxu0
    %v2257 = vrot.slane %v2253, 4
    %v2259 = vadd.f32 %v550, %v2257
    %v2260 = vxor.u32 %v2259, 2147483648
    %v2261 = vmul.f32 %v2260, 1.442695
    %v2262 = vpow.pop %v2261
    %v2263 = vadd.f32 %v2262, 1.0
    %v2264 = vrcp.pop %v2263
    %v2265 = vmul.f32 1.0, %v2264
    %v2266 = vadd.f32 %v2253, %v2159
    %v2268 = vrot.slane %v2266, 4
    %2269 = vrot.lane.b32.xlu0 %v2268, 120
    %v2270 = vpop.permute.xlu0 %2269
    %v2272 = vmul.f32 %v2265, %v2270
    %2274 = vrot.lane.b32.xlu0 %v2272, 8
    %v2275 = vpop.permute.xlu0 %2274
    %v2277 = vadd.f32 %v550, %v2275
    %v2278 = vtanh.pop %v2277
    %v2279 = vsub.f32 1.0, %v2265
    %2281 = vrot.lane.b32.xlu0 %v2278, 124
    %v2282 = vpop.permute.xlu0 %2281
    %v2284 = vmul.f32 %v2279, %v2282
    %v2285 = vrot.slane %v2180, 4
    %v2287 = vmul.f32 %v2265, %v2285
    %v2288 = vadd.f32 %v2284, %v2287
    %v2290 = vrot.slane %v2288, 4
    %2291 = vrot.lane.b32.xlu0 %v2290, 124
    %v2292 = vpop.permute.xlu0 %2291
    %v2293 = vsel %vm2070, %v2292, 0
    %2295 = vmatprep.subr.mxu0 0.0
    %2296 = vmatpush1.msra.mxu0 0.0
    %2297 = vmatprep.subr.mxu0 0.0
    %2298 = vmatpush1.msra.mxu0 0.0
    %2299 = vmatprep.subr.mxu0 0.0
    %2300 = vmatpush1.msra.mxu0 0.0
    %2301 = vmatprep.subr.mxu0 0.0
    %2302 = vmatpush1.msra.mxu0 0.0
    %2303 = vmatprep.subr.mxu0 0.0
    %2304 = vmatpush1.msra.mxu0 0.0
    %2305 = vmatprep.subr.mxu0 0.0
    %2306 = vmatpush1.msra.mxu0 0.0
    %2307 = vmatprep.subr.mxu0 0.0
    %2308 = vmatpush1.msra.mxu0 0.0
    %2309 = vmatprep.subr.mxu0 0.0
    %2310 = vmatpush1.msra.mxu0 0.0
    %2311 = vmatprep.subr.mxu0 0.0
    %2312 = vmatpush1.msra.mxu0 0.0
    %2313 = vmatprep.subr.mxu0 0.0
    %2314 = vmatpush1.msra.mxu0 0.0
    %2315 = vmatprep.subr.mxu0 0.0
    %2316 = vmatpush1.msra.mxu0 0.0
    %2317 = vmatprep.subr.mxu0 0.0
    %2318 = vmatpush1.msra.mxu0 0.0
    %2319 = vmatprep.subr.mxu0 0.0
    %2320 = vmatpush1.msra.mxu0 0.0
    %2321 = vmatprep.subr.mxu0 0.0
    %2322 = vmatpush1.msra.mxu0 0.0
    %2323 = vmatprep.subr.mxu0 0.0
    %2324 = vmatpush1.msra.mxu0 0.0
    %2325 = vmatprep.subr.mxu0 0.0
    %2326 = vmatpush1.msra.mxu0 %v2074
    %2327 = vmatprep.subr.mxu0 0.0
    %2328 = vmatpush2.msra.mxu0 0.0
    %2329 = vmatprep.subr.mxu0 0.0
    %2330 = vmatpush2.msra.mxu0 0.0
    %2331 = vmatprep.subr.mxu0 0.0
    %2332 = vmatpush2.msra.mxu0 0.0
    %2333 = vmatprep.subr.mxu0 0.0
    %2334 = vmatpush2.msra.mxu0 0.0
    %2335 = vmatprep.subr.mxu0 0.0
    %2336 = vmatpush2.msra.mxu0 0.0
    %2337 = vmatprep.subr.mxu0 0.0
    %2338 = vmatpush2.msra.mxu0 0.0
    %2339 = vmatprep.subr.mxu0 0.0
    %2340 = vmatpush2.msra.mxu0 0.0
    %2341 = vmatprep.subr.mxu0 0.0
    %2342 = vmatpush2.msra.mxu0 0.0
    %2343 = vmatprep.subr.mxu0 0.0
    %2344 = vmatpush2.msra.mxu0 0.0
    %2345 = vmatprep.subr.mxu0 0.0
    %2346 = vmatpush2.msra.mxu0 0.0
    %2347 = vmatprep.subr.mxu0 0.0
    %2348 = vmatpush2.msra.mxu0 0.0
    %2349 = vmatprep.subr.mxu0 0.0
    %2350 = vmatpush2.msra.mxu0 0.0
    %2351 = vmatprep.subr.mxu0 0.0
    %2352 = vmatpush2.msra.mxu0 0.0
    %2353 = vmatprep.subr.mxu0 0.0
    %2354 = vmatpush2.msra.mxu0 0.0
    %2355 = vmatprep.subr.mxu0 0.0
    %2356 = vmatpush2.msra.mxu0 0.0
    %2357 = vmatprep.subr.mxu0 0.0
    %2358 = vmatpush2.msra.mxu0 0.0
    %2359 = vmatprep.mubr.f32.mxu0 0.0
    %2360 = vmatmul.mubr.f32.gmra.mxu0 %v2293
    %v2361 = vpop.f32.mrf.mxu0
    %v2362 = vadd.f32 0.0, %v2361
    %v2363 = vpop.f32.mrf.mxu0
    %2364 = vdwg.mxu0
    %v2365 = vadd.f32 %v555, %v2362
    %v2366 = vxor.u32 %v2365, 2147483648
    %v2367 = vmul.f32 %v2366, 1.442695
    %v2368 = vpow.pop %v2367
    %v2369 = vadd.f32 %v2368, 1.0
    %v2370 = vrcp.pop %v2369
    %v2371 = vmul.f32 1.0, %v2370
    %v2372 = vadd.f32 %v2362, %v2159
    %2374 = vrot.lane.b32.xlu0 %v2372, 120
    %v2375 = vpop.permute.xlu0 %2374
    %v2377 = vmul.f32 %v2371, %v2375
    %2379 = vrot.lane.b32.xlu0 %v2377, 8
    %v2380 = vpop.permute.xlu0 %2379
    %v2382 = vadd.f32 %v555, %v2380
    %v2383 = vtanh.pop %v2382
    %v2384 = vsub.f32 1.0, %v2371
    %2386 = vrot.lane.b32.xlu0 %v2383, 124
    %v2387 = vpop.permute.xlu0 %2386
    %v2389 = vmul.f32 %v2384, %v2387
    %v2391 = vmul.f32 %v2371, %v2290
    %v2392 = vadd.f32 %v2389, %v2391
    %2394 = vrot.lane.b32.xlu0 %v2392, 124
    %v2395 = vpop.permute.xlu0 %2394
    %v2396 = vsel %vm2070, %v2395, 0
    %2398 = vmatprep.subr.mxu0 0.0
    %2399 = vmatpush1.msra.mxu0 0.0
    %2400 = vmatprep.subr.mxu0 0.0
    %2401 = vmatpush1.msra.mxu0 0.0
    %2402 = vmatprep.subr.mxu0 0.0
    %2403 = vmatpush1.msra.mxu0 0.0
    %2404 = vmatprep.subr.mxu0 0.0
    %2405 = vmatpush1.msra.mxu0 0.0
    %2406 = vmatprep.subr.mxu0 0.0
    %2407 = vmatpush1.msra.mxu0 0.0
    %2408 = vmatprep.subr.mxu0 0.0
    %2409 = vmatpush1.msra.mxu0 0.0
    %2410 = vmatprep.subr.mxu0 0.0
    %2411 = vmatpush1.msra.mxu0 0.0
    %2412 = vmatprep.subr.mxu0 0.0
    %2413 = vmatpush1.msra.mxu0 0.0
    %2414 = vmatprep.subr.mxu0 0.0
    %2415 = vmatpush1.msra.mxu0 0.0
    %2416 = vmatprep.subr.mxu0 0.0
    %2417 = vmatpush1.msra.mxu0 0.0
    %2418 = vmatprep.subr.mxu0 0.0
    %2419 = vmatpush1.msra.mxu0 0.0
    %2420 = vmatprep.subr.mxu0 0.0
    %2421 = vmatpush1.msra.mxu0 0.0
    %2422 = vmatprep.subr.mxu0 0.0
    %2423 = vmatpush1.msra.mxu0 0.0
    %2424 = vmatprep.subr.mxu0 0.0
    %2425 = vmatpush1.msra.mxu0 0.0
    %2426 = vmatprep.subr.mxu0 0.0
    %2427 = vmatpush1.msra.mxu0 0.0
    %2428 = vmatprep.subr.mxu0 0.0
    %2429 = vmatpush1.msra.mxu0 %v2074
    %2430 = vmatprep.subr.mxu0 0.0
    %2431 = vmatpush2.msra.mxu0 0.0
    %2432 = vmatprep.subr.mxu0 0.0
    %2433 = vmatpush2.msra.mxu0 0.0
    %2434 = vmatprep.subr.mxu0 0.0
    %2435 = vmatpush2.msra.mxu0 0.0
    %2436 = vmatprep.subr.mxu0 0.0
    %2437 = vmatpush2.msra.mxu0 0.0
    %2438 = vmatprep.subr.mxu0 0.0
    %2439 = vmatpush2.msra.mxu0 0.0
    %2440 = vmatprep.subr.mxu0 0.0
    %2441 = vmatpush2.msra.mxu0 0.0
    %2442 = vmatprep.subr.mxu0 0.0
    %2443 = vmatpush2.msra.mxu0 0.0
    %2444 = vmatprep.subr.mxu0 0.0
    %2445 = vmatpush2.msra.mxu0 0.0
    %2446 = vmatprep.subr.mxu0 0.0
    %2447 = vmatpush2.msra.mxu0 0.0
    %2448 = vmatprep.subr.mxu0 0.0
    %2449 = vmatpush2.msra.mxu0 0.0
    %2450 = vmatprep.subr.mxu0 0.0
    %2451 = vmatpush2.msra.mxu0 0.0
    %2452 = vmatprep.subr.mxu0 0.0
    %2453 = vmatpush2.msra.mxu0 0.0
    %2454 = vmatprep.subr.mxu0 0.0
    %2455 = vmatpush2.msra.mxu0 0.0
    %2456 = vmatprep.subr.mxu0 0.0
    %2457 = vmatpush2.msra.mxu0 0.0
    %2458 = vmatprep.subr.mxu0 0.0
    %2459 = vmatpush2.msra.mxu0 0.0
    %2460 = vmatprep.subr.mxu0 0.0
    %2461 = vmatpush2.msra.mxu0 0.0
    %2462 = vmatprep.mubr.f32.mxu0 0.0
    %2463 = vmatmul.mubr.f32.gmra.mxu0 %v2396
    %v2464 = vpop.f32.mrf.mxu0
    %v2465 = vadd.f32 0.0, %v2464
    %v2466 = vpop.f32.mrf.mxu0
    %2467 = vdwg.mxu0
    %v2469 = vrot.slane %v2465, 4
    %v2471 = vadd.f32 %v555, %v2469
    %v2472 = vxor.u32 %v2471, 2147483648
    %v2473 = vmul.f32 %v2472, 1.442695
    %v2474 = vpow.pop %v2473
    %v2475 = vadd.f32 %v2474, 1.0
    %v2476 = vrcp.pop %v2475
    %v2477 = vmul.f32 1.0, %v2476
    %v2478 = vadd.f32 %v2465, %v2159
    %v2480 = vrot.slane %v2478, 4
    %2481 = vrot.lane.b32.xlu0 %v2480, 120
    %v2482 = vpop.permute.xlu0 %2481
    %v2484 = vmul.f32 %v2477, %v2482
    %2486 = vrot.lane.b32.xlu0 %v2484, 8
    %v2487 = vpop.permute.xlu0 %2486
    %v2489 = vadd.f32 %v555, %v2487
    %v2490 = vtanh.pop %v2489
    %v2491 = vsub.f32 1.0, %v2477
    %2493 = vrot.lane.b32.xlu0 %v2490, 124
    %v2494 = vpop.permute.xlu0 %2493
    %v2496 = vmul.f32 %v2491, %v2494
    %v2497 = vrot.slane %v2392, 4
    %v2499 = vmul.f32 %v2477, %v2497
    %v2500 = vadd.f32 %v2496, %v2499
    %v2502 = vrot.slane %v2500, 4
    %2503 = vrot.lane.b32.xlu0 %v2502, 124
    %v2504 = vpop.permute.xlu0 %2503
    %v2505 = vsel %vm2070, %v2504, 0
    %2507 = vmatprep.subr.mxu0 0.0
    %2508 = vmatpush1.msra.mxu0 0.0
    %2509 = vmatprep.subr.mxu0 0.0
    %2510 = vmatpush1.msra.mxu0 0.0
    %2511 = vmatprep.subr.mxu0 0.0
    %2512 = vmatpush1.msra.mxu0 0.0
    %2513 = vmatprep.subr.mxu0 0.0
    %2514 = vmatpush1.msra.mxu0 0.0
    %2515 = vmatprep.subr.mxu0 0.0
    %2516 = vmatpush1.msra.mxu0 0.0
    %2517 = vmatprep.subr.mxu0 0.0
    %2518 = vmatpush1.msra.mxu0 0.0
    %2519 = vmatprep.subr.mxu0 0.0
    %2520 = vmatpush1.msra.mxu0 0.0
    %2521 = vmatprep.subr.mxu0 0.0
    %2522 = vmatpush1.msra.mxu0 0.0
    %2523 = vmatprep.subr.mxu0 0.0
    %2524 = vmatpush1.msra.mxu0 0.0
    %2525 = vmatprep.subr.mxu0 0.0
    %2526 = vmatpush1.msra.mxu0 0.0
    %2527 = vmatprep.subr.mxu0 0.0
    %2528 = vmatpush1.msra.mxu0 0.0
    %2529 = vmatprep.subr.mxu0 0.0
    %2530 = vmatpush1.msra.mxu0 0.0
    %2531 = vmatprep.subr.mxu0 0.0
    %2532 = vmatpush1.msra.mxu0 0.0
    %2533 = vmatprep.subr.mxu0 0.0
    %2534 = vmatpush1.msra.mxu0 0.0
    %2535 = vmatprep.subr.mxu0 0.0
    %2536 = vmatpush1.msra.mxu0 0.0
    %2537 = vmatprep.subr.mxu0 0.0
    %2538 = vmatpush1.msra.mxu0 %v2074
    %2539 = vmatprep.subr.mxu0 0.0
    %2540 = vmatpush2.msra.mxu0 0.0
    %2541 = vmatprep.subr.mxu0 0.0
    %2542 = vmatpush2.msra.mxu0 0.0
    %2543 = vmatprep.subr.mxu0 0.0
    %2544 = vmatpush2.msra.mxu0 0.0
    %2545 = vmatprep.subr.mxu0 0.0
    %2546 = vmatpush2.msra.mxu0 0.0
    %2547 = vmatprep.subr.mxu0 0.0
    %2548 = vmatpush2.msra.mxu0 0.0
    %2549 = vmatprep.subr.mxu0 0.0
    %2550 = vmatpush2.msra.mxu0 0.0
    %2551 = vmatprep.subr.mxu0 0.0
    %2552 = vmatpush2.msra.mxu0 0.0
    %2553 = vmatprep.subr.mxu0 0.0
    %2554 = vmatpush2.msra.mxu0 0.0
    %2555 = vmatprep.subr.mxu0 0.0
    %2556 = vmatpush2.msra.mxu0 0.0
    %2557 = vmatprep.subr.mxu0 0.0
    %2558 = vmatpush2.msra.mxu0 0.0
    %2559 = vmatprep.subr.mxu0 0.0
    %2560 = vmatpush2.msra.mxu0 0.0
    %2561 = vmatprep.subr.mxu0 0.0
    %2562 = vmatpush2.msra.mxu0 0.0
    %2563 = vmatprep.subr.mxu0 0.0
    %2564 = vmatpush2.msra.mxu0 0.0
    %2565 = vmatprep.subr.mxu0 0.0
    %2566 = vmatpush2.msra.mxu0 0.0
    %2567 = vmatprep.subr.mxu0 0.0
    %2568 = vmatpush2.msra.mxu0 0.0
    %2569 = vmatprep.subr.mxu0 0.0
    %2570 = vmatpush2.msra.mxu0 0.0
    %2571 = vmatprep.mubr.f32.mxu0 0.0
    %2572 = vmatmul.mubr.f32.gmra.mxu0 %v2505
    %v2573 = vpop.f32.mrf.mxu0
    %v2574 = vadd.f32 0.0, %v2573
    %v2575 = vpop.f32.mrf.mxu0
    %2576 = vdwg.mxu0
    %v2577 = vadd.f32 %v560, %v2574
    %v2578 = vxor.u32 %v2577, 2147483648
    %v2579 = vmul.f32 %v2578, 1.442695
    %v2580 = vpow.pop %v2579
    %v2581 = vadd.f32 %v2580, 1.0
    %v2582 = vrcp.pop %v2581
    %v2583 = vmul.f32 1.0, %v2582
    %v2584 = vadd.f32 %v2574, %v2159
    %2586 = vrot.lane.b32.xlu0 %v2584, 120
    %v2587 = vpop.permute.xlu0 %2586
    %v2589 = vmul.f32 %v2583, %v2587
    %2591 = vrot.lane.b32.xlu0 %v2589, 8
    %v2592 = vpop.permute.xlu0 %2591
    %v2594 = vadd.f32 %v560, %v2592
    %v2595 = vtanh.pop %v2594
    %v2596 = vsub.f32 1.0, %v2583
    %2598 = vrot.lane.b32.xlu0 %v2595, 124
    %v2599 = vpop.permute.xlu0 %2598
    %v2601 = vmul.f32 %v2596, %v2599
    %v2603 = vmul.f32 %v2583, %v2502
    %v2604 = vadd.f32 %v2601, %v2603
    %2606 = vrot.lane.b32.xlu0 %v2604, 124
    %v2607 = vpop.permute.xlu0 %2606
    %v2608 = vsel %vm2070, %v2607, 0
    %2610 = vmatprep.subr.mxu0 0.0
    %2611 = vmatpush1.msra.mxu0 0.0
    %2612 = vmatprep.subr.mxu0 0.0
    %2613 = vmatpush1.msra.mxu0 0.0
    %2614 = vmatprep.subr.mxu0 0.0
    %2615 = vmatpush1.msra.mxu0 0.0
    %2616 = vmatprep.subr.mxu0 0.0
    %2617 = vmatpush1.msra.mxu0 0.0
    %2618 = vmatprep.subr.mxu0 0.0
    %2619 = vmatpush1.msra.mxu0 0.0
    %2620 = vmatprep.subr.mxu0 0.0
    %2621 = vmatpush1.msra.mxu0 0.0
    %2622 = vmatprep.subr.mxu0 0.0
    %2623 = vmatpush1.msra.mxu0 0.0
    %2624 = vmatprep.subr.mxu0 0.0
    %2625 = vmatpush1.msra.mxu0 0.0
    %2626 = vmatprep.subr.mxu0 0.0
    %2627 = vmatpush1.msra.mxu0 0.0
    %2628 = vmatprep.subr.mxu0 0.0
    %2629 = vmatpush1.msra.mxu0 0.0
    %2630 = vmatprep.subr.mxu0 0.0
    %2631 = vmatpush1.msra.mxu0 0.0
    %2632 = vmatprep.subr.mxu0 0.0
    %2633 = vmatpush1.msra.mxu0 0.0
    %2634 = vmatprep.subr.mxu0 0.0
    %2635 = vmatpush1.msra.mxu0 0.0
    %2636 = vmatprep.subr.mxu0 0.0
    %2637 = vmatpush1.msra.mxu0 0.0
    %2638 = vmatprep.subr.mxu0 0.0
    %2639 = vmatpush1.msra.mxu0 0.0
    %2640 = vmatprep.subr.mxu0 0.0
    %2641 = vmatpush1.msra.mxu0 %v2074
    %2642 = vmatprep.subr.mxu0 0.0
    %2643 = vmatpush2.msra.mxu0 0.0
    %2644 = vmatprep.subr.mxu0 0.0
    %2645 = vmatpush2.msra.mxu0 0.0
    %2646 = vmatprep.subr.mxu0 0.0
    %2647 = vmatpush2.msra.mxu0 0.0
    %2648 = vmatprep.subr.mxu0 0.0
    %2649 = vmatpush2.msra.mxu0 0.0
    %2650 = vmatprep.subr.mxu0 0.0
    %2651 = vmatpush2.msra.mxu0 0.0
    %2652 = vmatprep.subr.mxu0 0.0
    %2653 = vmatpush2.msra.mxu0 0.0
    %2654 = vmatprep.subr.mxu0 0.0
    %2655 = vmatpush2.msra.mxu0 0.0
    %2656 = vmatprep.subr.mxu0 0.0
    %2657 = vmatpush2.msra.mxu0 0.0
    %2658 = vmatprep.subr.mxu0 0.0
    %2659 = vmatpush2.msra.mxu0 0.0
    %2660 = vmatprep.subr.mxu0 0.0
    %2661 = vmatpush2.msra.mxu0 0.0
    %2662 = vmatprep.subr.mxu0 0.0
    %2663 = vmatpush2.msra.mxu0 0.0
    %2664 = vmatprep.subr.mxu0 0.0
    %2665 = vmatpush2.msra.mxu0 0.0
    %2666 = vmatprep.subr.mxu0 0.0
    %2667 = vmatpush2.msra.mxu0 0.0
    %2668 = vmatprep.subr.mxu0 0.0
    %2669 = vmatpush2.msra.mxu0 0.0
    %2670 = vmatprep.subr.mxu0 0.0
    %2671 = vmatpush2.msra.mxu0 0.0
    %2672 = vmatprep.subr.mxu0 0.0
    %2673 = vmatpush2.msra.mxu0 0.0
    %2674 = vmatprep.mubr.f32.mxu0 0.0
    %2675 = vmatmul.mubr.f32.gmra.mxu0 %v2608
    %v2676 = vpop.f32.mrf.mxu0
    %v2677 = vadd.f32 0.0, %v2676
    %v2678 = vpop.f32.mrf.mxu0
    %2679 = vdwg.mxu0
    %v2681 = vrot.slane %v2677, 4
    %v2683 = vadd.f32 %v560, %v2681
    %v2684 = vxor.u32 %v2683, 2147483648
    %v2685 = vmul.f32 %v2684, 1.442695
    %v2686 = vpow.pop %v2685
    %v2687 = vadd.f32 %v2686, 1.0
    %v2688 = vrcp.pop %v2687
    %v2689 = vmul.f32 1.0, %v2688
    %v2690 = vadd.f32 %v2677, %v2159
    %v2692 = vrot.slane %v2690, 4
    %2693 = vrot.lane.b32.xlu0 %v2692, 120
    %v2694 = vpop.permute.xlu0 %2693
    %v2696 = vmul.f32 %v2689, %v2694
    %2698 = vrot.lane.b32.xlu0 %v2696, 8
    %v2699 = vpop.permute.xlu0 %2698
    %v2701 = vadd.f32 %v560, %v2699
    %v2702 = vtanh.pop %v2701
    %v2703 = vsub.f32 1.0, %v2689
    %2705 = vrot.lane.b32.xlu0 %v2702, 124
    %v2706 = vpop.permute.xlu0 %2705
    %v2708 = vmul.f32 %v2703, %v2706
    %v2709 = vrot.slane %v2604, 4
    %v2711 = vmul.f32 %v2689, %v2709
    %v2712 = vadd.f32 %v2708, %v2711
    %v2713 = vlaneseq
    %v2714 = vshrl.u32 %v2713, 7
    %v2715 = vsub.s32 0, %v2714
    %v2716 = vrot.slane %v44, %v2715
    %v2718 = vrot.slane %v2069, 2
    %2719 = vrot.lane.b32.xlu0 %v2718, 112
    %v2720 = vpop.permute.xlu0 %2719
    %v2721 = vsel %vm563, %v2720, 0
    %2723 = vmatprep.subr.mxu0 0.0
    %2724 = vmatpush1.msra.mxu0 0.0
    %2725 = vmatprep.subr.mxu0 0.0
    %2726 = vmatpush1.msra.mxu0 0.0
    %2727 = vmatprep.subr.mxu0 0.0
    %2728 = vmatpush1.msra.mxu0 0.0
    %2729 = vmatprep.subr.mxu0 0.0
    %2730 = vmatpush1.msra.mxu0 0.0
    %2731 = vmatprep.subr.mxu0 0.0
    %2732 = vmatpush1.msra.mxu0 0.0
    %2733 = vmatprep.subr.mxu0 0.0
    %2734 = vmatpush1.msra.mxu0 0.0
    %2735 = vmatprep.subr.mxu0 0.0
    %2736 = vmatpush1.msra.mxu0 0.0
    %2737 = vmatprep.subr.mxu0 0.0
    %2738 = vmatpush1.msra.mxu0 0.0
    %2739 = vmatprep.subr.mxu0 0.0
    %2740 = vmatpush1.msra.mxu0 0.0
    %2741 = vmatprep.subr.mxu0 0.0
    %2742 = vmatpush1.msra.mxu0 0.0
    %2743 = vmatprep.subr.mxu0 0.0
    %2744 = vmatpush1.msra.mxu0 0.0
    %2745 = vmatprep.subr.mxu0 0.0
    %2746 = vmatpush1.msra.mxu0 0.0
    %2747 = vmatprep.subr.mxu0 0.0
    %2748 = vmatpush1.msra.mxu0 0.0
    %2749 = vmatprep.subr.mxu0 0.0
    %2750 = vmatpush1.msra.mxu0 0.0
    %2751 = vmatprep.subr.mxu0 0.0
    %2752 = vmatpush1.msra.mxu0 %v37
    %2753 = vmatprep.subr.mxu0 0.0
    %2754 = vmatpush1.msra.mxu0 %v36
    %2755 = vmatprep.subr.mxu0 0.0
    %2756 = vmatpush2.msra.mxu0 0.0
    %2757 = vmatprep.subr.mxu0 0.0
    %2758 = vmatpush2.msra.mxu0 0.0
    %2759 = vmatprep.subr.mxu0 0.0
    %2760 = vmatpush2.msra.mxu0 0.0
    %2761 = vmatprep.subr.mxu0 0.0
    %2762 = vmatpush2.msra.mxu0 0.0
    %2763 = vmatprep.subr.mxu0 0.0
    %2764 = vmatpush2.msra.mxu0 0.0
    %2765 = vmatprep.subr.mxu0 0.0
    %2766 = vmatpush2.msra.mxu0 0.0
    %2767 = vmatprep.subr.mxu0 0.0
    %2768 = vmatpush2.msra.mxu0 0.0
    %2769 = vmatprep.subr.mxu0 0.0
    %2770 = vmatpush2.msra.mxu0 0.0
    %2771 = vmatprep.subr.mxu0 0.0
    %2772 = vmatpush2.msra.mxu0 0.0
    %2773 = vmatprep.subr.mxu0 0.0
    %2774 = vmatpush2.msra.mxu0 0.0
    %2775 = vmatprep.subr.mxu0 0.0
    %2776 = vmatpush2.msra.mxu0 0.0
    %2777 = vmatprep.subr.mxu0 0.0
    %2778 = vmatpush2.msra.mxu0 0.0
    %2779 = vmatprep.subr.mxu0 0.0
    %2780 = vmatpush2.msra.mxu0 0.0
    %2781 = vmatprep.subr.mxu0 0.0
    %2782 = vmatpush2.msra.mxu0 0.0
    %2783 = vmatprep.subr.mxu0 0.0
    %2784 = vmatpush2.msra.mxu0 0.0
    %2785 = vmatprep.subr.mxu0 0.0
    %2786 = vmatpush2.msra.mxu0 0.0
    %2787 = vmatprep.mubr.f32.mxu0 0.0
    %2788 = vmatmul.mubr.f32.gmra.mxu0 %v2721
    %v2789 = vpop.f32.mrf.mxu0
    %v2790 = vadd.f32 %v2716, %v2789
    %v2791 = vpop.f32.mrf.mxu0
    %2792 = vdwg.mxu0
    %v2794 = vrot.slane %v2712, 4
    %2795 = vrot.lane.b32.xlu0 %v2794, 124
    %v2796 = vpop.permute.xlu0 %2795
    %v2797 = vsel %vm2070, %v2796, 0
    %v2800 = vsel %vm248, %v38, 0
    %2802 = vmatprep.subr.mxu0 0.0
    %2803 = vmatpush1.msra.mxu0 0.0
    %2804 = vmatprep.subr.mxu0 0.0
    %2805 = vmatpush1.msra.mxu0 0.0
    %2806 = vmatprep.subr.mxu0 0.0
    %2807 = vmatpush1.msra.mxu0 0.0
    %2808 = vmatprep.subr.mxu0 0.0
    %2809 = vmatpush1.msra.mxu0 0.0
    %2810 = vmatprep.subr.mxu0 0.0
    %2811 = vmatpush1.msra.mxu0 0.0
    %2812 = vmatprep.subr.mxu0 0.0
    %2813 = vmatpush1.msra.mxu0 0.0
    %2814 = vmatprep.subr.mxu0 0.0
    %2815 = vmatpush1.msra.mxu0 0.0
    %2816 = vmatprep.subr.mxu0 0.0
    %2817 = vmatpush1.msra.mxu0 0.0
    %2818 = vmatprep.subr.mxu0 0.0
    %2819 = vmatpush1.msra.mxu0 0.0
    %2820 = vmatprep.subr.mxu0 0.0
    %2821 = vmatpush1.msra.mxu0 0.0
    %2822 = vmatprep.subr.mxu0 0.0
    %2823 = vmatpush1.msra.mxu0 0.0
    %2824 = vmatprep.subr.mxu0 0.0
    %2825 = vmatpush1.msra.mxu0 0.0
    %2826 = vmatprep.subr.mxu0 0.0
    %2827 = vmatpush1.msra.mxu0 0.0
    %2828 = vmatprep.subr.mxu0 0.0
    %2829 = vmatpush1.msra.mxu0 0.0
    %2830 = vmatprep.subr.mxu0 0.0
    %2831 = vmatpush1.msra.mxu0 0.0
    %2832 = vmatprep.subr.mxu0 0.0
    %2833 = vmatpush1.msra.mxu0 %v2800
    %2834 = vmatprep.subr.mxu0 0.0
    %2835 = vmatpush2.msra.mxu0 0.0
    %2836 = vmatprep.subr.mxu0 0.0
    %2837 = vmatpush2.msra.mxu0 0.0
    %2838 = vmatprep.subr.mxu0 0.0
    %2839 = vmatpush2.msra.mxu0 0.0
    %2840 = vmatprep.subr.mxu0 0.0
    %2841 = vmatpush2.msra.mxu0 0.0
    %2842 = vmatprep.subr.mxu0 0.0
    %2843 = vmatpush2.msra.mxu0 0.0
    %2844 = vmatprep.subr.mxu0 0.0
    %2845 = vmatpush2.msra.mxu0 0.0
    %2846 = vmatprep.subr.mxu0 0.0
    %2847 = vmatpush2.msra.mxu0 0.0
    %2848 = vmatprep.subr.mxu0 0.0
    %2849 = vmatpush2.msra.mxu0 0.0
    %2850 = vmatprep.subr.mxu0 0.0
    %2851 = vmatpush2.msra.mxu0 0.0
    %2852 = vmatprep.subr.mxu0 0.0
    %2853 = vmatpush2.msra.mxu0 0.0
    %2854 = vmatprep.subr.mxu0 0.0
    %2855 = vmatpush2.msra.mxu0 0.0
    %2856 = vmatprep.subr.mxu0 0.0
    %2857 = vmatpush2.msra.mxu0 0.0
    %2858 = vmatprep.subr.mxu0 0.0
    %2859 = vmatpush2.msra.mxu0 0.0
    %2860 = vmatprep.subr.mxu0 0.0
    %2861 = vmatpush2.msra.mxu0 0.0
    %2862 = vmatprep.subr.mxu0 0.0
    %2863 = vmatpush2.msra.mxu0 0.0
    %2864 = vmatprep.subr.mxu0 0.0
    %2865 = vmatpush2.msra.mxu0 0.0
    %2866 = vmatprep.mubr.f32.mxu0 0.0
    %2867 = vmatmul.mubr.f32.gmra.mxu0 %v2797
    %v2868 = vpop.f32.mrf.mxu0
    %v2869 = vadd.f32 0.0, %v2868
    %v2870 = vpop.f32.mrf.mxu0
    %2871 = vdwg.mxu0
    %v2872 = vadd.f32 %v2790, %v2869
    %v2873 = vrot.slane %v2712, 6
    %2874 = vrot.lane.b32.xlu0 %v2873, 124
    %v2875 = vpop.permute.xlu0 %2874
    %v2876 = vrot.slane %v38, 4
    %v2877 = vsel %vm2070, %v2875, 0
    %v2879 = vsel %vm248, %v2876, 0
    %2881 = vmatprep.subr.mxu0 0.0
    %2882 = vmatpush1.msra.mxu0 0.0
    %2883 = vmatprep.subr.mxu0 0.0
    %2884 = vmatpush1.msra.mxu0 0.0
    %2885 = vmatprep.subr.mxu0 0.0
    %2886 = vmatpush1.msra.mxu0 0.0
    %2887 = vmatprep.subr.mxu0 0.0
    %2888 = vmatpush1.msra.mxu0 0.0
    %2889 = vmatprep.subr.mxu0 0.0
    %2890 = vmatpush1.msra.mxu0 0.0
    %2891 = vmatprep.subr.mxu0 0.0
    %2892 = vmatpush1.msra.mxu0 0.0
    %2893 = vmatprep.subr.mxu0 0.0
    %2894 = vmatpush1.msra.mxu0 0.0
    %2895 = vmatprep.subr.mxu0 0.0
    %2896 = vmatpush1.msra.mxu0 0.0
    %2897 = vmatprep.subr.mxu0 0.0
    %2898 = vmatpush1.msra.mxu0 0.0
    %2899 = vmatprep.subr.mxu0 0.0
    %2900 = vmatpush1.msra.mxu0 0.0
    %2901 = vmatprep.subr.mxu0 0.0
    %2902 = vmatpush1.msra.mxu0 0.0
    %2903 = vmatprep.subr.mxu0 0.0
    %2904 = vmatpush1.msra.mxu0 0.0
    %2905 = vmatprep.subr.mxu0 0.0
    %2906 = vmatpush1.msra.mxu0 0.0
    %2907 = vmatprep.subr.mxu0 0.0
    %2908 = vmatpush1.msra.mxu0 0.0
    %2909 = vmatprep.subr.mxu0 0.0
    %2910 = vmatpush1.msra.mxu0 0.0
    %2911 = vmatprep.subr.mxu0 0.0
    %2912 = vmatpush1.msra.mxu0 %v2879
    %2913 = vmatprep.subr.mxu0 0.0
    %2914 = vmatpush2.msra.mxu0 0.0
    %2915 = vmatprep.subr.mxu0 0.0
    %2916 = vmatpush2.msra.mxu0 0.0
    %2917 = vmatprep.subr.mxu0 0.0
    %2918 = vmatpush2.msra.mxu0 0.0
    %2919 = vmatprep.subr.mxu0 0.0
    %2920 = vmatpush2.msra.mxu0 0.0
    %2921 = vmatprep.subr.mxu0 0.0
    %2922 = vmatpush2.msra.mxu0 0.0
    %2923 = vmatprep.subr.mxu0 0.0
    %2924 = vmatpush2.msra.mxu0 0.0
    %2925 = vmatprep.subr.mxu0 0.0
    %2926 = vmatpush2.msra.mxu0 0.0
    %2927 = vmatprep.subr.mxu0 0.0
    %2928 = vmatpush2.msra.mxu0 0.0
    %2929 = vmatprep.subr.mxu0 0.0
    %2930 = vmatpush2.msra.mxu0 0.0
    %2931 = vmatprep.subr.mxu0 0.0
    %2932 = vmatpush2.msra.mxu0 0.0
    %2933 = vmatprep.subr.mxu0 0.0
    %2934 = vmatpush2.msra.mxu0 0.0
    %2935 = vmatprep.subr.mxu0 0.0
    %2936 = vmatpush2.msra.mxu0 0.0
    %2937 = vmatprep.subr.mxu0 0.0
    %2938 = vmatpush2.msra.mxu0 0.0
    %2939 = vmatprep.subr.mxu0 0.0
    %2940 = vmatpush2.msra.mxu0 0.0
    %2941 = vmatprep.subr.mxu0 0.0
    %2942 = vmatpush2.msra.mxu0 0.0
    %2943 = vmatprep.subr.mxu0 0.0
    %2944 = vmatpush2.msra.mxu0 0.0
    %2945 = vmatprep.mubr.f32.mxu0 0.0
    %2946 = vmatmul.mubr.f32.gmra.mxu0 %v2877
    %v2947 = vpop.f32.mrf.mxu0
    %v2948 = vadd.f32 0.0, %v2947
    %v2949 = vpop.f32.mrf.mxu0
    %2950 = vdwg.mxu0
    %v2951 = vadd.f32 %v2872, %v2948
    %s2952 = sld [smem:[#allocation2]]
    %v2953 = vstv %s2952
    %v2954 = vmul.f32 %v48, %v2953
    %v2955 = vadd.f32 %v2951, %v2954
    %s2956 = sld [smem:[#allocation2 + $0x1]]
    %v2957 = vstv %s2956
    %v2958 = vmul.f32 %v48, %v2957
    %v2960 = vrot.slane %v2958, 2
    %v2962 = vadd.f32 %v2955, %v2960
    %s2963 = sld [smem:[#allocation2 + $0x2]]
    %v2964 = vstv %s2963
    %v2965 = vmul.f32 %v48, %v2964
    %v2967 = vrot.slane %v2965, 4
    %v2969 = vadd.f32 %v2962, %v2967
    %s2970 = sld [smem:[#allocation2 + $0x3]]
    %v2971 = vstv %s2970
    %v2972 = vmul.f32 %v48, %v2971
    %v2974 = vrot.slane %v2972, 6
    %v2976 = vadd.f32 %v2969, %v2974
    %vm2977 = vcmask 58368
    %2978 = vst.msk [vmem:[#allocation5] sm:$0x3] %vm2977, %v2976
    // Predicated region
    $region18: #{_lambda_.1} parent=1 // pred_check
      _
    $region19: #{_lambda_.1} parent=1 // pred_check_branch
      %2980 = sbr.rel (0) target = $region21
    $region20: #{_lambda_.1} parent=1 // pred_region
      %s2982 = ssub.s32 32, 32
      %2983 = vsyncadd [#allocation3], %s2982
      %s2985 = sshll.u32 [#allocation5], 4
      %s2986 = int_to_ptr.vmem [resolvable:$true] %s2985
      %2988 = dma.vmem_to_hbm [thread:$0]  %s2986, 32, %s3, [#allocation3]
    $region21: #{_lambda_.1} parent=1 // pred_fallthru
      _
    // Predicated region
    $region22: #{_lambda_.1} parent=1 // pred_check
      _
    $region23: #{_lambda_.1} parent=1 // pred_check_branch
      %2990 = sbr.rel (0) target = $region25
    $region24: #{_lambda_.1} parent=1 // pred_region
      %2991 = dma.done [#allocation3], 32
    $region25: #{_lambda_.1} parent=1 // pred_fallthru
      _
    %2992 = vsyncpa [#allocation3], 1
    %2993 = vsyncpa [#allocation4], 1

</llo_original>
